<compile_context>
chip_gen: v5e
topology: v5e:2x2
jax: 0.10.0
libtpu: 0.0.40
codegen_flags: <defaults>
</compile_context>

<pallas_src>
import math

import jax
import jax.numpy as jnp
from jax.experimental import pallas as pl
from jax.experimental.pallas import tpu as pltpu

# ------------------------- model hyper-parameters ---------------------------
NUM_ITEMS = 64
HIDDEN = 32
NUM_BLOCKS = 2
NUM_HEADS = 4
MAX_SEQ_LEN = 16
HEAD_DIM = HIDDEN // NUM_HEADS
FF_DIM = HIDDEN * 4
EPS = 1e-5
LANE = 128                      # lane-dense pad width for slabs and the output
NEG_INF = -1e30

# packed-slab row layout (must match pack_params)
V_LN_G, V_LN_B, V_FC_B, V_BLK0 = 0, 1, 2, 3
V_PER_BLK = 8                   # bqkv, bo, g1, be1, b1, b2, g2, be2
M_FC_W, M_BLK0 = 0, 1
M_PER_BLK = 3                   # wqkv, wo, w1


# --------------------------- shared math helpers -----------------------------
def _ln(x, gamma, beta):
    """PyTorch-style LayerNorm over the last dim (biased variance, eps=1e-5)."""
    mean = jnp.mean(x, axis=-1, keepdims=True)
    xc = x - mean
    var = jnp.mean(xc * xc, axis=-1, keepdims=True)
    return xc * jax.lax.rsqrt(var + EPS) * gamma + beta


def _mm(a, b):
    """Matmul with bf16 inputs and f32 accumulation (single MXU pass)."""
    return jnp.dot(a.astype(jnp.bfloat16), b.astype(jnp.bfloat16),
                   preferred_element_type=jnp.float32)


def _dot_nt(a, b):
    """a @ b.T (contract last dims) with f32 accumulation; operands pre-cast."""
    return jax.lax.dot_general(a, b, (((1,), (1,)), ((), ())),
                               preferred_element_type=jnp.float32)


# ------------------------------- fused kernel --------------------------------
def fused_sasrec_kernel(hot_ref, emb_ref, vec_ref, mat_ref, w2_ref, out_ref):
    """Whole SASRec forward, grid=(), fully VMEM-resident.

      hot_ref (SB, 2) int32        per-row hot columns (item id, NUM_ITEMS + pos)
      emb_ref (NUM_ITEMS + S, H)   stacked [item_emb; pos_emb[:S]]
      vec_ref (N_VEC, 128)         all (1, C) parameter vectors, lane-padded
      mat_ref (N_MAT*H, 128)       all H-row parameter matrices, lane-padded
      w2_ref  (NUM_BLOCKS*FF, H)   FFN second matrices, stacked along rows
      out_ref (SB, 128)            lane-dense padded logits
    """
    SB = hot_ref.shape[0]
    S = emb_ref.shape[0] - NUM_ITEMS
    H = HIDDEN
    bf16 = jnp.bfloat16
    scale = 1.0 / math.sqrt(HEAD_DIM)

    def vec(row, width=H):                      # (1, width) parameter vector
        return vec_ref[row:row + 1, :width]

    def mat(chunk, width=LANE):                 # (H, width) parameter matrix
        return mat_ref[chunk * H:(chunk + 1) * H, :width]

    # ---- fused item + positional embedding gather: ONE one-hot MXU matmul ----
    hot = hot_ref[...]                                              # (SB, 2)
    cols = jax.lax.broadcasted_iota(jnp.int32, (SB, NUM_ITEMS + S), 1)
    onehot = ((cols == hot[:, 0:1]) | (cols == hot[:, 1:2])).astype(jnp.float32)
    x = _mm(onehot, emb_ref[...])                                   # (SB, H)
    x = _ln(x, vec(V_LN_G), vec(V_LN_B))

    # ---- same-position additive mask (built once, no integer div/mod) -------
    pos_cols = jax.lax.broadcasted_iota(jnp.int32, (SB, S), 1)
    pos_oh = (pos_cols == (hot[:, 1:2] - NUM_ITEMS)).astype(bf16)   # (SB, S)
    same = _dot_nt(pos_oh, pos_oh)                                  # 1.0 iff same pos
    mask = jnp.where(same > 0.5, 0.0, NEG_INF).astype(jnp.float32)  # (SB, SB)

    # ---- transformer encoder layers (post-norm, batch_first=False faithful) --
    for li in range(NUM_BLOCKS):
        vb = V_BLK0 + li * V_PER_BLK
        mb = M_BLK0 + li * M_PER_BLK
        bqkv = vec(vb + 0, 3 * H)
        bo, g1, be1 = vec(vb + 1), vec(vb + 2), vec(vb + 3)
        b1 = vec(vb + 4, FF_DIM)
        b2, g2, be2 = vec(vb + 5), vec(vb + 6), vec(vb + 7)

        # -- multi-head self-attention, native 2D (SB, lanes) layout ----------
        qkv = _mm(x, mat(mb + 0, 3 * H)) + bqkv                     # (SB, 3H) f32
        qkv_b = qkv.astype(bf16)                                    # single cast
        wo_b = mat(mb + 1, H).astype(bf16)                          # (H, H)
        attn = jnp.zeros((SB, H), jnp.float32)
        for h in range(NUM_HEADS):
            lo = h * HEAD_DIM
            qh = qkv_b[:, lo:lo + HEAD_DIM]                         # (SB, hd)
            kh = qkv_b[:, H + lo:H + lo + HEAD_DIM]
            vh = qkv_b[:, 2 * H + lo:2 * H + lo + HEAD_DIM]
            s = _dot_nt(qh, kh) * scale + mask                      # (SB, SB) f32
            s = s - jnp.max(s, axis=-1, keepdims=True)
            e = jnp.exp(s)
            p = e * pl.reciprocal(jnp.sum(e, axis=-1, keepdims=True),
                                  approx=False)
            ctx = jnp.dot(p.astype(bf16), vh,
                          preferred_element_type=jnp.float32)       # (SB, hd)
            # head concat folded into the output projection (no lane concat)
            attn = attn + jnp.dot(ctx.astype(bf16),
                                  wo_b[lo:lo + HEAD_DIM, :],
                                  preferred_element_type=jnp.float32)
        y = _ln(x + attn + bo, g1, be1)

        # -- position-wise feed-forward ---------------------------------------
        hdn = jnp.maximum(_mm(y, mat(mb + 2, FF_DIM)) + b1, 0.0)    # (SB, 4H)
        ff = _mm(hdn, w2_ref[li * FF_DIM:(li + 1) * FF_DIM, :]) + b2
        x = _ln(y + ff, g2, be2)

    # ---- final item projection: lane-dense (SB, 128) store -------------------
    out_ref[...] = _mm(x, mat(M_FC_W)) + vec(V_FC_B, LANE)


# --------------------------- pallas_call wrapper ------------------------------
def _vmem_spec():
    return pl.BlockSpec(memory_space=pltpu.MemorySpace.VMEM)


def sasrec_forward(packed, input_seq):
    """input_seq: (B, S) int ids -> (B, S, NUM_ITEMS) f32 logits."""
    B, S = input_seq.shape
    sb = B * S
    items = input_seq.reshape(sb).astype(jnp.int32)
    pos_ids = jnp.broadcast_to(jnp.arange(S, dtype=jnp.int32), (B, S)).reshape(sb)
    hot = jnp.stack([items, NUM_ITEMS + pos_ids], axis=1)           # (SB, 2) int32

    out = pl.pallas_call(
        fused_sasrec_kernel,
        out_shape=jax.ShapeDtypeStruct((sb, LANE), jnp.float32),
        in_specs=[_vmem_spec() for _ in range(5)],
        out_specs=_vmem_spec(),
        # TODO(synk): single grid=() invocation uses one TensorCore; add a
        # leading "parallel" grid axis over the batch for v7x's second core
        # once B*S grows past toy size (weights stay resident via constant
        # index_maps) -- pointless at 32 rows.
    )(hot, packed["emb_tab"], packed["vecs"], packed["mats"], packed["w2s"])
    # drop lane padding, restore (B, S, num_items); rows are b-major (r=b*S+s)
    return out[:, :NUM_ITEMS].reshape(B, S, NUM_ITEMS)


# ------------------------------ parameters ------------------------------------
def init_params(key):
    def nrm(k, shape, scale=0.02):
        return (scale * jax.random.normal(k, shape)).astype(jnp.float32)

    keys = jax.random.split(key, 4 + NUM_BLOCKS)
    params = {
        "item_emb": nrm(keys[0], (NUM_ITEMS, HIDDEN)),
        "pos_emb": nrm(keys[1], (MAX_SEQ_LEN, HIDDEN)),
        "ln_g": jnp.ones((1, HIDDEN), jnp.float32),
        "ln_b": jnp.zeros((1, HIDDEN), jnp.float32),
        "fc_w": nrm(keys[2], (NUM_ITEMS, HIDDEN)).T,                # (H, NI)
        "fc_b": nrm(keys[3], (NUM_ITEMS,))[None, :],                # (1, NI)
        "blocks": [],
    }
    for i in range(NUM_BLOCKS):
        bk = jax.random.split(keys[4 + i], 8)
        blk = {
            "wqkv": nrm(bk[0], (3 * HIDDEN, HIDDEN)).T,             # (H, 3H)
            "bqkv": nrm(bk[1], (3 * HIDDEN,))[None, :],
            "wo": nrm(bk[2], (HIDDEN, HIDDEN)).T,
            "bo": nrm(bk[3], (HIDDEN,))[None, :],
            "g1": jnp.ones((1, HIDDEN), jnp.float32),
            "be1": jnp.zeros((1, HIDDEN), jnp.float32),
            "w1": nrm(bk[4], (FF_DIM, HIDDEN)).T,                   # (H, 4H)
            "b1": nrm(bk[5], (FF_DIM,))[None, :],
            "w2": nrm(bk[6], (HIDDEN, FF_DIM)).T,                   # (4H, H)
            "b2": nrm(bk[7], (HIDDEN,))[None, :],
            "g2": jnp.ones((1, HIDDEN), jnp.float32),
            "be2": jnp.zeros((1, HIDDEN), jnp.float32),
        }
        params["blocks"].append(blk)
    return params


def _pad_lanes(a, width=LANE):
    return jnp.pad(a, ((0, 0), (0, width - a.shape[1])))


def pack_params(params, seq_len):
    """Pre-concatenate all parameters into a handful of VMEM-friendly slabs
    (cuts ~31 per-call input DMAs down to 4 constant slabs)."""
    emb_tab = jnp.concatenate([params["item_emb"], params["pos_emb"][:seq_len]], 0)

    vec_rows = [params["ln_g"], params["ln_b"], params["fc_b"]]
    mat_rows = [params["fc_w"]]
    w2_rows = []
    for blk in params["blocks"]:
        vec_rows += [blk["bqkv"], blk["bo"], blk["g1"], blk["be1"],
                     blk["b1"], blk["b2"], blk["g2"], blk["be2"]]
        mat_rows += [blk["wqkv"], blk["wo"], blk["w1"]]
        w2_rows.append(blk["w2"])

    return {
        "emb_tab": emb_tab,                                               # (NI+S, H)
        "vecs": jnp.concatenate([_pad_lanes(v) for v in vec_rows], 0),    # (19, 128)
        "mats": jnp.concatenate([_pad_lanes(m) for m in mat_rows], 0),    # (224, 128)
        "w2s": jnp.concatenate(w2_rows, 0),                               # (256, H)
    }


# ---------------------------- forward (pure-JAX ref) ----------------------------
def ref_forward(params, input_seq):
    """Reference mirroring the PyTorch module (eval mode) with the kernel's
    bf16-matmul / f32-elementwise precision policy."""
    B, S = input_seq.shape
    bf = lambda a: a.astype(jnp.bfloat16)
    item_tab = params["item_emb"].astype(jnp.bfloat16).astype(jnp.float32)
    pos_tab = params["pos_emb"][:S].astype(jnp.bfloat16).astype(jnp.float32)
    x = item_tab[input_seq] + pos_tab[None, :, :]
    x = _ln(x, params["ln_g"], params["ln_b"])                       # (B, S, H)
    scale = 1.0 / math.sqrt(HEAD_DIM)
    for blk in params["blocks"]:
        # batch_first=False: L=B is the attention sequence axis, N=S the batch.
        L, N, E = x.shape
        x2 = x.reshape(L * N, E)
        qkv = _mm(x2, blk["wqkv"]) + blk["bqkv"]

        def heads(t):                                     # (L*N, E) -> (N, h, L, hd)
            return t.reshape(L, N, NUM_HEADS, HEAD_DIM).transpose(1, 2, 0, 3)

        q, k, v = (heads(qkv[:, i * E:(i + 1) * E]) for i in range(3))
        s = jnp.einsum("nhld,nhmd->nhlm", bf(q), bf(k),
                       preferred_element_type=jnp.float32) * scale
        p = jax.nn.softmax(s, axis=-1)
        ctx = jnp.einsum("nhlm,nhmd->nhld", bf(p), bf(v),
                         preferred_element_type=jnp.float32)
        ctx = ctx.transpose(2, 0, 1, 3).reshape(L * N, E)
        attn = _mm(ctx, blk["wo"]) + blk["bo"]
        y = _ln(x2 + attn, blk["g1"], blk["be1"])
        ff = _mm(jnp.maximum(_mm(y, blk["w1"]) + blk["b1"], 0.0), blk["w2"]) + blk["b2"]
        x = _ln(y + ff, blk["g2"], blk["be2"]).reshape(L, N, E)
    logits = _mm(x.reshape(B * S, HIDDEN), params["fc_w"]) + params["fc_b"]
    return logits.reshape(B, S, NUM_ITEMS)


# ----------------------------------- main ---------------------------------------
if __name__ == "__main__":
    key = jax.random.PRNGKey(0)
    pkey, dkey = jax.random.split(key)
    params = init_params(pkey)

    B, S = 4, 8
    input_seq = jax.random.randint(dkey, (B, S), 0, NUM_ITEMS, dtype=jnp.int32)

    packed = pack_params(params, S)
    fwd = jax.jit(sasrec_forward)
    out = jax.block_until_ready(fwd(packed, input_seq))
    assert out.shape == (B, S, NUM_ITEMS) and out.dtype == jnp.float32

    ref = ref_forward(params, input_seq)
    if not jnp.allclose(out, ref, rtol=1e-2, atol=1e-3):
        raise AssertionError(
            f"kernel/ref mismatch, max abs diff = {float(jnp.max(jnp.abs(out - ref)))}"
        )

    print("KERNEL_OK")
</pallas_src>

<mosaic_0001>
module attributes {stable_mosaic.version = 11 : i64} {
  func.func @fused_sasrec_kernel(%arg0: memref<32x2xi32, #tpu.memory_space<vmem>>, %arg1: memref<72x32xf32, #tpu.memory_space<vmem>>, %arg2: memref<19x128xf32, #tpu.memory_space<vmem>>, %arg3: memref<224x128xf32, #tpu.memory_space<vmem>>, %arg4: memref<256x32xf32, #tpu.memory_space<vmem>>, %arg5: memref<32x128xf32, #tpu.memory_space<vmem>>) attributes {dimension_semantics = [], scalar_prefetch = 0 : i64, scratch_operands = 0 : i64, tpu.core_type = #tpu.core_type<tc>} {
    %c0 = arith.constant 0 : index
    %c0_0 = arith.constant 0 : index
    %0 = vector.load %arg0[%c0, %c0_0] : memref<32x2xi32, #tpu.memory_space<vmem>>, vector<32x2xi32>
    %1 = tpu.iota {dimensions = array<i32: 1>} : vector<32x72xi32>
    %2 = vector.extract_strided_slice %0 {offsets = [0, 0], sizes = [32, 1], strides = [1, 1]} : vector<32x2xi32> to vector<32x1xi32>
    %3 = vector.broadcast %2 : vector<32x1xi32> to vector<32x72xi32>
    %4 = arith.cmpi eq, %1, %3 : vector<32x72xi32>
    %5 = vector.extract_strided_slice %0 {offsets = [0, 1], sizes = [32, 1], strides = [1, 1]} : vector<32x2xi32> to vector<32x1xi32>
    %6 = vector.broadcast %5 : vector<32x1xi32> to vector<32x72xi32>
    %7 = arith.cmpi eq, %1, %6 : vector<32x72xi32>
    %8 = arith.ori %4, %7 : vector<32x72xi1>
    %9 = arith.extui %8 : vector<32x72xi1> to vector<32x72xi32>
    %10 = arith.sitofp %9 : vector<32x72xi32> to vector<32x72xf32>
    %c0_1 = arith.constant 0 : index
    %c0_2 = arith.constant 0 : index
    %11 = vector.load %arg1[%c0_1, %c0_2] : memref<72x32xf32, #tpu.memory_space<vmem>>, vector<72x32xf32>
    %12 = arith.truncf %10 : vector<32x72xf32> to vector<32x72xbf16>
    %13 = arith.truncf %11 : vector<72x32xf32> to vector<72x32xbf16>
    %cst = arith.constant dense<0.000000e+00> : vector<32x32xf32>
    %14 = tpu.matmul %12, %13, %cst {dimension_numbers = #tpu.dot_dimension_numbers<[1], [0], [0], [1], [0, 0, 1, 1], [], []>} : vector<32x72xbf16>, vector<72x32xbf16>, vector<32x32xf32> -> vector<32x32xf32>
    %c0_3 = arith.constant 0 : index
    %c0_4 = arith.constant 0 : index
    %15 = vector.load %arg2[%c0_3, %c0_4] : memref<19x128xf32, #tpu.memory_space<vmem>>, vector<1x32xf32>
    %c1 = arith.constant 1 : index
    %c0_5 = arith.constant 0 : index
    %16 = vector.load %arg2[%c1, %c0_5] : memref<19x128xf32, #tpu.memory_space<vmem>>, vector<1x32xf32>
    %cst_6 = arith.constant dense<0.000000e+00> : vector<32xf32>
    %17 = vector.multi_reduction <add>, %14, %cst_6 [1] : vector<32x32xf32> to vector<32xf32>
    %18 = vector.shape_cast %17 : vector<32xf32> to vector<32x1xf32>
    %cst_7 = arith.constant 3.200000e+01 : f32
    %19 = vector.broadcast %cst_7 : f32 to vector<32x1xf32>
    %20 = arith.divf %18, %19 : vector<32x1xf32>
    %21 = vector.broadcast %20 : vector<32x1xf32> to vector<32x32xf32>
    %22 = arith.subf %14, %21 : vector<32x32xf32>
    %23 = arith.mulf %22, %22 : vector<32x32xf32>
    %cst_8 = arith.constant dense<0.000000e+00> : vector<32xf32>
    %24 = vector.multi_reduction <add>, %23, %cst_8 [1] : vector<32x32xf32> to vector<32xf32>
    %25 = vector.shape_cast %24 : vector<32xf32> to vector<32x1xf32>
    %cst_9 = arith.constant 3.200000e+01 : f32
    %26 = vector.broadcast %cst_9 : f32 to vector<32x1xf32>
    %27 = arith.divf %25, %26 : vector<32x1xf32>
    %cst_10 = arith.constant 9.99999974E-6 : f32
    %28 = vector.broadcast %cst_10 : f32 to vector<32x1xf32>
    %29 = arith.addf %27, %28 : vector<32x1xf32>
    %30 = math.rsqrt %29 : vector<32x1xf32>
    %31 = vector.broadcast %30 : vector<32x1xf32> to vector<32x32xf32>
    %32 = arith.mulf %22, %31 : vector<32x32xf32>
    %33 = vector.broadcast %15 : vector<1x32xf32> to vector<32x32xf32>
    %34 = arith.mulf %32, %33 : vector<32x32xf32>
    %35 = vector.broadcast %16 : vector<1x32xf32> to vector<32x32xf32>
    %36 = arith.addf %34, %35 : vector<32x32xf32>
    %37 = tpu.iota {dimensions = array<i32: 1>} : vector<32x8xi32>
    %38 = vector.extract_strided_slice %0 {offsets = [0, 1], sizes = [32, 1], strides = [1, 1]} : vector<32x2xi32> to vector<32x1xi32>
    %c64_i32 = arith.constant 64 : i32
    %39 = vector.broadcast %c64_i32 : i32 to vector<32x1xi32>
    %40 = arith.subi %38, %39 : vector<32x1xi32>
    %41 = vector.broadcast %40 : vector<32x1xi32> to vector<32x8xi32>
    %42 = arith.cmpi eq, %37, %41 : vector<32x8xi32>
    %43 = arith.extui %42 : vector<32x8xi1> to vector<32x8xi32>
    %44 = arith.sitofp %43 : vector<32x8xi32> to vector<32x8xf32>
    %45 = arith.truncf %44 : vector<32x8xf32> to vector<32x8xbf16>
    %cst_11 = arith.constant dense<0.000000e+00> : vector<32x32xf32>
    %46 = tpu.matmul %45, %45, %cst_11 {dimension_numbers = #tpu.dot_dimension_numbers<[1], [1], [0], [0], [0, 0, 1, 0], [], []>} : vector<32x8xbf16>, vector<32x8xbf16>, vector<32x32xf32> -> vector<32x32xf32>
    %cst_12 = arith.constant 5.000000e-01 : f32
    %47 = vector.broadcast %cst_12 : f32 to vector<32x32xf32>
    %48 = arith.cmpf ogt, %46, %47 : vector<32x32xf32>
    %cst_13 = arith.constant 0.000000e+00 : f32
    %cst_14 = arith.constant -1.000000e+30 : f32
    %49 = vector.broadcast %cst_13 : f32 to vector<32x32xf32>
    %50 = vector.broadcast %cst_14 : f32 to vector<32x32xf32>
    %51 = arith.select %48, %49, %50 : vector<32x32xi1>, vector<32x32xf32>
    %c3 = arith.constant 3 : index
    %c0_15 = arith.constant 0 : index
    %52 = vector.load %arg2[%c3, %c0_15] : memref<19x128xf32, #tpu.memory_space<vmem>>, vector<1x96xf32>
    %c4 = arith.constant 4 : index
    %c0_16 = arith.constant 0 : index
    %53 = vector.load %arg2[%c4, %c0_16] : memref<19x128xf32, #tpu.memory_space<vmem>>, vector<1x32xf32>
    %c5 = arith.constant 5 : index
    %c0_17 = arith.constant 0 : index
    %54 = vector.load %arg2[%c5, %c0_17] : memref<19x128xf32, #tpu.memory_space<vmem>>, vector<1x32xf32>
    %c6 = arith.constant 6 : index
    %c0_18 = arith.constant 0 : index
    %55 = vector.load %arg2[%c6, %c0_18] : memref<19x128xf32, #tpu.memory_space<vmem>>, vector<1x32xf32>
    %c7 = arith.constant 7 : index
    %c0_19 = arith.constant 0 : index
    %56 = vector.load %arg2[%c7, %c0_19] : memref<19x128xf32, #tpu.memory_space<vmem>>, vector<1x128xf32>
    %c8 = arith.constant 8 : index
    %c0_20 = arith.constant 0 : index
    %57 = vector.load %arg2[%c8, %c0_20] : memref<19x128xf32, #tpu.memory_space<vmem>>, vector<1x32xf32>
    %c9 = arith.constant 9 : index
    %c0_21 = arith.constant 0 : index
    %58 = vector.load %arg2[%c9, %c0_21] : memref<19x128xf32, #tpu.memory_space<vmem>>, vector<1x32xf32>
    %c10 = arith.constant 10 : index
    %c0_22 = arith.constant 0 : index
    %59 = vector.load %arg2[%c10, %c0_22] : memref<19x128xf32, #tpu.memory_space<vmem>>, vector<1x32xf32>
    %c32 = arith.constant 32 : index
    %c0_23 = arith.constant 0 : index
    %60 = vector.load %arg3[%c32, %c0_23] : memref<224x128xf32, #tpu.memory_space<vmem>>, vector<32x96xf32>
    %61 = arith.truncf %36 : vector<32x32xf32> to vector<32x32xbf16>
    %62 = arith.truncf %60 : vector<32x96xf32> to vector<32x96xbf16>
    %cst_24 = arith.constant dense<0.000000e+00> : vector<32x96xf32>
    %63 = tpu.matmul %61, %62, %cst_24 {dimension_numbers = #tpu.dot_dimension_numbers<[1], [0], [0], [1], [0, 0, 1, 1], [], []>} : vector<32x32xbf16>, vector<32x96xbf16>, vector<32x96xf32> -> vector<32x96xf32>
    %64 = vector.broadcast %52 : vector<1x96xf32> to vector<32x96xf32>
    %65 = arith.addf %63, %64 : vector<32x96xf32>
    %66 = arith.truncf %65 : vector<32x96xf32> to vector<32x96xbf16>
    %c64 = arith.constant 64 : index
    %c0_25 = arith.constant 0 : index
    %67 = vector.load %arg3[%c64, %c0_25] : memref<224x128xf32, #tpu.memory_space<vmem>>, vector<32x32xf32>
    %68 = arith.truncf %67 : vector<32x32xf32> to vector<32x32xbf16>
    %cst_26 = arith.constant 0.000000e+00 : f32
    %69 = vector.broadcast %cst_26 : f32 to vector<32x32xf32>
    %70 = vector.extract_strided_slice %66 {offsets = [0, 0], sizes = [32, 8], strides = [1, 1]} : vector<32x96xbf16> to vector<32x8xbf16>
    %71 = vector.extract_strided_slice %66 {offsets = [0, 32], sizes = [32, 8], strides = [1, 1]} : vector<32x96xbf16> to vector<32x8xbf16>
    %72 = vector.extract_strided_slice %66 {offsets = [0, 64], sizes = [32, 8], strides = [1, 1]} : vector<32x96xbf16> to vector<32x8xbf16>
    %cst_27 = arith.constant dense<0.000000e+00> : vector<32x32xf32>
    %73 = tpu.matmul %70, %71, %cst_27 {dimension_numbers = #tpu.dot_dimension_numbers<[1], [1], [0], [0], [0, 0, 1, 0], [], []>} : vector<32x8xbf16>, vector<32x8xbf16>, vector<32x32xf32> -> vector<32x32xf32>
    %cst_28 = arith.constant 0.353553385 : f32
    %74 = vector.broadcast %cst_28 : f32 to vector<32x32xf32>
    %75 = arith.mulf %73, %74 : vector<32x32xf32>
    %76 = arith.addf %75, %51 : vector<32x32xf32>
    %cst_29 = arith.constant dense<0xFF800000> : vector<32xf32>
    %77 = vector.multi_reduction <maximumf>, %76, %cst_29 [1] : vector<32x32xf32> to vector<32xf32>
    %78 = vector.shape_cast %77 : vector<32xf32> to vector<32x1xf32>
    %79 = vector.broadcast %78 : vector<32x1xf32> to vector<32x32xf32>
    %80 = arith.subf %76, %79 : vector<32x32xf32>
    %81 = math.exp %80 : vector<32x32xf32>
    %cst_30 = arith.constant dense<0.000000e+00> : vector<32xf32>
    %82 = vector.multi_reduction <add>, %81, %cst_30 [1] : vector<32x32xf32> to vector<32xf32>
    %83 = vector.shape_cast %82 : vector<32xf32> to vector<32x1xf32>
    %84 = tpu.reciprocal %83 : vector<32x1xf32> -> vector<32x1xf32>
    %85 = vector.broadcast %84 : vector<32x1xf32> to vector<32x32xf32>
    %86 = arith.mulf %81, %85 : vector<32x32xf32>
    %87 = arith.truncf %86 : vector<32x32xf32> to vector<32x32xbf16>
    %cst_31 = arith.constant dense<0.000000e+00> : vector<32x8xf32>
    %88 = tpu.matmul %87, %72, %cst_31 {dimension_numbers = #tpu.dot_dimension_numbers<[1], [0], [0], [1], [0, 0, 1, 1], [], []>} : vector<32x32xbf16>, vector<32x8xbf16>, vector<32x8xf32> -> vector<32x8xf32>
    %89 = arith.truncf %88 : vector<32x8xf32> to vector<32x8xbf16>
    %90 = vector.extract_strided_slice %68 {offsets = [0, 0], sizes = [8, 32], strides = [1, 1]} : vector<32x32xbf16> to vector<8x32xbf16>
    %cst_32 = arith.constant dense<0.000000e+00> : vector<32x32xf32>
    %91 = tpu.matmul %89, %90, %cst_32 {dimension_numbers = #tpu.dot_dimension_numbers<[1], [0], [0], [1], [0, 0, 1, 1], [], []>} : vector<32x8xbf16>, vector<8x32xbf16>, vector<32x32xf32> -> vector<32x32xf32>
    %92 = arith.addf %69, %91 : vector<32x32xf32>
    %93 = vector.extract_strided_slice %66 {offsets = [0, 8], sizes = [32, 8], strides = [1, 1]} : vector<32x96xbf16> to vector<32x8xbf16>
    %94 = vector.extract_strided_slice %66 {offsets = [0, 40], sizes = [32, 8], strides = [1, 1]} : vector<32x96xbf16> to vector<32x8xbf16>
    %95 = vector.extract_strided_slice %66 {offsets = [0, 72], sizes = [32, 8], strides = [1, 1]} : vector<32x96xbf16> to vector<32x8xbf16>
    %cst_33 = arith.constant dense<0.000000e+00> : vector<32x32xf32>
    %96 = tpu.matmul %93, %94, %cst_33 {dimension_numbers = #tpu.dot_dimension_numbers<[1], [1], [0], [0], [0, 0, 1, 0], [], []>} : vector<32x8xbf16>, vector<32x8xbf16>, vector<32x32xf32> -> vector<32x32xf32>
    %cst_34 = arith.constant 0.353553385 : f32
    %97 = vector.broadcast %cst_34 : f32 to vector<32x32xf32>
    %98 = arith.mulf %96, %97 : vector<32x32xf32>
    %99 = arith.addf %98, %51 : vector<32x32xf32>
    %cst_35 = arith.constant dense<0xFF800000> : vector<32xf32>
    %100 = vector.multi_reduction <maximumf>, %99, %cst_35 [1] : vector<32x32xf32> to vector<32xf32>
    %101 = vector.shape_cast %100 : vector<32xf32> to vector<32x1xf32>
    %102 = vector.broadcast %101 : vector<32x1xf32> to vector<32x32xf32>
    %103 = arith.subf %99, %102 : vector<32x32xf32>
    %104 = math.exp %103 : vector<32x32xf32>
    %cst_36 = arith.constant dense<0.000000e+00> : vector<32xf32>
    %105 = vector.multi_reduction <add>, %104, %cst_36 [1] : vector<32x32xf32> to vector<32xf32>
    %106 = vector.shape_cast %105 : vector<32xf32> to vector<32x1xf32>
    %107 = tpu.reciprocal %106 : vector<32x1xf32> -> vector<32x1xf32>
    %108 = vector.broadcast %107 : vector<32x1xf32> to vector<32x32xf32>
    %109 = arith.mulf %104, %108 : vector<32x32xf32>
    %110 = arith.truncf %109 : vector<32x32xf32> to vector<32x32xbf16>
    %cst_37 = arith.constant dense<0.000000e+00> : vector<32x8xf32>
    %111 = tpu.matmul %110, %95, %cst_37 {dimension_numbers = #tpu.dot_dimension_numbers<[1], [0], [0], [1], [0, 0, 1, 1], [], []>} : vector<32x32xbf16>, vector<32x8xbf16>, vector<32x8xf32> -> vector<32x8xf32>
    %112 = arith.truncf %111 : vector<32x8xf32> to vector<32x8xbf16>
    %113 = vector.extract_strided_slice %68 {offsets = [8, 0], sizes = [8, 32], strides = [1, 1]} : vector<32x32xbf16> to vector<8x32xbf16>
    %cst_38 = arith.constant dense<0.000000e+00> : vector<32x32xf32>
    %114 = tpu.matmul %112, %113, %cst_38 {dimension_numbers = #tpu.dot_dimension_numbers<[1], [0], [0], [1], [0, 0, 1, 1], [], []>} : vector<32x8xbf16>, vector<8x32xbf16>, vector<32x32xf32> -> vector<32x32xf32>
    %115 = arith.addf %92, %114 : vector<32x32xf32>
    %116 = vector.extract_strided_slice %66 {offsets = [0, 16], sizes = [32, 8], strides = [1, 1]} : vector<32x96xbf16> to vector<32x8xbf16>
    %117 = vector.extract_strided_slice %66 {offsets = [0, 48], sizes = [32, 8], strides = [1, 1]} : vector<32x96xbf16> to vector<32x8xbf16>
    %118 = vector.extract_strided_slice %66 {offsets = [0, 80], sizes = [32, 8], strides = [1, 1]} : vector<32x96xbf16> to vector<32x8xbf16>
    %cst_39 = arith.constant dense<0.000000e+00> : vector<32x32xf32>
    %119 = tpu.matmul %116, %117, %cst_39 {dimension_numbers = #tpu.dot_dimension_numbers<[1], [1], [0], [0], [0, 0, 1, 0], [], []>} : vector<32x8xbf16>, vector<32x8xbf16>, vector<32x32xf32> -> vector<32x32xf32>
    %cst_40 = arith.constant 0.353553385 : f32
    %120 = vector.broadcast %cst_40 : f32 to vector<32x32xf32>
    %121 = arith.mulf %119, %120 : vector<32x32xf32>
    %122 = arith.addf %121, %51 : vector<32x32xf32>
    %cst_41 = arith.constant dense<0xFF800000> : vector<32xf32>
    %123 = vector.multi_reduction <maximumf>, %122, %cst_41 [1] : vector<32x32xf32> to vector<32xf32>
    %124 = vector.shape_cast %123 : vector<32xf32> to vector<32x1xf32>
    %125 = vector.broadcast %124 : vector<32x1xf32> to vector<32x32xf32>
    %126 = arith.subf %122, %125 : vector<32x32xf32>
    %127 = math.exp %126 : vector<32x32xf32>
    %cst_42 = arith.constant dense<0.000000e+00> : vector<32xf32>
    %128 = vector.multi_reduction <add>, %127, %cst_42 [1] : vector<32x32xf32> to vector<32xf32>
    %129 = vector.shape_cast %128 : vector<32xf32> to vector<32x1xf32>
    %130 = tpu.reciprocal %129 : vector<32x1xf32> -> vector<32x1xf32>
    %131 = vector.broadcast %130 : vector<32x1xf32> to vector<32x32xf32>
    %132 = arith.mulf %127, %131 : vector<32x32xf32>
    %133 = arith.truncf %132 : vector<32x32xf32> to vector<32x32xbf16>
    %cst_43 = arith.constant dense<0.000000e+00> : vector<32x8xf32>
    %134 = tpu.matmul %133, %118, %cst_43 {dimension_numbers = #tpu.dot_dimension_numbers<[1], [0], [0], [1], [0, 0, 1, 1], [], []>} : vector<32x32xbf16>, vector<32x8xbf16>, vector<32x8xf32> -> vector<32x8xf32>
    %135 = arith.truncf %134 : vector<32x8xf32> to vector<32x8xbf16>
    %136 = vector.extract_strided_slice %68 {offsets = [16, 0], sizes = [8, 32], strides = [1, 1]} : vector<32x32xbf16> to vector<8x32xbf16>
    %cst_44 = arith.constant dense<0.000000e+00> : vector<32x32xf32>
    %137 = tpu.matmul %135, %136, %cst_44 {dimension_numbers = #tpu.dot_dimension_numbers<[1], [0], [0], [1], [0, 0, 1, 1], [], []>} : vector<32x8xbf16>, vector<8x32xbf16>, vector<32x32xf32> -> vector<32x32xf32>
    %138 = arith.addf %115, %137 : vector<32x32xf32>
    %139 = vector.extract_strided_slice %66 {offsets = [0, 24], sizes = [32, 8], strides = [1, 1]} : vector<32x96xbf16> to vector<32x8xbf16>
    %140 = vector.extract_strided_slice %66 {offsets = [0, 56], sizes = [32, 8], strides = [1, 1]} : vector<32x96xbf16> to vector<32x8xbf16>
    %141 = vector.extract_strided_slice %66 {offsets = [0, 88], sizes = [32, 8], strides = [1, 1]} : vector<32x96xbf16> to vector<32x8xbf16>
    %cst_45 = arith.constant dense<0.000000e+00> : vector<32x32xf32>
    %142 = tpu.matmul %139, %140, %cst_45 {dimension_numbers = #tpu.dot_dimension_numbers<[1], [1], [0], [0], [0, 0, 1, 0], [], []>} : vector<32x8xbf16>, vector<32x8xbf16>, vector<32x32xf32> -> vector<32x32xf32>
    %cst_46 = arith.constant 0.353553385 : f32
    %143 = vector.broadcast %cst_46 : f32 to vector<32x32xf32>
    %144 = arith.mulf %142, %143 : vector<32x32xf32>
    %145 = arith.addf %144, %51 : vector<32x32xf32>
    %cst_47 = arith.constant dense<0xFF800000> : vector<32xf32>
    %146 = vector.multi_reduction <maximumf>, %145, %cst_47 [1] : vector<32x32xf32> to vector<32xf32>
    %147 = vector.shape_cast %146 : vector<32xf32> to vector<32x1xf32>
    %148 = vector.broadcast %147 : vector<32x1xf32> to vector<32x32xf32>
    %149 = arith.subf %145, %148 : vector<32x32xf32>
    %150 = math.exp %149 : vector<32x32xf32>
    %cst_48 = arith.constant dense<0.000000e+00> : vector<32xf32>
    %151 = vector.multi_reduction <add>, %150, %cst_48 [1] : vector<32x32xf32> to vector<32xf32>
    %152 = vector.shape_cast %151 : vector<32xf32> to vector<32x1xf32>
    %153 = tpu.reciprocal %152 : vector<32x1xf32> -> vector<32x1xf32>
    %154 = vector.broadcast %153 : vector<32x1xf32> to vector<32x32xf32>
    %155 = arith.mulf %150, %154 : vector<32x32xf32>
    %156 = arith.truncf %155 : vector<32x32xf32> to vector<32x32xbf16>
    %cst_49 = arith.constant dense<0.000000e+00> : vector<32x8xf32>
    %157 = tpu.matmul %156, %141, %cst_49 {dimension_numbers = #tpu.dot_dimension_numbers<[1], [0], [0], [1], [0, 0, 1, 1], [], []>} : vector<32x32xbf16>, vector<32x8xbf16>, vector<32x8xf32> -> vector<32x8xf32>
    %158 = arith.truncf %157 : vector<32x8xf32> to vector<32x8xbf16>
    %159 = vector.extract_strided_slice %68 {offsets = [24, 0], sizes = [8, 32], strides = [1, 1]} : vector<32x32xbf16> to vector<8x32xbf16>
    %cst_50 = arith.constant dense<0.000000e+00> : vector<32x32xf32>
    %160 = tpu.matmul %158, %159, %cst_50 {dimension_numbers = #tpu.dot_dimension_numbers<[1], [0], [0], [1], [0, 0, 1, 1], [], []>} : vector<32x8xbf16>, vector<8x32xbf16>, vector<32x32xf32> -> vector<32x32xf32>
    %161 = arith.addf %138, %160 : vector<32x32xf32>
    %162 = arith.addf %36, %161 : vector<32x32xf32>
    %163 = vector.broadcast %53 : vector<1x32xf32> to vector<32x32xf32>
    %164 = arith.addf %162, %163 : vector<32x32xf32>
    %cst_51 = arith.constant dense<0.000000e+00> : vector<32xf32>
    %165 = vector.multi_reduction <add>, %164, %cst_51 [1] : vector<32x32xf32> to vector<32xf32>
    %166 = vector.shape_cast %165 : vector<32xf32> to vector<32x1xf32>
    %cst_52 = arith.constant 3.200000e+01 : f32
    %167 = vector.broadcast %cst_52 : f32 to vector<32x1xf32>
    %168 = arith.divf %166, %167 : vector<32x1xf32>
    %169 = vector.broadcast %168 : vector<32x1xf32> to vector<32x32xf32>
    %170 = arith.subf %164, %169 : vector<32x32xf32>
    %171 = arith.mulf %170, %170 : vector<32x32xf32>
    %cst_53 = arith.constant dense<0.000000e+00> : vector<32xf32>
    %172 = vector.multi_reduction <add>, %171, %cst_53 [1] : vector<32x32xf32> to vector<32xf32>
    %173 = vector.shape_cast %172 : vector<32xf32> to vector<32x1xf32>
    %cst_54 = arith.constant 3.200000e+01 : f32
    %174 = vector.broadcast %cst_54 : f32 to vector<32x1xf32>
    %175 = arith.divf %173, %174 : vector<32x1xf32>
    %cst_55 = arith.constant 9.99999974E-6 : f32
    %176 = vector.broadcast %cst_55 : f32 to vector<32x1xf32>
    %177 = arith.addf %175, %176 : vector<32x1xf32>
    %178 = math.rsqrt %177 : vector<32x1xf32>
    %179 = vector.broadcast %178 : vector<32x1xf32> to vector<32x32xf32>
    %180 = arith.mulf %170, %179 : vector<32x32xf32>
    %181 = vector.broadcast %54 : vector<1x32xf32> to vector<32x32xf32>
    %182 = arith.mulf %180, %181 : vector<32x32xf32>
    %183 = vector.broadcast %55 : vector<1x32xf32> to vector<32x32xf32>
    %184 = arith.addf %182, %183 : vector<32x32xf32>
    %c96 = arith.constant 96 : index
    %c0_56 = arith.constant 0 : index
    %185 = vector.load %arg3[%c96, %c0_56] : memref<224x128xf32, #tpu.memory_space<vmem>>, vector<32x128xf32>
    %186 = arith.truncf %184 : vector<32x32xf32> to vector<32x32xbf16>
    %187 = arith.truncf %185 : vector<32x128xf32> to vector<32x128xbf16>
    %cst_57 = arith.constant dense<0.000000e+00> : vector<32x128xf32>
    %188 = tpu.matmul %186, %187, %cst_57 {dimension_numbers = #tpu.dot_dimension_numbers<[1], [0], [0], [1], [0, 0, 1, 1], [], []>} : vector<32x32xbf16>, vector<32x128xbf16>, vector<32x128xf32> -> vector<32x128xf32>
    %189 = vector.broadcast %56 : vector<1x128xf32> to vector<32x128xf32>
    %190 = arith.addf %188, %189 : vector<32x128xf32>
    %cst_58 = arith.constant 0.000000e+00 : f32
    %191 = vector.broadcast %cst_58 : f32 to vector<32x128xf32>
    %192 = arith.maximumf %190, %191 : vector<32x128xf32>
    %c0_59 = arith.constant 0 : index
    %c0_60 = arith.constant 0 : index
    %193 = vector.load %arg4[%c0_59, %c0_60] : memref<256x32xf32, #tpu.memory_space<vmem>>, vector<128x32xf32>
    %194 = arith.truncf %192 : vector<32x128xf32> to vector<32x128xbf16>
    %195 = arith.truncf %193 : vector<128x32xf32> to vector<128x32xbf16>
    %cst_61 = arith.constant dense<0.000000e+00> : vector<32x32xf32>
    %196 = tpu.matmul %194, %195, %cst_61 {dimension_numbers = #tpu.dot_dimension_numbers<[1], [0], [0], [1], [0, 0, 1, 1], [], []>} : vector<32x128xbf16>, vector<128x32xbf16>, vector<32x32xf32> -> vector<32x32xf32>
    %197 = vector.broadcast %57 : vector<1x32xf32> to vector<32x32xf32>
    %198 = arith.addf %196, %197 : vector<32x32xf32>
    %199 = arith.addf %184, %198 : vector<32x32xf32>
    %cst_62 = arith.constant dense<0.000000e+00> : vector<32xf32>
    %200 = vector.multi_reduction <add>, %199, %cst_62 [1] : vector<32x32xf32> to vector<32xf32>
    %201 = vector.shape_cast %200 : vector<32xf32> to vector<32x1xf32>
    %cst_63 = arith.constant 3.200000e+01 : f32
    %202 = vector.broadcast %cst_63 : f32 to vector<32x1xf32>
    %203 = arith.divf %201, %202 : vector<32x1xf32>
    %204 = vector.broadcast %203 : vector<32x1xf32> to vector<32x32xf32>
    %205 = arith.subf %199, %204 : vector<32x32xf32>
    %206 = arith.mulf %205, %205 : vector<32x32xf32>
    %cst_64 = arith.constant dense<0.000000e+00> : vector<32xf32>
    %207 = vector.multi_reduction <add>, %206, %cst_64 [1] : vector<32x32xf32> to vector<32xf32>
    %208 = vector.shape_cast %207 : vector<32xf32> to vector<32x1xf32>
    %cst_65 = arith.constant 3.200000e+01 : f32
    %209 = vector.broadcast %cst_65 : f32 to vector<32x1xf32>
    %210 = arith.divf %208, %209 : vector<32x1xf32>
    %cst_66 = arith.constant 9.99999974E-6 : f32
    %211 = vector.broadcast %cst_66 : f32 to vector<32x1xf32>
    %212 = arith.addf %210, %211 : vector<32x1xf32>
    %213 = math.rsqrt %212 : vector<32x1xf32>
    %214 = vector.broadcast %213 : vector<32x1xf32> to vector<32x32xf32>
    %215 = arith.mulf %205, %214 : vector<32x32xf32>
    %216 = vector.broadcast %58 : vector<1x32xf32> to vector<32x32xf32>
    %217 = arith.mulf %215, %216 : vector<32x32xf32>
    %218 = vector.broadcast %59 : vector<1x32xf32> to vector<32x32xf32>
    %219 = arith.addf %217, %218 : vector<32x32xf32>
    %c11 = arith.constant 11 : index
    %c0_67 = arith.constant 0 : index
    %220 = vector.load %arg2[%c11, %c0_67] : memref<19x128xf32, #tpu.memory_space<vmem>>, vector<1x96xf32>
    %c12 = arith.constant 12 : index
    %c0_68 = arith.constant 0 : index
    %221 = vector.load %arg2[%c12, %c0_68] : memref<19x128xf32, #tpu.memory_space<vmem>>, vector<1x32xf32>
    %c13 = arith.constant 13 : index
    %c0_69 = arith.constant 0 : index
    %222 = vector.load %arg2[%c13, %c0_69] : memref<19x128xf32, #tpu.memory_space<vmem>>, vector<1x32xf32>
    %c14 = arith.constant 14 : index
    %c0_70 = arith.constant 0 : index
    %223 = vector.load %arg2[%c14, %c0_70] : memref<19x128xf32, #tpu.memory_space<vmem>>, vector<1x32xf32>
    %c15 = arith.constant 15 : index
    %c0_71 = arith.constant 0 : index
    %224 = vector.load %arg2[%c15, %c0_71] : memref<19x128xf32, #tpu.memory_space<vmem>>, vector<1x128xf32>
    %c16 = arith.constant 16 : index
    %c0_72 = arith.constant 0 : index
    %225 = vector.load %arg2[%c16, %c0_72] : memref<19x128xf32, #tpu.memory_space<vmem>>, vector<1x32xf32>
    %c17 = arith.constant 17 : index
    %c0_73 = arith.constant 0 : index
    %226 = vector.load %arg2[%c17, %c0_73] : memref<19x128xf32, #tpu.memory_space<vmem>>, vector<1x32xf32>
    %c18 = arith.constant 18 : index
    %c0_74 = arith.constant 0 : index
    %227 = vector.load %arg2[%c18, %c0_74] : memref<19x128xf32, #tpu.memory_space<vmem>>, vector<1x32xf32>
    %c128 = arith.constant 128 : index
    %c0_75 = arith.constant 0 : index
    %228 = vector.load %arg3[%c128, %c0_75] : memref<224x128xf32, #tpu.memory_space<vmem>>, vector<32x96xf32>
    %229 = arith.truncf %219 : vector<32x32xf32> to vector<32x32xbf16>
    %230 = arith.truncf %228 : vector<32x96xf32> to vector<32x96xbf16>
    %cst_76 = arith.constant dense<0.000000e+00> : vector<32x96xf32>
    %231 = tpu.matmul %229, %230, %cst_76 {dimension_numbers = #tpu.dot_dimension_numbers<[1], [0], [0], [1], [0, 0, 1, 1], [], []>} : vector<32x32xbf16>, vector<32x96xbf16>, vector<32x96xf32> -> vector<32x96xf32>
    %232 = vector.broadcast %220 : vector<1x96xf32> to vector<32x96xf32>
    %233 = arith.addf %231, %232 : vector<32x96xf32>
    %234 = arith.truncf %233 : vector<32x96xf32> to vector<32x96xbf16>
    %c160 = arith.constant 160 : index
    %c0_77 = arith.constant 0 : index
    %235 = vector.load %arg3[%c160, %c0_77] : memref<224x128xf32, #tpu.memory_space<vmem>>, vector<32x32xf32>
    %236 = arith.truncf %235 : vector<32x32xf32> to vector<32x32xbf16>
    %cst_78 = arith.constant 0.000000e+00 : f32
    %237 = vector.broadcast %cst_78 : f32 to vector<32x32xf32>
    %238 = vector.extract_strided_slice %234 {offsets = [0, 0], sizes = [32, 8], strides = [1, 1]} : vector<32x96xbf16> to vector<32x8xbf16>
    %239 = vector.extract_strided_slice %234 {offsets = [0, 32], sizes = [32, 8], strides = [1, 1]} : vector<32x96xbf16> to vector<32x8xbf16>
    %240 = vector.extract_strided_slice %234 {offsets = [0, 64], sizes = [32, 8], strides = [1, 1]} : vector<32x96xbf16> to vector<32x8xbf16>
    %cst_79 = arith.constant dense<0.000000e+00> : vector<32x32xf32>
    %241 = tpu.matmul %238, %239, %cst_79 {dimension_numbers = #tpu.dot_dimension_numbers<[1], [1], [0], [0], [0, 0, 1, 0], [], []>} : vector<32x8xbf16>, vector<32x8xbf16>, vector<32x32xf32> -> vector<32x32xf32>
    %cst_80 = arith.constant 0.353553385 : f32
    %242 = vector.broadcast %cst_80 : f32 to vector<32x32xf32>
    %243 = arith.mulf %241, %242 : vector<32x32xf32>
    %244 = arith.addf %243, %51 : vector<32x32xf32>
    %cst_81 = arith.constant dense<0xFF800000> : vector<32xf32>
    %245 = vector.multi_reduction <maximumf>, %244, %cst_81 [1] : vector<32x32xf32> to vector<32xf32>
    %246 = vector.shape_cast %245 : vector<32xf32> to vector<32x1xf32>
    %247 = vector.broadcast %246 : vector<32x1xf32> to vector<32x32xf32>
    %248 = arith.subf %244, %247 : vector<32x32xf32>
    %249 = math.exp %248 : vector<32x32xf32>
    %cst_82 = arith.constant dense<0.000000e+00> : vector<32xf32>
    %250 = vector.multi_reduction <add>, %249, %cst_82 [1] : vector<32x32xf32> to vector<32xf32>
    %251 = vector.shape_cast %250 : vector<32xf32> to vector<32x1xf32>
    %252 = tpu.reciprocal %251 : vector<32x1xf32> -> vector<32x1xf32>
    %253 = vector.broadcast %252 : vector<32x1xf32> to vector<32x32xf32>
    %254 = arith.mulf %249, %253 : vector<32x32xf32>
    %255 = arith.truncf %254 : vector<32x32xf32> to vector<32x32xbf16>
    %cst_83 = arith.constant dense<0.000000e+00> : vector<32x8xf32>
    %256 = tpu.matmul %255, %240, %cst_83 {dimension_numbers = #tpu.dot_dimension_numbers<[1], [0], [0], [1], [0, 0, 1, 1], [], []>} : vector<32x32xbf16>, vector<32x8xbf16>, vector<32x8xf32> -> vector<32x8xf32>
    %257 = arith.truncf %256 : vector<32x8xf32> to vector<32x8xbf16>
    %258 = vector.extract_strided_slice %236 {offsets = [0, 0], sizes = [8, 32], strides = [1, 1]} : vector<32x32xbf16> to vector<8x32xbf16>
    %cst_84 = arith.constant dense<0.000000e+00> : vector<32x32xf32>
    %259 = tpu.matmul %257, %258, %cst_84 {dimension_numbers = #tpu.dot_dimension_numbers<[1], [0], [0], [1], [0, 0, 1, 1], [], []>} : vector<32x8xbf16>, vector<8x32xbf16>, vector<32x32xf32> -> vector<32x32xf32>
    %260 = arith.addf %237, %259 : vector<32x32xf32>
    %261 = vector.extract_strided_slice %234 {offsets = [0, 8], sizes = [32, 8], strides = [1, 1]} : vector<32x96xbf16> to vector<32x8xbf16>
    %262 = vector.extract_strided_slice %234 {offsets = [0, 40], sizes = [32, 8], strides = [1, 1]} : vector<32x96xbf16> to vector<32x8xbf16>
    %263 = vector.extract_strided_slice %234 {offsets = [0, 72], sizes = [32, 8], strides = [1, 1]} : vector<32x96xbf16> to vector<32x8xbf16>
    %cst_85 = arith.constant dense<0.000000e+00> : vector<32x32xf32>
    %264 = tpu.matmul %261, %262, %cst_85 {dimension_numbers = #tpu.dot_dimension_numbers<[1], [1], [0], [0], [0, 0, 1, 0], [], []>} : vector<32x8xbf16>, vector<32x8xbf16>, vector<32x32xf32> -> vector<32x32xf32>
    %cst_86 = arith.constant 0.353553385 : f32
    %265 = vector.broadcast %cst_86 : f32 to vector<32x32xf32>
    %266 = arith.mulf %264, %265 : vector<32x32xf32>
    %267 = arith.addf %266, %51 : vector<32x32xf32>
    %cst_87 = arith.constant dense<0xFF800000> : vector<32xf32>
    %268 = vector.multi_reduction <maximumf>, %267, %cst_87 [1] : vector<32x32xf32> to vector<32xf32>
    %269 = vector.shape_cast %268 : vector<32xf32> to vector<32x1xf32>
    %270 = vector.broadcast %269 : vector<32x1xf32> to vector<32x32xf32>
    %271 = arith.subf %267, %270 : vector<32x32xf32>
    %272 = math.exp %271 : vector<32x32xf32>
    %cst_88 = arith.constant dense<0.000000e+00> : vector<32xf32>
    %273 = vector.multi_reduction <add>, %272, %cst_88 [1] : vector<32x32xf32> to vector<32xf32>
    %274 = vector.shape_cast %273 : vector<32xf32> to vector<32x1xf32>
    %275 = tpu.reciprocal %274 : vector<32x1xf32> -> vector<32x1xf32>
    %276 = vector.broadcast %275 : vector<32x1xf32> to vector<32x32xf32>
    %277 = arith.mulf %272, %276 : vector<32x32xf32>
    %278 = arith.truncf %277 : vector<32x32xf32> to vector<32x32xbf16>
    %cst_89 = arith.constant dense<0.000000e+00> : vector<32x8xf32>
    %279 = tpu.matmul %278, %263, %cst_89 {dimension_numbers = #tpu.dot_dimension_numbers<[1], [0], [0], [1], [0, 0, 1, 1], [], []>} : vector<32x32xbf16>, vector<32x8xbf16>, vector<32x8xf32> -> vector<32x8xf32>
    %280 = arith.truncf %279 : vector<32x8xf32> to vector<32x8xbf16>
    %281 = vector.extract_strided_slice %236 {offsets = [8, 0], sizes = [8, 32], strides = [1, 1]} : vector<32x32xbf16> to vector<8x32xbf16>
    %cst_90 = arith.constant dense<0.000000e+00> : vector<32x32xf32>
    %282 = tpu.matmul %280, %281, %cst_90 {dimension_numbers = #tpu.dot_dimension_numbers<[1], [0], [0], [1], [0, 0, 1, 1], [], []>} : vector<32x8xbf16>, vector<8x32xbf16>, vector<32x32xf32> -> vector<32x32xf32>
    %283 = arith.addf %260, %282 : vector<32x32xf32>
    %284 = vector.extract_strided_slice %234 {offsets = [0, 16], sizes = [32, 8], strides = [1, 1]} : vector<32x96xbf16> to vector<32x8xbf16>
    %285 = vector.extract_strided_slice %234 {offsets = [0, 48], sizes = [32, 8], strides = [1, 1]} : vector<32x96xbf16> to vector<32x8xbf16>
    %286 = vector.extract_strided_slice %234 {offsets = [0, 80], sizes = [32, 8], strides = [1, 1]} : vector<32x96xbf16> to vector<32x8xbf16>
    %cst_91 = arith.constant dense<0.000000e+00> : vector<32x32xf32>
    %287 = tpu.matmul %284, %285, %cst_91 {dimension_numbers = #tpu.dot_dimension_numbers<[1], [1], [0], [0], [0, 0, 1, 0], [], []>} : vector<32x8xbf16>, vector<32x8xbf16>, vector<32x32xf32> -> vector<32x32xf32>
    %cst_92 = arith.constant 0.353553385 : f32
    %288 = vector.broadcast %cst_92 : f32 to vector<32x32xf32>
    %289 = arith.mulf %287, %288 : vector<32x32xf32>
    %290 = arith.addf %289, %51 : vector<32x32xf32>
    %cst_93 = arith.constant dense<0xFF800000> : vector<32xf32>
    %291 = vector.multi_reduction <maximumf>, %290, %cst_93 [1] : vector<32x32xf32> to vector<32xf32>
    %292 = vector.shape_cast %291 : vector<32xf32> to vector<32x1xf32>
    %293 = vector.broadcast %292 : vector<32x1xf32> to vector<32x32xf32>
    %294 = arith.subf %290, %293 : vector<32x32xf32>
    %295 = math.exp %294 : vector<32x32xf32>
    %cst_94 = arith.constant dense<0.000000e+00> : vector<32xf32>
    %296 = vector.multi_reduction <add>, %295, %cst_94 [1] : vector<32x32xf32> to vector<32xf32>
    %297 = vector.shape_cast %296 : vector<32xf32> to vector<32x1xf32>
    %298 = tpu.reciprocal %297 : vector<32x1xf32> -> vector<32x1xf32>
    %299 = vector.broadcast %298 : vector<32x1xf32> to vector<32x32xf32>
    %300 = arith.mulf %295, %299 : vector<32x32xf32>
    %301 = arith.truncf %300 : vector<32x32xf32> to vector<32x32xbf16>
    %cst_95 = arith.constant dense<0.000000e+00> : vector<32x8xf32>
    %302 = tpu.matmul %301, %286, %cst_95 {dimension_numbers = #tpu.dot_dimension_numbers<[1], [0], [0], [1], [0, 0, 1, 1], [], []>} : vector<32x32xbf16>, vector<32x8xbf16>, vector<32x8xf32> -> vector<32x8xf32>
    %303 = arith.truncf %302 : vector<32x8xf32> to vector<32x8xbf16>
    %304 = vector.extract_strided_slice %236 {offsets = [16, 0], sizes = [8, 32], strides = [1, 1]} : vector<32x32xbf16> to vector<8x32xbf16>
    %cst_96 = arith.constant dense<0.000000e+00> : vector<32x32xf32>
    %305 = tpu.matmul %303, %304, %cst_96 {dimension_numbers = #tpu.dot_dimension_numbers<[1], [0], [0], [1], [0, 0, 1, 1], [], []>} : vector<32x8xbf16>, vector<8x32xbf16>, vector<32x32xf32> -> vector<32x32xf32>
    %306 = arith.addf %283, %305 : vector<32x32xf32>
    %307 = vector.extract_strided_slice %234 {offsets = [0, 24], sizes = [32, 8], strides = [1, 1]} : vector<32x96xbf16> to vector<32x8xbf16>
    %308 = vector.extract_strided_slice %234 {offsets = [0, 56], sizes = [32, 8], strides = [1, 1]} : vector<32x96xbf16> to vector<32x8xbf16>
    %309 = vector.extract_strided_slice %234 {offsets = [0, 88], sizes = [32, 8], strides = [1, 1]} : vector<32x96xbf16> to vector<32x8xbf16>
    %cst_97 = arith.constant dense<0.000000e+00> : vector<32x32xf32>
    %310 = tpu.matmul %307, %308, %cst_97 {dimension_numbers = #tpu.dot_dimension_numbers<[1], [1], [0], [0], [0, 0, 1, 0], [], []>} : vector<32x8xbf16>, vector<32x8xbf16>, vector<32x32xf32> -> vector<32x32xf32>
    %cst_98 = arith.constant 0.353553385 : f32
    %311 = vector.broadcast %cst_98 : f32 to vector<32x32xf32>
    %312 = arith.mulf %310, %311 : vector<32x32xf32>
    %313 = arith.addf %312, %51 : vector<32x32xf32>
    %cst_99 = arith.constant dense<0xFF800000> : vector<32xf32>
    %314 = vector.multi_reduction <maximumf>, %313, %cst_99 [1] : vector<32x32xf32> to vector<32xf32>
    %315 = vector.shape_cast %314 : vector<32xf32> to vector<32x1xf32>
    %316 = vector.broadcast %315 : vector<32x1xf32> to vector<32x32xf32>
    %317 = arith.subf %313, %316 : vector<32x32xf32>
    %318 = math.exp %317 : vector<32x32xf32>
    %cst_100 = arith.constant dense<0.000000e+00> : vector<32xf32>
    %319 = vector.multi_reduction <add>, %318, %cst_100 [1] : vector<32x32xf32> to vector<32xf32>
    %320 = vector.shape_cast %319 : vector<32xf32> to vector<32x1xf32>
    %321 = tpu.reciprocal %320 : vector<32x1xf32> -> vector<32x1xf32>
    %322 = vector.broadcast %321 : vector<32x1xf32> to vector<32x32xf32>
    %323 = arith.mulf %318, %322 : vector<32x32xf32>
    %324 = arith.truncf %323 : vector<32x32xf32> to vector<32x32xbf16>
    %cst_101 = arith.constant dense<0.000000e+00> : vector<32x8xf32>
    %325 = tpu.matmul %324, %309, %cst_101 {dimension_numbers = #tpu.dot_dimension_numbers<[1], [0], [0], [1], [0, 0, 1, 1], [], []>} : vector<32x32xbf16>, vector<32x8xbf16>, vector<32x8xf32> -> vector<32x8xf32>
    %326 = arith.truncf %325 : vector<32x8xf32> to vector<32x8xbf16>
    %327 = vector.extract_strided_slice %236 {offsets = [24, 0], sizes = [8, 32], strides = [1, 1]} : vector<32x32xbf16> to vector<8x32xbf16>
    %cst_102 = arith.constant dense<0.000000e+00> : vector<32x32xf32>
    %328 = tpu.matmul %326, %327, %cst_102 {dimension_numbers = #tpu.dot_dimension_numbers<[1], [0], [0], [1], [0, 0, 1, 1], [], []>} : vector<32x8xbf16>, vector<8x32xbf16>, vector<32x32xf32> -> vector<32x32xf32>
    %329 = arith.addf %306, %328 : vector<32x32xf32>
    %330 = arith.addf %219, %329 : vector<32x32xf32>
    %331 = vector.broadcast %221 : vector<1x32xf32> to vector<32x32xf32>
    %332 = arith.addf %330, %331 : vector<32x32xf32>
    %cst_103 = arith.constant dense<0.000000e+00> : vector<32xf32>
    %333 = vector.multi_reduction <add>, %332, %cst_103 [1] : vector<32x32xf32> to vector<32xf32>
    %334 = vector.shape_cast %333 : vector<32xf32> to vector<32x1xf32>
    %cst_104 = arith.constant 3.200000e+01 : f32
    %335 = vector.broadcast %cst_104 : f32 to vector<32x1xf32>
    %336 = arith.divf %334, %335 : vector<32x1xf32>
    %337 = vector.broadcast %336 : vector<32x1xf32> to vector<32x32xf32>
    %338 = arith.subf %332, %337 : vector<32x32xf32>
    %339 = arith.mulf %338, %338 : vector<32x32xf32>
    %cst_105 = arith.constant dense<0.000000e+00> : vector<32xf32>
    %340 = vector.multi_reduction <add>, %339, %cst_105 [1] : vector<32x32xf32> to vector<32xf32>
    %341 = vector.shape_cast %340 : vector<32xf32> to vector<32x1xf32>
    %cst_106 = arith.constant 3.200000e+01 : f32
    %342 = vector.broadcast %cst_106 : f32 to vector<32x1xf32>
    %343 = arith.divf %341, %342 : vector<32x1xf32>
    %cst_107 = arith.constant 9.99999974E-6 : f32
    %344 = vector.broadcast %cst_107 : f32 to vector<32x1xf32>
    %345 = arith.addf %343, %344 : vector<32x1xf32>
    %346 = math.rsqrt %345 : vector<32x1xf32>
    %347 = vector.broadcast %346 : vector<32x1xf32> to vector<32x32xf32>
    %348 = arith.mulf %338, %347 : vector<32x32xf32>
    %349 = vector.broadcast %222 : vector<1x32xf32> to vector<32x32xf32>
    %350 = arith.mulf %348, %349 : vector<32x32xf32>
    %351 = vector.broadcast %223 : vector<1x32xf32> to vector<32x32xf32>
    %352 = arith.addf %350, %351 : vector<32x32xf32>
    %c192 = arith.constant 192 : index
    %c0_108 = arith.constant 0 : index
    %353 = vector.load %arg3[%c192, %c0_108] : memref<224x128xf32, #tpu.memory_space<vmem>>, vector<32x128xf32>
    %354 = arith.truncf %352 : vector<32x32xf32> to vector<32x32xbf16>
    %355 = arith.truncf %353 : vector<32x128xf32> to vector<32x128xbf16>
    %cst_109 = arith.constant dense<0.000000e+00> : vector<32x128xf32>
    %356 = tpu.matmul %354, %355, %cst_109 {dimension_numbers = #tpu.dot_dimension_numbers<[1], [0], [0], [1], [0, 0, 1, 1], [], []>} : vector<32x32xbf16>, vector<32x128xbf16>, vector<32x128xf32> -> vector<32x128xf32>
    %357 = vector.broadcast %224 : vector<1x128xf32> to vector<32x128xf32>
    %358 = arith.addf %356, %357 : vector<32x128xf32>
    %cst_110 = arith.constant 0.000000e+00 : f32
    %359 = vector.broadcast %cst_110 : f32 to vector<32x128xf32>
    %360 = arith.maximumf %358, %359 : vector<32x128xf32>
    %c128_111 = arith.constant 128 : index
    %c0_112 = arith.constant 0 : index
    %361 = vector.load %arg4[%c128_111, %c0_112] : memref<256x32xf32, #tpu.memory_space<vmem>>, vector<128x32xf32>
    %362 = arith.truncf %360 : vector<32x128xf32> to vector<32x128xbf16>
    %363 = arith.truncf %361 : vector<128x32xf32> to vector<128x32xbf16>
    %cst_113 = arith.constant dense<0.000000e+00> : vector<32x32xf32>
    %364 = tpu.matmul %362, %363, %cst_113 {dimension_numbers = #tpu.dot_dimension_numbers<[1], [0], [0], [1], [0, 0, 1, 1], [], []>} : vector<32x128xbf16>, vector<128x32xbf16>, vector<32x32xf32> -> vector<32x32xf32>
    %365 = vector.broadcast %225 : vector<1x32xf32> to vector<32x32xf32>
    %366 = arith.addf %364, %365 : vector<32x32xf32>
    %367 = arith.addf %352, %366 : vector<32x32xf32>
    %cst_114 = arith.constant dense<0.000000e+00> : vector<32xf32>
    %368 = vector.multi_reduction <add>, %367, %cst_114 [1] : vector<32x32xf32> to vector<32xf32>
    %369 = vector.shape_cast %368 : vector<32xf32> to vector<32x1xf32>
    %cst_115 = arith.constant 3.200000e+01 : f32
    %370 = vector.broadcast %cst_115 : f32 to vector<32x1xf32>
    %371 = arith.divf %369, %370 : vector<32x1xf32>
    %372 = vector.broadcast %371 : vector<32x1xf32> to vector<32x32xf32>
    %373 = arith.subf %367, %372 : vector<32x32xf32>
    %374 = arith.mulf %373, %373 : vector<32x32xf32>
    %cst_116 = arith.constant dense<0.000000e+00> : vector<32xf32>
    %375 = vector.multi_reduction <add>, %374, %cst_116 [1] : vector<32x32xf32> to vector<32xf32>
    %376 = vector.shape_cast %375 : vector<32xf32> to vector<32x1xf32>
    %cst_117 = arith.constant 3.200000e+01 : f32
    %377 = vector.broadcast %cst_117 : f32 to vector<32x1xf32>
    %378 = arith.divf %376, %377 : vector<32x1xf32>
    %cst_118 = arith.constant 9.99999974E-6 : f32
    %379 = vector.broadcast %cst_118 : f32 to vector<32x1xf32>
    %380 = arith.addf %378, %379 : vector<32x1xf32>
    %381 = math.rsqrt %380 : vector<32x1xf32>
    %382 = vector.broadcast %381 : vector<32x1xf32> to vector<32x32xf32>
    %383 = arith.mulf %373, %382 : vector<32x32xf32>
    %384 = vector.broadcast %226 : vector<1x32xf32> to vector<32x32xf32>
    %385 = arith.mulf %383, %384 : vector<32x32xf32>
    %386 = vector.broadcast %227 : vector<1x32xf32> to vector<32x32xf32>
    %387 = arith.addf %385, %386 : vector<32x32xf32>
    %c0_119 = arith.constant 0 : index
    %c0_120 = arith.constant 0 : index
    %388 = vector.load %arg3[%c0_119, %c0_120] : memref<224x128xf32, #tpu.memory_space<vmem>>, vector<32x128xf32>
    %389 = arith.truncf %387 : vector<32x32xf32> to vector<32x32xbf16>
    %390 = arith.truncf %388 : vector<32x128xf32> to vector<32x128xbf16>
    %cst_121 = arith.constant dense<0.000000e+00> : vector<32x128xf32>
    %391 = tpu.matmul %389, %390, %cst_121 {dimension_numbers = #tpu.dot_dimension_numbers<[1], [0], [0], [1], [0, 0, 1, 1], [], []>} : vector<32x32xbf16>, vector<32x128xbf16>, vector<32x128xf32> -> vector<32x128xf32>
    %c2 = arith.constant 2 : index
    %c0_122 = arith.constant 0 : index
    %392 = vector.load %arg2[%c2, %c0_122] : memref<19x128xf32, #tpu.memory_space<vmem>>, vector<1x128xf32>
    %393 = vector.broadcast %392 : vector<1x128xf32> to vector<32x128xf32>
    %394 = arith.addf %391, %393 : vector<32x128xf32>
    %c0_123 = arith.constant 0 : index
    %c0_124 = arith.constant 0 : index
    %395 = vector.load %arg5[%c0_123, %c0_124] : memref<32x128xf32, #tpu.memory_space<vmem>>, vector<32x128xf32>
    tpu.vector_store %arg5[%c0_123, %c0_124], %394 {strides = array<i32>} : memref<32x128xf32, #tpu.memory_space<vmem>>, vector<32x128xf32>,
    return
  }
}

</mosaic_0001>

<llo_original>
// kernel: sasrec_forward.1
$region0: #{sasrec_forward.1}
  #allocation0 [shape = 'u32[]', space=smem, size = 0x4, offset = 0x4, fixed_abs, tag = 'smem constant byte address 0x4 - core index']
  #allocation1 [shape = 'u32[72,128]{1,0:T(1,128)}', space=vmem, size = 0x9000, scoped, tag = 'internal scratch']
  %s0 = inlined_call_operand.vmem [shape: s32[32,2], index: 0, kind: input, shape index: {}]
  %s1 = inlined_call_operand.vmem [shape: f32[72,32], index: 1, kind: input, shape index: {}]
  %s2 = inlined_call_operand.vmem [shape: f32[19,128], index: 2, kind: input, shape index: {}]
  %s3 = inlined_call_operand.vmem [shape: f32[224,128], index: 3, kind: input, shape index: {}]
  %s4 = inlined_call_operand.vmem [shape: f32[256,32], index: 4, kind: input, shape index: {}]
  %s5 = inlined_call_operand.vmem [shape: f32[32,128], index: 5, kind: output, shape index: {}]
  %s6 = sld [smem:[#allocation0]]
  $region30: #{sasrec_forward.1} parent=0
    _
  %s8 = ssub.s32 1, %s6
  %s9 = scalar_select 0, %s8, %s6
  // Predicated region
  $region2: #{sasrec_forward.1} parent=0 // pred_check
    _
  $region3: #{sasrec_forward.1} parent=0 // pred_check_branch
    %11 = sbr.rel (0) target = $region5
  $region4: #{sasrec_forward.1} parent=0 // pred_region
    _
  $region5: #{sasrec_forward.1} parent=0 // pred_fallthru
    _
  // Predicated region
  $region6: #{sasrec_forward.1} parent=0 // pred_check
    _
  $region7: #{sasrec_forward.1} parent=0 // pred_check_branch
    %13 = sbr.rel (0) target = $region9
  $region8: #{sasrec_forward.1} parent=0 // pred_region
    _
  $region9: #{sasrec_forward.1} parent=0 // pred_fallthru
    _
  // Predicated region
  $region10: #{sasrec_forward.1} parent=0 // pred_check
    _
  $region11: #{sasrec_forward.1} parent=0 // pred_check_branch
    %15 = sbr.rel (0) target = $region13
  $region12: #{sasrec_forward.1} parent=0 // pred_region
    _
  $region13: #{sasrec_forward.1} parent=0 // pred_fallthru
    _
  // Predicated region
  $region14: #{sasrec_forward.1} parent=0 // pred_check
    _
  $region15: #{sasrec_forward.1} parent=0 // pred_check_branch
    %17 = sbr.rel (0) target = $region17
  $region16: #{sasrec_forward.1} parent=0 // pred_region
    _
  $region17: #{sasrec_forward.1} parent=0 // pred_fallthru
    _
  // Predicated region
  $region18: #{sasrec_forward.1} parent=0 // pred_check
    _
  $region19: #{sasrec_forward.1} parent=0 // pred_check_branch
    %19 = sbr.rel (0) target = $region21
  $region20: #{sasrec_forward.1} parent=0 // pred_region
    _
  $region21: #{sasrec_forward.1} parent=0 // pred_fallthru
    _
  %v21 = vld [vmem:[%s0] sm:$0xff]
  %v22 = vld [vmem:[%s0 + $0x8] sm:$0xff]
  %v23 = vld [vmem:[%s0 + $0x10] sm:$0xff]
  %v24 = vld [vmem:[%s0 + $0x18] sm:$0xff]
  %v25 = vlaneseq
  %v26 = vand.u32 %v25, 127
  %27 = vset.pattern.permute.xlu0 0
  %28 = vperm.xlu0 %27, %v21
  %v29 = vpop.permute.xlu0 %28
  %30 = vset.pattern.permute.xlu0 0
  %31 = vperm.xlu0 %30, %v22
  %v32 = vpop.permute.xlu0 %31
  %33 = vset.pattern.permute.xlu0 0
  %34 = vperm.xlu0 %33, %v23
  %v35 = vpop.permute.xlu0 %34
  %36 = vset.pattern.permute.xlu0 0
  %37 = vperm.xlu0 %36, %v24
  %v38 = vpop.permute.xlu0 %37
  %vm39 = vcmp.eq.s32.totalorder %v26, %v29
  %vm40 = vcmp.eq.s32.totalorder %v26, %v32
  %vm41 = vcmp.eq.s32.totalorder %v26, %v35
  %vm42 = vcmp.eq.s32.totalorder %v26, %v38
  %43 = vset.pattern.permute.xlu0 1
  %44 = vperm.xlu0 %43, %v21
  %v45 = vpop.permute.xlu0 %44
  %46 = vset.pattern.permute.xlu0 1
  %47 = vperm.xlu0 %46, %v22
  %v48 = vpop.permute.xlu0 %47
  %49 = vset.pattern.permute.xlu0 1
  %50 = vperm.xlu0 %49, %v23
  %v51 = vpop.permute.xlu0 %50
  %52 = vset.pattern.permute.xlu0 1
  %53 = vperm.xlu0 %52, %v24
  %v54 = vpop.permute.xlu0 %53
  %vm55 = vcmp.eq.s32.totalorder %v26, %v45
  %vm56 = vcmp.eq.s32.totalorder %v26, %v48
  %vm57 = vcmp.eq.s32.totalorder %v26, %v51
  %vm58 = vcmp.eq.s32.totalorder %v26, %v54
  %vm59 = vmor %vm39, %vm55
  %vm60 = vmor %vm40, %vm56
  %vm61 = vmor %vm41, %vm57
  %vm62 = vmor %vm42, %vm58
  %v63 = vld [vmem:[%s1] sm:$0xff]
  %v64 = vld [vmem:[%s1 + $0x8] sm:$0xff]
  %v65 = vld [vmem:[%s1 + $0x10] sm:$0xff]
  %v66 = vld [vmem:[%s1 + $0x18] sm:$0xff]
  %v67 = vld [vmem:[%s1 + $0x20] sm:$0xff]
  %v68 = vld [vmem:[%s1 + $0x28] sm:$0xff]
  %v69 = vld [vmem:[%s1 + $0x30] sm:$0xff]
  %v70 = vld [vmem:[%s1 + $0x38] sm:$0xff]
  %v71 = vld [vmem:[%s1 + $0x40] sm:$0xff]
  %v72 = vsel %vm59, 1, 0
  %v73 = vsel %vm60, 1, 0
  %v74 = vsel %vm61, 1, 0
  %v75 = vsel %vm62, 1, 0
  %v76 = vcvt.s32.f32 %v72
  %v77 = vcvt.s32.f32 %v73
  %v78 = vcvt.s32.f32 %v74
  %v79 = vcvt.s32.f32 %v75
  %v80 = vpack.c.bf16 %v77, %v76
  %v81 = vpack.c.bf16 %v79, %v78
  %v82 = vpack.c.bf16 %v64, %v63
  %v83 = vpack.c.bf16 %v66, %v65
  %v84 = vpack.c.bf16 %v68, %v67
  %v85 = vpack.c.bf16 %v70, %v69
  %v86 = vpack.c.bf16 %v71, %v71
  %vm87 = vcmask 588800
  %v89 = vsel %vm87, %v80, 0
  %v92 = vsel %vm87, %v81, 0
  %vm94 = vcmask 1043456
  %v96 = vsel %vm94, %v86, 0
  %98 = vmatpush.bf16.msra.mxu0 0
  %99 = vmatpush.bf16.msra.mxu0 0
  %100 = vmatpush.bf16.msra.mxu0 0
  %101 = vmatpush.bf16.msra.mxu0 %v96
  %102 = vmatpush.bf16.msra.mxu0 %v85
  %103 = vmatpush.bf16.msra.mxu0 %v84
  %104 = vmatpush.bf16.msra.mxu0 %v83
  %105 = vmatpush.bf16.msra.mxu0 %v82
  %106 = vmatmul.bf16.gmra.mxu0 %v89
  %v107 = vpop.f32.mrf.mxu0
  %v108 = vadd.f32 0.0, %v107
  %v109 = vpop.f32.mrf.mxu0
  %v110 = vadd.f32 0.0, %v109
  %111 = vmatmul.bf16.gmra.mxu0 %v92
  %v112 = vpop.f32.mrf.mxu0
  %v113 = vadd.f32 0.0, %v112
  %v114 = vpop.f32.mrf.mxu0
  %v115 = vadd.f32 0.0, %v114
  %116 = vdwg.mxu0
  %v117 = vld [vmem:[%s2] sm:$0x1]
  %v118 = vld [vmem:[%s2 + $0x1] sm:$0x1]
  %vm119 = vcmask 261120
  %v120 = vsel %vm119, %v108, 0.0
  %121 = vadd.xlane.f32.xlu0 %v120
  %v122 = vpop.xlane.xlu0 %121
  %v123 = vsel %vm119, %v110, 0.0
  %124 = vadd.xlane.f32.xlu0 %v123
  %v125 = vpop.xlane.xlu0 %124
  %v126 = vsel %vm119, %v113, 0.0
  %127 = vadd.xlane.f32.xlu0 %v126
  %v128 = vpop.xlane.xlu0 %127
  %v129 = vsel %vm119, %v115, 0.0
  %130 = vadd.xlane.f32.xlu0 %v129
  %v131 = vpop.xlane.xlu0 %130
  %v132 = vrcp.pop 32.0
  %v133 = vmul.f32 32.0, %v132
  %v134 = vsub.f32 1.0, %v133
  %v135 = vmul.f32 %v132, %v134
  %v136 = vadd.f32 %v132, %v135
  %vm137 = vweird.f32 %v132
  %v138 = vsel %vm137, %v132, %v136
  %v139 = vmul.f32 %v122, %v138
  %v140 = vmul.f32 %v125, %v138
  %v141 = vmul.f32 %v128, %v138
  %v142 = vmul.f32 %v131, %v138
  %v143 = vsub.f32 %v108, %v139
  %v144 = vsub.f32 %v110, %v140
  %v145 = vsub.f32 %v113, %v141
  %v146 = vsub.f32 %v115, %v142
  %v147 = vmul.f32 %v143, %v143
  %v148 = vmul.f32 %v144, %v144
  %v149 = vmul.f32 %v145, %v145
  %v150 = vmul.f32 %v146, %v146
  %v151 = vsel %vm119, %v147, 0.0
  %152 = vadd.xlane.f32.xlu0 %v151
  %v153 = vpop.xlane.xlu0 %152
  %v154 = vsel %vm119, %v148, 0.0
  %155 = vadd.xlane.f32.xlu0 %v154
  %v156 = vpop.xlane.xlu0 %155
  %v157 = vsel %vm119, %v149, 0.0
  %158 = vadd.xlane.f32.xlu0 %v157
  %v159 = vpop.xlane.xlu0 %158
  %v160 = vsel %vm119, %v150, 0.0
  %161 = vadd.xlane.f32.xlu0 %v160
  %v162 = vpop.xlane.xlu0 %161
  %v163 = vmul.f32 %v153, %v138
  %v164 = vmul.f32 %v156, %v138
  %v165 = vmul.f32 %v159, %v138
  %v166 = vmul.f32 %v162, %v138
  %v167 = vadd.f32 %v163, 1e-05
  %v168 = vadd.f32 %v164, 1e-05
  %v169 = vadd.f32 %v165, 1e-05
  %v170 = vadd.f32 %v166, 1e-05
  %v171 = vrsqrt.pop %v167
  %v172 = vmul.f32 %v171, %v167
  %v173 = vmul.f32 %v172, %v171
  %v174 = vmul.f32 0.5, %v173
  %v175 = vsub.f32 1.5, %v174
  %v176 = vmul.f32 %v171, %v175
  %vm177 = vweird.f32 %v167
  %vm178 = vweird.f32 %v171
  %vm179 = vmor %vm177, %vm178
  %v180 = vsel %vm179, %v171, %v176
  %v181 = vrsqrt.pop %v168
  %v182 = vmul.f32 %v181, %v168
  %v183 = vmul.f32 %v182, %v181
  %v184 = vmul.f32 0.5, %v183
  %v185 = vsub.f32 1.5, %v184
  %v186 = vmul.f32 %v181, %v185
  %vm187 = vweird.f32 %v168
  %vm188 = vweird.f32 %v181
  %vm189 = vmor %vm187, %vm188
  %v190 = vsel %vm189, %v181, %v186
  %v191 = vrsqrt.pop %v169
  %v192 = vmul.f32 %v191, %v169
  %v193 = vmul.f32 %v192, %v191
  %v194 = vmul.f32 0.5, %v193
  %v195 = vsub.f32 1.5, %v194
  %v196 = vmul.f32 %v191, %v195
  %vm197 = vweird.f32 %v169
  %vm198 = vweird.f32 %v191
  %vm199 = vmor %vm197, %vm198
  %v200 = vsel %vm199, %v191, %v196
  %v201 = vrsqrt.pop %v170
  %v202 = vmul.f32 %v201, %v170
  %v203 = vmul.f32 %v202, %v201
  %v204 = vmul.f32 0.5, %v203
  %v205 = vsub.f32 1.5, %v204
  %v206 = vmul.f32 %v201, %v205
  %vm207 = vweird.f32 %v170
  %vm208 = vweird.f32 %v201
  %vm209 = vmor %vm207, %vm208
  %v210 = vsel %vm209, %v201, %v206
  %v211 = vmul.f32 %v143, %v180
  %v212 = vmul.f32 %v144, %v190
  %v213 = vmul.f32 %v145, %v200
  %v214 = vmul.f32 %v146, %v210
  %v215 = vperm.slane %v117, 0
  %v216 = vmul.f32 %v211, %v215
  %v217 = vmul.f32 %v212, %v215
  %v218 = vmul.f32 %v213, %v215
  %v219 = vmul.f32 %v214, %v215
  %v220 = vperm.slane %v118, 0
  %v221 = vadd.f32 %v216, %v220
  %v222 = vadd.f32 %v217, %v220
  %v223 = vadd.f32 %v218, %v220
  %v224 = vadd.f32 %v219, %v220
  %v225 = vsub.s32 %v21, 64
  %v226 = vsub.s32 %v22, 64
  %v227 = vsub.s32 %v23, 64
  %v228 = vsub.s32 %v24, 64
  %229 = vset.pattern.permute.xlu0 1
  %230 = vperm.xlu0 %229, %v225
  %v231 = vpop.permute.xlu0 %230
  %232 = vset.pattern.permute.xlu0 1
  %233 = vperm.xlu0 %232, %v226
  %v234 = vpop.permute.xlu0 %233
  %235 = vset.pattern.permute.xlu0 1
  %236 = vperm.xlu0 %235, %v227
  %v237 = vpop.permute.xlu0 %236
  %238 = vset.pattern.permute.xlu0 1
  %239 = vperm.xlu0 %238, %v228
  %v240 = vpop.permute.xlu0 %239
  %vm241 = vcmp.eq.s32.totalorder %v26, %v231
  %vm242 = vcmp.eq.s32.totalorder %v26, %v234
  %vm243 = vcmp.eq.s32.totalorder %v26, %v237
  %vm244 = vcmp.eq.s32.totalorder %v26, %v240
  %v245 = vsel %vm241, 1, 0
  %v246 = vsel %vm242, 1, 0
  %v247 = vsel %vm243, 1, 0
  %v248 = vsel %vm244, 1, 0
  %v249 = vcvt.s32.f32 %v245
  %v250 = vcvt.s32.f32 %v246
  %v251 = vcvt.s32.f32 %v247
  %v252 = vcvt.s32.f32 %v248
  %v253 = vpack.c.bf16 %v250, %v249
  %v254 = vpack.c.bf16 %v252, %v251
  %vm255 = vcmask 64512
  %v257 = vsel %vm255, %v253, 0
  %v260 = vsel %vm255, %v254, 0
  %262 = vmatpush.bf16.xpose.msra.mxu0 0
  %263 = vmatpush.bf16.xpose.msra.mxu0 0
  %264 = vmatpush.bf16.xpose.msra.mxu0 0
  %265 = vmatpush.bf16.xpose.msra.mxu0 0
  %266 = vmatpush.bf16.xpose.msra.mxu0 0
  %267 = vmatpush.bf16.xpose.msra.mxu0 0
  %268 = vmatpush.bf16.xpose.msra.mxu0 %v260
  %269 = vmatpush.bf16.xpose.msra.mxu0 %v257
  %270 = vmatmul.bf16.gmra.mxu0 %v257
  %v271 = vpop.f32.mrf.mxu0
  %v272 = vadd.f32 0.0, %v271
  %v273 = vpop.f32.mrf.mxu0
  %v274 = vadd.f32 0.0, %v273
  %275 = vmatmul.bf16.gmra.mxu0 %v260
  %v276 = vpop.f32.mrf.mxu0
  %v277 = vadd.f32 0.0, %v276
  %v278 = vpop.f32.mrf.mxu0
  %v279 = vadd.f32 0.0, %v278
  %280 = vdwg.mxu0
  %vm281 = vcmp.gt.f32.partialorder %v272, 0.5
  %vm282 = vcmp.gt.f32.partialorder %v274, 0.5
  %vm283 = vcmp.gt.f32.partialorder %v277, 0.5
  %vm284 = vcmp.gt.f32.partialorder %v279, 0.5
  %v285 = vsel %vm281, 0.0, -1e+30
  %v286 = vsel %vm282, 0.0, -1e+30
  %v287 = vsel %vm283, 0.0, -1e+30
  %v288 = vsel %vm284, 0.0, -1e+30
  %v289 = vld [vmem:[%s2 + $0x3] sm:$0x1]
  %v290 = vld [vmem:[%s2 + $0x4] sm:$0x1]
  %v291 = vld [vmem:[%s2 + $0x5] sm:$0x1]
  %v292 = vld [vmem:[%s2 + $0x6] sm:$0x1]
  %v293 = vld [vmem:[%s2 + $0x7] sm:$0x1]
  %v294 = vld [vmem:[%s2 + $0x8] sm:$0x1]
  %v295 = vld [vmem:[%s2 + $0x9] sm:$0x1]
  %v296 = vld [vmem:[%s2 + $0xa] sm:$0x1]
  %v297 = vld [vmem:[%s3 + $0x20] sm:$0xff]
  %v298 = vld [vmem:[%s3 + $0x28] sm:$0xff]
  %v299 = vld [vmem:[%s3 + $0x30] sm:$0xff]
  %v300 = vld [vmem:[%s3 + $0x38] sm:$0xff]
  %v301 = vpack.c.bf16 %v222, %v221
  %v302 = vpack.c.bf16 %v224, %v223
  %v303 = vpack.c.bf16 %v298, %v297
  %v304 = vpack.c.bf16 %v300, %v299
  %v305 = vperm.slane %v289, 0
  %v307 = vsel %vm119, %v301, 0
  %v310 = vsel %vm119, %v302, 0
  %312 = vmatpush.bf16.msra.mxu0 0
  %313 = vmatpush.bf16.msra.mxu0 0
  %314 = vmatpush.bf16.msra.mxu0 0
  %315 = vmatpush.bf16.msra.mxu0 0
  %316 = vmatpush.bf16.msra.mxu0 0
  %317 = vmatpush.bf16.msra.mxu0 0
  %318 = vmatpush.bf16.msra.mxu0 %v304
  %319 = vmatpush.bf16.msra.mxu0 %v303
  %320 = vmatmul.bf16.gmra.mxu0 %v307
  %v321 = vpop.f32.mrf.mxu0
  %v322 = vadd.f32 %v305, %v321
  %v323 = vpop.f32.mrf.mxu0
  %v324 = vadd.f32 %v305, %v323
  %325 = vmatmul.bf16.gmra.mxu0 %v310
  %v326 = vpop.f32.mrf.mxu0
  %v327 = vadd.f32 %v305, %v326
  %v328 = vpop.f32.mrf.mxu0
  %v329 = vadd.f32 %v305, %v328
  %330 = vdwg.mxu0
  %v331 = vpack.c.bf16 %v322, %v322
  %v332 = vpack.c.bf16 %v324, %v324
  %v333 = vpack.c.bf16 %v327, %v327
  %v334 = vpack.c.bf16 %v329, %v329
  %v335 = vld [vmem:[%s3 + $0x40] sm:$0xff]
  %v336 = vld [vmem:[%s3 + $0x48] sm:$0xff]
  %v337 = vld [vmem:[%s3 + $0x50] sm:$0xff]
  %v338 = vld [vmem:[%s3 + $0x58] sm:$0xff]
  %v339 = vpack.c.bf16 %v335, %v335
  %v340 = vpack.c.bf16 %v336, %v336
  %v341 = vpack.c.bf16 %v337, %v337
  %v342 = vpack.c.bf16 %v338, %v338
  %v347 = vunpack.c.l.b16 %v331
  %v348 = vunpack.c.l.b16 %v332
  %v349 = vunpack.c.l.b16 %v333
  %v350 = vunpack.c.l.b16 %v334
  %v351 = vpack.c.b16 %v348, %v347
  %v352 = vpack.c.b16 %v350, %v349
  %353 = vrot.lane.b32.xlu0 %v351, 96
  %v354 = vpop.permute.xlu0 %353
  %355 = vrot.lane.b32.xlu0 %v352, 96
  %v356 = vpop.permute.xlu0 %355
  %v358 = vsel %vm255, %v351, 0
  %v361 = vsel %vm255, %v352, 0
  %v364 = vsel %vm255, %v354, 0
  %v367 = vsel %vm255, %v356, 0
  %369 = vmatpush.bf16.xpose.msra.mxu0 0
  %370 = vmatpush.bf16.xpose.msra.mxu0 0
  %371 = vmatpush.bf16.xpose.msra.mxu0 0
  %372 = vmatpush.bf16.xpose.msra.mxu0 0
  %373 = vmatpush.bf16.xpose.msra.mxu0 0
  %374 = vmatpush.bf16.xpose.msra.mxu0 0
  %375 = vmatpush.bf16.xpose.msra.mxu0 %v367
  %376 = vmatpush.bf16.xpose.msra.mxu0 %v364
  %377 = vmatmul.bf16.gmra.mxu0 %v358
  %v378 = vpop.f32.mrf.mxu0
  %v379 = vadd.f32 0.0, %v378
  %v380 = vpop.f32.mrf.mxu0
  %v381 = vadd.f32 0.0, %v380
  %382 = vmatmul.bf16.gmra.mxu0 %v361
  %v383 = vpop.f32.mrf.mxu0
  %v384 = vadd.f32 0.0, %v383
  %v385 = vpop.f32.mrf.mxu0
  %v386 = vadd.f32 0.0, %v385
  %387 = vdwg.mxu0
  %v388 = vmul.f32 %v379, 0.35355338
  %v389 = vmul.f32 %v381, 0.35355338
  %v390 = vmul.f32 %v384, 0.35355338
  %v391 = vmul.f32 %v386, 0.35355338
  %v392 = vadd.f32 %v388, %v285
  %v393 = vadd.f32 %v389, %v286
  %v394 = vadd.f32 %v390, %v287
  %v395 = vadd.f32 %v391, %v288
  %v396 = vsel %vm119, %v392, -inf
  %397 = vmax.xlane.f32.xlu0 %v396
  %v398 = vpop.xlane.xlu0 %397
  %v399 = vsel %vm119, %v393, -inf
  %400 = vmax.xlane.f32.xlu0 %v399
  %v401 = vpop.xlane.xlu0 %400
  %v402 = vsel %vm119, %v394, -inf
  %403 = vmax.xlane.f32.xlu0 %v402
  %v404 = vpop.xlane.xlu0 %403
  %v405 = vsel %vm119, %v395, -inf
  %406 = vmax.xlane.f32.xlu0 %v405
  %v407 = vpop.xlane.xlu0 %406
  %v408 = vsub.f32 %v392, %v398
  %v409 = vsub.f32 %v393, %v401
  %v410 = vsub.f32 %v394, %v404
  %v411 = vsub.f32 %v395, %v407
  %v412 = vmul.f32 %v408, 1.442695
  %v413 = vpow.pop %v412
  %v414 = vmul.f32 %v409, 1.442695
  %v415 = vpow.pop %v414
  %v416 = vmul.f32 %v410, 1.442695
  %v417 = vpow.pop %v416
  %v418 = vmul.f32 %v411, 1.442695
  %v419 = vpow.pop %v418
  %v420 = vsel %vm119, %v413, 0.0
  %421 = vadd.xlane.f32.xlu0 %v420
  %v422 = vpop.xlane.xlu0 %421
  %v423 = vsel %vm119, %v415, 0.0
  %424 = vadd.xlane.f32.xlu0 %v423
  %v425 = vpop.xlane.xlu0 %424
  %v426 = vsel %vm119, %v417, 0.0
  %427 = vadd.xlane.f32.xlu0 %v426
  %v428 = vpop.xlane.xlu0 %427
  %v429 = vsel %vm119, %v419, 0.0
  %430 = vadd.xlane.f32.xlu0 %v429
  %v431 = vpop.xlane.xlu0 %430
  %v432 = vrcp.pop %v422
  %v433 = vmul.f32 %v422, %v432
  %v434 = vsub.f32 1.0, %v433
  %v435 = vmul.f32 %v432, %v434
  %v436 = vadd.f32 %v432, %v435
  %vm437 = vweird.f32 %v422
  %vm438 = vweird.f32 %v432
  %vm439 = vmor %vm437, %vm438
  %v440 = vsel %vm439, %v432, %v436
  %v441 = vand.u32 2147483647, %v422
  %vm442 = vcmp.eq.f32.partialorder %v441, 8.507059e+37
  %v443 = vand.u32 %v422, 2147483648
  %v444 = vor.u32 1.1754944e-38, %v443
  %v445 = vsel %vm442, %v444, %v440
  %v446 = vrcp.pop %v425
  %v447 = vmul.f32 %v425, %v446
  %v448 = vsub.f32 1.0, %v447
  %v449 = vmul.f32 %v446, %v448
  %v450 = vadd.f32 %v446, %v449
  %vm451 = vweird.f32 %v425
  %vm452 = vweird.f32 %v446
  %vm453 = vmor %vm451, %vm452
  %v454 = vsel %vm453, %v446, %v450
  %v455 = vand.u32 2147483647, %v425
  %vm456 = vcmp.eq.f32.partialorder %v455, 8.507059e+37
  %v457 = vand.u32 %v425, 2147483648
  %v458 = vor.u32 1.1754944e-38, %v457
  %v459 = vsel %vm456, %v458, %v454
  %v460 = vrcp.pop %v428
  %v461 = vmul.f32 %v428, %v460
  %v462 = vsub.f32 1.0, %v461
  %v463 = vmul.f32 %v460, %v462
  %v464 = vadd.f32 %v460, %v463
  %vm465 = vweird.f32 %v428
  %vm466 = vweird.f32 %v460
  %vm467 = vmor %vm465, %vm466
  %v468 = vsel %vm467, %v460, %v464
  %v469 = vand.u32 2147483647, %v428
  %vm470 = vcmp.eq.f32.partialorder %v469, 8.507059e+37
  %v471 = vand.u32 %v428, 2147483648
  %v472 = vor.u32 1.1754944e-38, %v471
  %v473 = vsel %vm470, %v472, %v468
  %v474 = vrcp.pop %v431
  %v475 = vmul.f32 %v431, %v474
  %v476 = vsub.f32 1.0, %v475
  %v477 = vmul.f32 %v474, %v476
  %v478 = vadd.f32 %v474, %v477
  %vm479 = vweird.f32 %v431
  %vm480 = vweird.f32 %v474
  %vm481 = vmor %vm479, %vm480
  %v482 = vsel %vm481, %v474, %v478
  %v483 = vand.u32 2147483647, %v431
  %vm484 = vcmp.eq.f32.partialorder %v483, 8.507059e+37
  %v485 = vand.u32 %v431, 2147483648
  %v486 = vor.u32 1.1754944e-38, %v485
  %v487 = vsel %vm484, %v486, %v482
  %v488 = vmul.f32 %v413, %v445
  %v489 = vmul.f32 %v415, %v459
  %v490 = vmul.f32 %v417, %v473
  %v491 = vmul.f32 %v419, %v487
  %v492 = vpack.c.bf16 %v489, %v488
  %v493 = vpack.c.bf16 %v491, %v490
  %494 = vrot.lane.b32.xlu0 %v351, 64
  %v495 = vpop.permute.xlu0 %494
  %496 = vrot.lane.b32.xlu0 %v352, 64
  %v497 = vpop.permute.xlu0 %496
  %v501 = vsel %vm119, %v492, 0
  %v504 = vsel %vm119, %v493, 0
  %506 = vmatpush.bf16.msra.mxu0 0
  %507 = vmatpush.bf16.msra.mxu0 0
  %508 = vmatpush.bf16.msra.mxu0 0
  %509 = vmatpush.bf16.msra.mxu0 0
  %510 = vmatpush.bf16.msra.mxu0 0
  %511 = vmatpush.bf16.msra.mxu0 0
  %512 = vmatpush.bf16.msra.mxu0 %v497
  %513 = vmatpush.bf16.msra.mxu0 %v495
  %514 = vmatmul.bf16.gmra.mxu0 %v501
  %v515 = vpop.f32.mrf.mxu0
  %v516 = vadd.f32 0.0, %v515
  %v517 = vpop.f32.mrf.mxu0
  %v518 = vadd.f32 0.0, %v517
  %519 = vmatmul.bf16.gmra.mxu0 %v504
  %v520 = vpop.f32.mrf.mxu0
  %v521 = vadd.f32 0.0, %v520
  %v522 = vpop.f32.mrf.mxu0
  %v523 = vadd.f32 0.0, %v522
  %524 = vdwg.mxu0
  %v525 = vpack.c.bf16 %v518, %v516
  %v526 = vpack.c.bf16 %v523, %v521
  %527 = vrot.lane.b32.xlu0 %v351, 120
  %v528 = vpop.permute.xlu0 %527
  %529 = vrot.lane.b32.xlu0 %v352, 120
  %v530 = vpop.permute.xlu0 %529
  %531 = vrot.lane.b32.xlu0 %v351, 88
  %v532 = vpop.permute.xlu0 %531
  %533 = vrot.lane.b32.xlu0 %v352, 88
  %v534 = vpop.permute.xlu0 %533
  %v536 = vsel %vm255, %v528, 0
  %v539 = vsel %vm255, %v530, 0
  %v542 = vsel %vm255, %v532, 0
  %v545 = vsel %vm255, %v534, 0
  %547 = vmatpush.bf16.xpose.msra.mxu0 0
  %548 = vmatpush.bf16.xpose.msra.mxu0 0
  %549 = vmatpush.bf16.xpose.msra.mxu0 0
  %550 = vmatpush.bf16.xpose.msra.mxu0 0
  %551 = vmatpush.bf16.xpose.msra.mxu0 0
  %552 = vmatpush.bf16.xpose.msra.mxu0 0
  %553 = vmatpush.bf16.xpose.msra.mxu0 %v545
  %554 = vmatpush.bf16.xpose.msra.mxu0 %v542
  %555 = vmatmul.bf16.gmra.mxu0 %v536
  %v556 = vpop.f32.mrf.mxu0
  %v557 = vadd.f32 0.0, %v556
  %v558 = vpop.f32.mrf.mxu0
  %v559 = vadd.f32 0.0, %v558
  %560 = vmatmul.bf16.gmra.mxu0 %v539
  %v561 = vpop.f32.mrf.mxu0
  %v562 = vadd.f32 0.0, %v561
  %v563 = vpop.f32.mrf.mxu0
  %v564 = vadd.f32 0.0, %v563
  %565 = vdwg.mxu0
  %v566 = vmul.f32 %v557, 0.35355338
  %v567 = vmul.f32 %v559, 0.35355338
  %v568 = vmul.f32 %v562, 0.35355338
  %v569 = vmul.f32 %v564, 0.35355338
  %v570 = vadd.f32 %v566, %v285
  %v571 = vadd.f32 %v567, %v286
  %v572 = vadd.f32 %v568, %v287
  %v573 = vadd.f32 %v569, %v288
  %v574 = vsel %vm119, %v570, -inf
  %575 = vmax.xlane.f32.xlu0 %v574
  %v576 = vpop.xlane.xlu0 %575
  %v577 = vsel %vm119, %v571, -inf
  %578 = vmax.xlane.f32.xlu0 %v577
  %v579 = vpop.xlane.xlu0 %578
  %v580 = vsel %vm119, %v572, -inf
  %581 = vmax.xlane.f32.xlu0 %v580
  %v582 = vpop.xlane.xlu0 %581
  %v583 = vsel %vm119, %v573, -inf
  %584 = vmax.xlane.f32.xlu0 %v583
  %v585 = vpop.xlane.xlu0 %584
  %v586 = vsub.f32 %v570, %v576
  %v587 = vsub.f32 %v571, %v579
  %v588 = vsub.f32 %v572, %v582
  %v589 = vsub.f32 %v573, %v585
  %v590 = vmul.f32 %v586, 1.442695
  %v591 = vpow.pop %v590
  %v592 = vmul.f32 %v587, 1.442695
  %v593 = vpow.pop %v592
  %v594 = vmul.f32 %v588, 1.442695
  %v595 = vpow.pop %v594
  %v596 = vmul.f32 %v589, 1.442695
  %v597 = vpow.pop %v596
  %v598 = vsel %vm119, %v591, 0.0
  %599 = vadd.xlane.f32.xlu0 %v598
  %v600 = vpop.xlane.xlu0 %599
  %v601 = vsel %vm119, %v593, 0.0
  %602 = vadd.xlane.f32.xlu0 %v601
  %v603 = vpop.xlane.xlu0 %602
  %v604 = vsel %vm119, %v595, 0.0
  %605 = vadd.xlane.f32.xlu0 %v604
  %v606 = vpop.xlane.xlu0 %605
  %v607 = vsel %vm119, %v597, 0.0
  %608 = vadd.xlane.f32.xlu0 %v607
  %v609 = vpop.xlane.xlu0 %608
  %v610 = vrcp.pop %v600
  %v611 = vmul.f32 %v600, %v610
  %v612 = vsub.f32 1.0, %v611
  %v613 = vmul.f32 %v610, %v612
  %v614 = vadd.f32 %v610, %v613
  %vm615 = vweird.f32 %v600
  %vm616 = vweird.f32 %v610
  %vm617 = vmor %vm615, %vm616
  %v618 = vsel %vm617, %v610, %v614
  %v619 = vand.u32 2147483647, %v600
  %vm620 = vcmp.eq.f32.partialorder %v619, 8.507059e+37
  %v621 = vand.u32 %v600, 2147483648
  %v622 = vor.u32 1.1754944e-38, %v621
  %v623 = vsel %vm620, %v622, %v618
  %v624 = vrcp.pop %v603
  %v625 = vmul.f32 %v603, %v624
  %v626 = vsub.f32 1.0, %v625
  %v627 = vmul.f32 %v624, %v626
  %v628 = vadd.f32 %v624, %v627
  %vm629 = vweird.f32 %v603
  %vm630 = vweird.f32 %v624
  %vm631 = vmor %vm629, %vm630
  %v632 = vsel %vm631, %v624, %v628
  %v633 = vand.u32 2147483647, %v603
  %vm634 = vcmp.eq.f32.partialorder %v633, 8.507059e+37
  %v635 = vand.u32 %v603, 2147483648
  %v636 = vor.u32 1.1754944e-38, %v635
  %v637 = vsel %vm634, %v636, %v632
  %v638 = vrcp.pop %v606
  %v639 = vmul.f32 %v606, %v638
  %v640 = vsub.f32 1.0, %v639
  %v641 = vmul.f32 %v638, %v640
  %v642 = vadd.f32 %v638, %v641
  %vm643 = vweird.f32 %v606
  %vm644 = vweird.f32 %v638
  %vm645 = vmor %vm643, %vm644
  %v646 = vsel %vm645, %v638, %v642
  %v647 = vand.u32 2147483647, %v606
  %vm648 = vcmp.eq.f32.partialorder %v647, 8.507059e+37
  %v649 = vand.u32 %v606, 2147483648
  %v650 = vor.u32 1.1754944e-38, %v649
  %v651 = vsel %vm648, %v650, %v646
  %v652 = vrcp.pop %v609
  %v653 = vmul.f32 %v609, %v652
  %v654 = vsub.f32 1.0, %v653
  %v655 = vmul.f32 %v652, %v654
  %v656 = vadd.f32 %v652, %v655
  %vm657 = vweird.f32 %v609
  %vm658 = vweird.f32 %v652
  %vm659 = vmor %vm657, %vm658
  %v660 = vsel %vm659, %v652, %v656
  %v661 = vand.u32 2147483647, %v609
  %vm662 = vcmp.eq.f32.partialorder %v661, 8.507059e+37
  %v663 = vand.u32 %v609, 2147483648
  %v664 = vor.u32 1.1754944e-38, %v663
  %v665 = vsel %vm662, %v664, %v660
  %v666 = vmul.f32 %v591, %v623
  %v667 = vmul.f32 %v593, %v637
  %v668 = vmul.f32 %v595, %v651
  %v669 = vmul.f32 %v597, %v665
  %v670 = vpack.c.bf16 %v667, %v666
  %v671 = vpack.c.bf16 %v669, %v668
  %672 = vrot.lane.b32.xlu0 %v351, 56
  %v673 = vpop.permute.xlu0 %672
  %674 = vrot.lane.b32.xlu0 %v352, 56
  %v675 = vpop.permute.xlu0 %674
  %v679 = vsel %vm119, %v670, 0
  %v682 = vsel %vm119, %v671, 0
  %684 = vmatpush.bf16.msra.mxu0 0
  %685 = vmatpush.bf16.msra.mxu0 0
  %686 = vmatpush.bf16.msra.mxu0 0
  %687 = vmatpush.bf16.msra.mxu0 0
  %688 = vmatpush.bf16.msra.mxu0 0
  %689 = vmatpush.bf16.msra.mxu0 0
  %690 = vmatpush.bf16.msra.mxu0 %v675
  %691 = vmatpush.bf16.msra.mxu0 %v673
  %692 = vmatmul.bf16.gmra.mxu0 %v679
  %v693 = vpop.f32.mrf.mxu0
  %v694 = vadd.f32 0.0, %v693
  %v695 = vpop.f32.mrf.mxu0
  %v696 = vadd.f32 0.0, %v695
  %697 = vmatmul.bf16.gmra.mxu0 %v682
  %v698 = vpop.f32.mrf.mxu0
  %v699 = vadd.f32 0.0, %v698
  %v700 = vpop.f32.mrf.mxu0
  %v701 = vadd.f32 0.0, %v700
  %702 = vdwg.mxu0
  %v703 = vpack.c.bf16 %v696, %v694
  %v704 = vpack.c.bf16 %v701, %v699
  %v706 = vsel %vm255, %v703, 0
  %v709 = vsel %vm255, %v704, 0
  %v712 = vsel %vm94, %v340, 0
  %714 = vmatpush.bf16.msra.mxu0 0
  %715 = vmatpush.bf16.msra.mxu0 0
  %716 = vmatpush.bf16.msra.mxu0 0
  %717 = vmatpush.bf16.msra.mxu0 0
  %718 = vmatpush.bf16.msra.mxu0 0
  %719 = vmatpush.bf16.msra.mxu0 0
  %720 = vmatpush.bf16.msra.mxu0 0
  %721 = vmatpush.bf16.msra.mxu0 %v712
  %722 = vmatmul.bf16.gmra.mxu0 %v706
  %v723 = vpop.f32.mrf.mxu0
  %v724 = vadd.f32 0.0, %v723
  %v725 = vpop.f32.mrf.mxu0
  %v726 = vadd.f32 0.0, %v725
  %727 = vmatmul.bf16.gmra.mxu0 %v709
  %v728 = vpop.f32.mrf.mxu0
  %v729 = vadd.f32 0.0, %v728
  %v730 = vpop.f32.mrf.mxu0
  %v731 = vadd.f32 0.0, %v730
  %732 = vdwg.mxu0
  %v734 = vsel %vm255, %v525, 0
  %v737 = vsel %vm255, %v526, 0
  %v740 = vsel %vm94, %v339, 0
  %742 = vmatpush.bf16.msra.mxu0 0
  %743 = vmatpush.bf16.msra.mxu0 0
  %744 = vmatpush.bf16.msra.mxu0 0
  %745 = vmatpush.bf16.msra.mxu0 0
  %746 = vmatpush.bf16.msra.mxu0 0
  %747 = vmatpush.bf16.msra.mxu0 0
  %748 = vmatpush.bf16.msra.mxu0 0
  %749 = vmatpush.bf16.msra.mxu0 %v740
  %750 = vmatmul.bf16.gmra.mxu0 %v734
  %v751 = vpop.f32.mrf.mxu0
  %v752 = vadd.f32 %v724, %v751
  %v753 = vpop.f32.mrf.mxu0
  %v754 = vadd.f32 %v726, %v753
  %755 = vmatmul.bf16.gmra.mxu0 %v737
  %v756 = vpop.f32.mrf.mxu0
  %v757 = vadd.f32 %v729, %v756
  %v758 = vpop.f32.mrf.mxu0
  %v759 = vadd.f32 %v731, %v758
  %760 = vdwg.mxu0
  %761 = vrot.lane.b32.xlu0 %v351, 112
  %v762 = vpop.permute.xlu0 %761
  %763 = vrot.lane.b32.xlu0 %v352, 112
  %v764 = vpop.permute.xlu0 %763
  %765 = vrot.lane.b32.xlu0 %v351, 80
  %v766 = vpop.permute.xlu0 %765
  %767 = vrot.lane.b32.xlu0 %v352, 80
  %v768 = vpop.permute.xlu0 %767
  %v770 = vsel %vm255, %v762, 0
  %v773 = vsel %vm255, %v764, 0
  %v776 = vsel %vm255, %v766, 0
  %v779 = vsel %vm255, %v768, 0
  %781 = vmatpush.bf16.xpose.msra.mxu0 0
  %782 = vmatpush.bf16.xpose.msra.mxu0 0
  %783 = vmatpush.bf16.xpose.msra.mxu0 0
  %784 = vmatpush.bf16.xpose.msra.mxu0 0
  %785 = vmatpush.bf16.xpose.msra.mxu0 0
  %786 = vmatpush.bf16.xpose.msra.mxu0 0
  %787 = vmatpush.bf16.xpose.msra.mxu0 %v779
  %788 = vmatpush.bf16.xpose.msra.mxu0 %v776
  %789 = vmatmul.bf16.gmra.mxu0 %v770
  %v790 = vpop.f32.mrf.mxu0
  %v791 = vadd.f32 0.0, %v790
  %v792 = vpop.f32.mrf.mxu0
  %v793 = vadd.f32 0.0, %v792
  %794 = vmatmul.bf16.gmra.mxu0 %v773
  %v795 = vpop.f32.mrf.mxu0
  %v796 = vadd.f32 0.0, %v795
  %v797 = vpop.f32.mrf.mxu0
  %v798 = vadd.f32 0.0, %v797
  %799 = vdwg.mxu0
  %v800 = vmul.f32 %v791, 0.35355338
  %v801 = vmul.f32 %v793, 0.35355338
  %v802 = vmul.f32 %v796, 0.35355338
  %v803 = vmul.f32 %v798, 0.35355338
  %v804 = vadd.f32 %v800, %v285
  %v805 = vadd.f32 %v801, %v286
  %v806 = vadd.f32 %v802, %v287
  %v807 = vadd.f32 %v803, %v288
  %v808 = vsel %vm119, %v804, -inf
  %809 = vmax.xlane.f32.xlu0 %v808
  %v810 = vpop.xlane.xlu0 %809
  %v811 = vsel %vm119, %v805, -inf
  %812 = vmax.xlane.f32.xlu0 %v811
  %v813 = vpop.xlane.xlu0 %812
  %v814 = vsel %vm119, %v806, -inf
  %815 = vmax.xlane.f32.xlu0 %v814
  %v816 = vpop.xlane.xlu0 %815
  %v817 = vsel %vm119, %v807, -inf
  %818 = vmax.xlane.f32.xlu0 %v817
  %v819 = vpop.xlane.xlu0 %818
  %v820 = vsub.f32 %v804, %v810
  %v821 = vsub.f32 %v805, %v813
  %v822 = vsub.f32 %v806, %v816
  %v823 = vsub.f32 %v807, %v819
  %v824 = vmul.f32 %v820, 1.442695
  %v825 = vpow.pop %v824
  %v826 = vmul.f32 %v821, 1.442695
  %v827 = vpow.pop %v826
  %v828 = vmul.f32 %v822, 1.442695
  %v829 = vpow.pop %v828
  %v830 = vmul.f32 %v823, 1.442695
  %v831 = vpow.pop %v830
  %v832 = vsel %vm119, %v825, 0.0
  %833 = vadd.xlane.f32.xlu0 %v832
  %v834 = vpop.xlane.xlu0 %833
  %v835 = vsel %vm119, %v827, 0.0
  %836 = vadd.xlane.f32.xlu0 %v835
  %v837 = vpop.xlane.xlu0 %836
  %v838 = vsel %vm119, %v829, 0.0
  %839 = vadd.xlane.f32.xlu0 %v838
  %v840 = vpop.xlane.xlu0 %839
  %v841 = vsel %vm119, %v831, 0.0
  %842 = vadd.xlane.f32.xlu0 %v841
  %v843 = vpop.xlane.xlu0 %842
  %v844 = vrcp.pop %v834
  %v845 = vmul.f32 %v834, %v844
  %v846 = vsub.f32 1.0, %v845
  %v847 = vmul.f32 %v844, %v846
  %v848 = vadd.f32 %v844, %v847
  %vm849 = vweird.f32 %v834
  %vm850 = vweird.f32 %v844
  %vm851 = vmor %vm849, %vm850
  %v852 = vsel %vm851, %v844, %v848
  %v853 = vand.u32 2147483647, %v834
  %vm854 = vcmp.eq.f32.partialorder %v853, 8.507059e+37
  %v855 = vand.u32 %v834, 2147483648
  %v856 = vor.u32 1.1754944e-38, %v855
  %v857 = vsel %vm854, %v856, %v852
  %v858 = vrcp.pop %v837
  %v859 = vmul.f32 %v837, %v858
  %v860 = vsub.f32 1.0, %v859
  %v861 = vmul.f32 %v858, %v860
  %v862 = vadd.f32 %v858, %v861
  %vm863 = vweird.f32 %v837
  %vm864 = vweird.f32 %v858
  %vm865 = vmor %vm863, %vm864
  %v866 = vsel %vm865, %v858, %v862
  %v867 = vand.u32 2147483647, %v837
  %vm868 = vcmp.eq.f32.partialorder %v867, 8.507059e+37
  %v869 = vand.u32 %v837, 2147483648
  %v870 = vor.u32 1.1754944e-38, %v869
  %v871 = vsel %vm868, %v870, %v866
  %v872 = vrcp.pop %v840
  %v873 = vmul.f32 %v840, %v872
  %v874 = vsub.f32 1.0, %v873
  %v875 = vmul.f32 %v872, %v874
  %v876 = vadd.f32 %v872, %v875
  %vm877 = vweird.f32 %v840
  %vm878 = vweird.f32 %v872
  %vm879 = vmor %vm877, %vm878
  %v880 = vsel %vm879, %v872, %v876
  %v881 = vand.u32 2147483647, %v840
  %vm882 = vcmp.eq.f32.partialorder %v881, 8.507059e+37
  %v883 = vand.u32 %v840, 2147483648
  %v884 = vor.u32 1.1754944e-38, %v883
  %v885 = vsel %vm882, %v884, %v880
  %v886 = vrcp.pop %v843
  %v887 = vmul.f32 %v843, %v886
  %v888 = vsub.f32 1.0, %v887
  %v889 = vmul.f32 %v886, %v888
  %v890 = vadd.f32 %v886, %v889
  %vm891 = vweird.f32 %v843
  %vm892 = vweird.f32 %v886
  %vm893 = vmor %vm891, %vm892
  %v894 = vsel %vm893, %v886, %v890
  %v895 = vand.u32 2147483647, %v843
  %vm896 = vcmp.eq.f32.partialorder %v895, 8.507059e+37
  %v897 = vand.u32 %v843, 2147483648
  %v898 = vor.u32 1.1754944e-38, %v897
  %v899 = vsel %vm896, %v898, %v894
  %v900 = vmul.f32 %v825, %v857
  %v901 = vmul.f32 %v827, %v871
  %v902 = vmul.f32 %v829, %v885
  %v903 = vmul.f32 %v831, %v899
  %v904 = vpack.c.bf16 %v901, %v900
  %v905 = vpack.c.bf16 %v903, %v902
  %906 = vrot.lane.b32.xlu0 %v351, 48
  %v907 = vpop.permute.xlu0 %906
  %908 = vrot.lane.b32.xlu0 %v352, 48
  %v909 = vpop.permute.xlu0 %908
  %v913 = vsel %vm119, %v904, 0
  %v916 = vsel %vm119, %v905, 0
  %918 = vmatpush.bf16.msra.mxu0 0
  %919 = vmatpush.bf16.msra.mxu0 0
  %920 = vmatpush.bf16.msra.mxu0 0
  %921 = vmatpush.bf16.msra.mxu0 0
  %922 = vmatpush.bf16.msra.mxu0 0
  %923 = vmatpush.bf16.msra.mxu0 0
  %924 = vmatpush.bf16.msra.mxu0 %v909
  %925 = vmatpush.bf16.msra.mxu0 %v907
  %926 = vmatmul.bf16.gmra.mxu0 %v913
  %v927 = vpop.f32.mrf.mxu0
  %v928 = vadd.f32 0.0, %v927
  %v929 = vpop.f32.mrf.mxu0
  %v930 = vadd.f32 0.0, %v929
  %931 = vmatmul.bf16.gmra.mxu0 %v916
  %v932 = vpop.f32.mrf.mxu0
  %v933 = vadd.f32 0.0, %v932
  %v934 = vpop.f32.mrf.mxu0
  %v935 = vadd.f32 0.0, %v934
  %936 = vdwg.mxu0
  %v937 = vpack.c.bf16 %v930, %v928
  %v938 = vpack.c.bf16 %v935, %v933
  %v940 = vsel %vm255, %v937, 0
  %v943 = vsel %vm255, %v938, 0
  %v946 = vsel %vm94, %v341, 0
  %948 = vmatpush.bf16.msra.mxu0 0
  %949 = vmatpush.bf16.msra.mxu0 0
  %950 = vmatpush.bf16.msra.mxu0 0
  %951 = vmatpush.bf16.msra.mxu0 0
  %952 = vmatpush.bf16.msra.mxu0 0
  %953 = vmatpush.bf16.msra.mxu0 0
  %954 = vmatpush.bf16.msra.mxu0 0
  %955 = vmatpush.bf16.msra.mxu0 %v946
  %956 = vmatmul.bf16.gmra.mxu0 %v940
  %v957 = vpop.f32.mrf.mxu0
  %v958 = vadd.f32 0.0, %v957
  %v959 = vpop.f32.mrf.mxu0
  %v960 = vadd.f32 0.0, %v959
  %961 = vmatmul.bf16.gmra.mxu0 %v943
  %v962 = vpop.f32.mrf.mxu0
  %v963 = vadd.f32 0.0, %v962
  %v964 = vpop.f32.mrf.mxu0
  %v965 = vadd.f32 0.0, %v964
  %966 = vdwg.mxu0
  %v967 = vadd.f32 %v752, %v958
  %v968 = vadd.f32 %v754, %v960
  %v969 = vadd.f32 %v757, %v963
  %v970 = vadd.f32 %v759, %v965
  %971 = vrot.lane.b32.xlu0 %v351, 104
  %v972 = vpop.permute.xlu0 %971
  %973 = vrot.lane.b32.xlu0 %v352, 104
  %v974 = vpop.permute.xlu0 %973
  %975 = vrot.lane.b32.xlu0 %v351, 72
  %v976 = vpop.permute.xlu0 %975
  %977 = vrot.lane.b32.xlu0 %v352, 72
  %v978 = vpop.permute.xlu0 %977
  %v980 = vsel %vm255, %v972, 0
  %v983 = vsel %vm255, %v974, 0
  %v986 = vsel %vm255, %v976, 0
  %v989 = vsel %vm255, %v978, 0
  %991 = vmatpush.bf16.xpose.msra.mxu0 0
  %992 = vmatpush.bf16.xpose.msra.mxu0 0
  %993 = vmatpush.bf16.xpose.msra.mxu0 0
  %994 = vmatpush.bf16.xpose.msra.mxu0 0
  %995 = vmatpush.bf16.xpose.msra.mxu0 0
  %996 = vmatpush.bf16.xpose.msra.mxu0 0
  %997 = vmatpush.bf16.xpose.msra.mxu0 %v989
  %998 = vmatpush.bf16.xpose.msra.mxu0 %v986
  %999 = vmatmul.bf16.gmra.mxu0 %v980
  %v1000 = vpop.f32.mrf.mxu0
  %v1001 = vadd.f32 0.0, %v1000
  %v1002 = vpop.f32.mrf.mxu0
  %v1003 = vadd.f32 0.0, %v1002
  %1004 = vmatmul.bf16.gmra.mxu0 %v983
  %v1005 = vpop.f32.mrf.mxu0
  %v1006 = vadd.f32 0.0, %v1005
  %v1007 = vpop.f32.mrf.mxu0
  %v1008 = vadd.f32 0.0, %v1007
  %1009 = vdwg.mxu0
  %v1010 = vmul.f32 %v1001, 0.35355338
  %v1011 = vmul.f32 %v1003, 0.35355338
  %v1012 = vmul.f32 %v1006, 0.35355338
  %v1013 = vmul.f32 %v1008, 0.35355338
  %v1014 = vadd.f32 %v1010, %v285
  %v1015 = vadd.f32 %v1011, %v286
  %v1016 = vadd.f32 %v1012, %v287
  %v1017 = vadd.f32 %v1013, %v288
  %v1018 = vsel %vm119, %v1014, -inf
  %1019 = vmax.xlane.f32.xlu0 %v1018
  %v1020 = vpop.xlane.xlu0 %1019
  %v1021 = vsel %vm119, %v1015, -inf
  %1022 = vmax.xlane.f32.xlu0 %v1021
  %v1023 = vpop.xlane.xlu0 %1022
  %v1024 = vsel %vm119, %v1016, -inf
  %1025 = vmax.xlane.f32.xlu0 %v1024
  %v1026 = vpop.xlane.xlu0 %1025
  %v1027 = vsel %vm119, %v1017, -inf
  %1028 = vmax.xlane.f32.xlu0 %v1027
  %v1029 = vpop.xlane.xlu0 %1028
  %v1030 = vsub.f32 %v1014, %v1020
  %v1031 = vsub.f32 %v1015, %v1023
  %v1032 = vsub.f32 %v1016, %v1026
  %v1033 = vsub.f32 %v1017, %v1029
  %v1034 = vmul.f32 %v1030, 1.442695
  %v1035 = vpow.pop %v1034
  %v1036 = vmul.f32 %v1031, 1.442695
  %v1037 = vpow.pop %v1036
  %v1038 = vmul.f32 %v1032, 1.442695
  %v1039 = vpow.pop %v1038
  %v1040 = vmul.f32 %v1033, 1.442695
  %v1041 = vpow.pop %v1040
  %v1042 = vsel %vm119, %v1035, 0.0
  %1043 = vadd.xlane.f32.xlu0 %v1042
  %v1044 = vpop.xlane.xlu0 %1043
  %v1045 = vsel %vm119, %v1037, 0.0
  %1046 = vadd.xlane.f32.xlu0 %v1045
  %v1047 = vpop.xlane.xlu0 %1046
  %v1048 = vsel %vm119, %v1039, 0.0
  %1049 = vadd.xlane.f32.xlu0 %v1048
  %v1050 = vpop.xlane.xlu0 %1049
  %v1051 = vsel %vm119, %v1041, 0.0
  %1052 = vadd.xlane.f32.xlu0 %v1051
  %v1053 = vpop.xlane.xlu0 %1052
  %v1054 = vrcp.pop %v1044
  %v1055 = vmul.f32 %v1044, %v1054
  %v1056 = vsub.f32 1.0, %v1055
  %v1057 = vmul.f32 %v1054, %v1056
  %v1058 = vadd.f32 %v1054, %v1057
  %vm1059 = vweird.f32 %v1044
  %vm1060 = vweird.f32 %v1054
  %vm1061 = vmor %vm1059, %vm1060
  %v1062 = vsel %vm1061, %v1054, %v1058
  %v1063 = vand.u32 2147483647, %v1044
  %vm1064 = vcmp.eq.f32.partialorder %v1063, 8.507059e+37
  %v1065 = vand.u32 %v1044, 2147483648
  %v1066 = vor.u32 1.1754944e-38, %v1065
  %v1067 = vsel %vm1064, %v1066, %v1062
  %v1068 = vrcp.pop %v1047
  %v1069 = vmul.f32 %v1047, %v1068
  %v1070 = vsub.f32 1.0, %v1069
  %v1071 = vmul.f32 %v1068, %v1070
  %v1072 = vadd.f32 %v1068, %v1071
  %vm1073 = vweird.f32 %v1047
  %vm1074 = vweird.f32 %v1068
  %vm1075 = vmor %vm1073, %vm1074
  %v1076 = vsel %vm1075, %v1068, %v1072
  %v1077 = vand.u32 2147483647, %v1047
  %vm1078 = vcmp.eq.f32.partialorder %v1077, 8.507059e+37
  %v1079 = vand.u32 %v1047, 2147483648
  %v1080 = vor.u32 1.1754944e-38, %v1079
  %v1081 = vsel %vm1078, %v1080, %v1076
  %v1082 = vrcp.pop %v1050
  %v1083 = vmul.f32 %v1050, %v1082
  %v1084 = vsub.f32 1.0, %v1083
  %v1085 = vmul.f32 %v1082, %v1084
  %v1086 = vadd.f32 %v1082, %v1085
  %vm1087 = vweird.f32 %v1050
  %vm1088 = vweird.f32 %v1082
  %vm1089 = vmor %vm1087, %vm1088
  %v1090 = vsel %vm1089, %v1082, %v1086
  %v1091 = vand.u32 2147483647, %v1050
  %vm1092 = vcmp.eq.f32.partialorder %v1091, 8.507059e+37
  %v1093 = vand.u32 %v1050, 2147483648
  %v1094 = vor.u32 1.1754944e-38, %v1093
  %v1095 = vsel %vm1092, %v1094, %v1090
  %v1096 = vrcp.pop %v1053
  %v1097 = vmul.f32 %v1053, %v1096
  %v1098 = vsub.f32 1.0, %v1097
  %v1099 = vmul.f32 %v1096, %v1098
  %v1100 = vadd.f32 %v1096, %v1099
  %vm1101 = vweird.f32 %v1053
  %vm1102 = vweird.f32 %v1096
  %vm1103 = vmor %vm1101, %vm1102
  %v1104 = vsel %vm1103, %v1096, %v1100
  %v1105 = vand.u32 2147483647, %v1053
  %vm1106 = vcmp.eq.f32.partialorder %v1105, 8.507059e+37
  %v1107 = vand.u32 %v1053, 2147483648
  %v1108 = vor.u32 1.1754944e-38, %v1107
  %v1109 = vsel %vm1106, %v1108, %v1104
  %v1110 = vmul.f32 %v1035, %v1067
  %v1111 = vmul.f32 %v1037, %v1081
  %v1112 = vmul.f32 %v1039, %v1095
  %v1113 = vmul.f32 %v1041, %v1109
  %v1114 = vpack.c.bf16 %v1111, %v1110
  %v1115 = vpack.c.bf16 %v1113, %v1112
  %1116 = vrot.lane.b32.xlu0 %v351, 40
  %v1117 = vpop.permute.xlu0 %1116
  %1118 = vrot.lane.b32.xlu0 %v352, 40
  %v1119 = vpop.permute.xlu0 %1118
  %v1123 = vsel %vm119, %v1114, 0
  %v1126 = vsel %vm119, %v1115, 0
  %1128 = vmatpush.bf16.msra.mxu0 0
  %1129 = vmatpush.bf16.msra.mxu0 0
  %1130 = vmatpush.bf16.msra.mxu0 0
  %1131 = vmatpush.bf16.msra.mxu0 0
  %1132 = vmatpush.bf16.msra.mxu0 0
  %1133 = vmatpush.bf16.msra.mxu0 0
  %1134 = vmatpush.bf16.msra.mxu0 %v1119
  %1135 = vmatpush.bf16.msra.mxu0 %v1117
  %1136 = vmatmul.bf16.gmra.mxu0 %v1123
  %v1137 = vpop.f32.mrf.mxu0
  %v1138 = vadd.f32 0.0, %v1137
  %v1139 = vpop.f32.mrf.mxu0
  %v1140 = vadd.f32 0.0, %v1139
  %1141 = vmatmul.bf16.gmra.mxu0 %v1126
  %v1142 = vpop.f32.mrf.mxu0
  %v1143 = vadd.f32 0.0, %v1142
  %v1144 = vpop.f32.mrf.mxu0
  %v1145 = vadd.f32 0.0, %v1144
  %1146 = vdwg.mxu0
  %v1147 = vpack.c.bf16 %v1140, %v1138
  %v1148 = vpack.c.bf16 %v1145, %v1143
  %v1150 = vsel %vm255, %v1147, 0
  %v1153 = vsel %vm255, %v1148, 0
  %v1156 = vsel %vm94, %v342, 0
  %1158 = vmatpush.bf16.msra.mxu0 0
  %1159 = vmatpush.bf16.msra.mxu0 0
  %1160 = vmatpush.bf16.msra.mxu0 0
  %1161 = vmatpush.bf16.msra.mxu0 0
  %1162 = vmatpush.bf16.msra.mxu0 0
  %1163 = vmatpush.bf16.msra.mxu0 0
  %1164 = vmatpush.bf16.msra.mxu0 0
  %1165 = vmatpush.bf16.msra.mxu0 %v1156
  %1166 = vmatmul.bf16.gmra.mxu0 %v1150
  %v1167 = vpop.f32.mrf.mxu0
  %v1168 = vadd.f32 0.0, %v1167
  %v1169 = vpop.f32.mrf.mxu0
  %v1170 = vadd.f32 0.0, %v1169
  %1171 = vmatmul.bf16.gmra.mxu0 %v1153
  %v1172 = vpop.f32.mrf.mxu0
  %v1173 = vadd.f32 0.0, %v1172
  %v1174 = vpop.f32.mrf.mxu0
  %v1175 = vadd.f32 0.0, %v1174
  %1176 = vdwg.mxu0
  %v1177 = vadd.f32 %v967, %v1168
  %v1178 = vadd.f32 %v968, %v1170
  %v1179 = vadd.f32 %v969, %v1173
  %v1180 = vadd.f32 %v970, %v1175
  %v1181 = vadd.f32 %v221, %v1177
  %v1182 = vadd.f32 %v222, %v1178
  %v1183 = vadd.f32 %v223, %v1179
  %v1184 = vadd.f32 %v224, %v1180
  %v1185 = vperm.slane %v290, 0
  %v1186 = vadd.f32 %v1181, %v1185
  %v1187 = vadd.f32 %v1182, %v1185
  %v1188 = vadd.f32 %v1183, %v1185
  %v1189 = vadd.f32 %v1184, %v1185
  %v1190 = vsel %vm119, %v1186, 0.0
  %1191 = vadd.xlane.f32.xlu0 %v1190
  %v1192 = vpop.xlane.xlu0 %1191
  %v1193 = vsel %vm119, %v1187, 0.0
  %1194 = vadd.xlane.f32.xlu0 %v1193
  %v1195 = vpop.xlane.xlu0 %1194
  %v1196 = vsel %vm119, %v1188, 0.0
  %1197 = vadd.xlane.f32.xlu0 %v1196
  %v1198 = vpop.xlane.xlu0 %1197
  %v1199 = vsel %vm119, %v1189, 0.0
  %1200 = vadd.xlane.f32.xlu0 %v1199
  %v1201 = vpop.xlane.xlu0 %1200
  %v1202 = vmul.f32 %v1192, %v138
  %v1203 = vmul.f32 %v1195, %v138
  %v1204 = vmul.f32 %v1198, %v138
  %v1205 = vmul.f32 %v1201, %v138
  %v1206 = vsub.f32 %v1186, %v1202
  %v1207 = vsub.f32 %v1187, %v1203
  %v1208 = vsub.f32 %v1188, %v1204
  %v1209 = vsub.f32 %v1189, %v1205
  %v1210 = vmul.f32 %v1206, %v1206
  %v1211 = vmul.f32 %v1207, %v1207
  %v1212 = vmul.f32 %v1208, %v1208
  %v1213 = vmul.f32 %v1209, %v1209
  %v1214 = vsel %vm119, %v1210, 0.0
  %1215 = vadd.xlane.f32.xlu0 %v1214
  %v1216 = vpop.xlane.xlu0 %1215
  %v1217 = vsel %vm119, %v1211, 0.0
  %1218 = vadd.xlane.f32.xlu0 %v1217
  %v1219 = vpop.xlane.xlu0 %1218
  %v1220 = vsel %vm119, %v1212, 0.0
  %1221 = vadd.xlane.f32.xlu0 %v1220
  %v1222 = vpop.xlane.xlu0 %1221
  %v1223 = vsel %vm119, %v1213, 0.0
  %1224 = vadd.xlane.f32.xlu0 %v1223
  %v1225 = vpop.xlane.xlu0 %1224
  %v1226 = vmul.f32 %v1216, %v138
  %v1227 = vmul.f32 %v1219, %v138
  %v1228 = vmul.f32 %v1222, %v138
  %v1229 = vmul.f32 %v1225, %v138
  %v1230 = vadd.f32 %v1226, 1e-05
  %v1231 = vadd.f32 %v1227, 1e-05
  %v1232 = vadd.f32 %v1228, 1e-05
  %v1233 = vadd.f32 %v1229, 1e-05
  %v1234 = vrsqrt.pop %v1230
  %v1235 = vmul.f32 %v1234, %v1230
  %v1236 = vmul.f32 %v1235, %v1234
  %v1237 = vmul.f32 0.5, %v1236
  %v1238 = vsub.f32 1.5, %v1237
  %v1239 = vmul.f32 %v1234, %v1238
  %vm1240 = vweird.f32 %v1230
  %vm1241 = vweird.f32 %v1234
  %vm1242 = vmor %vm1240, %vm1241
  %v1243 = vsel %vm1242, %v1234, %v1239
  %v1244 = vrsqrt.pop %v1231
  %v1245 = vmul.f32 %v1244, %v1231
  %v1246 = vmul.f32 %v1245, %v1244
  %v1247 = vmul.f32 0.5, %v1246
  %v1248 = vsub.f32 1.5, %v1247
  %v1249 = vmul.f32 %v1244, %v1248
  %vm1250 = vweird.f32 %v1231
  %vm1251 = vweird.f32 %v1244
  %vm1252 = vmor %vm1250, %vm1251
  %v1253 = vsel %vm1252, %v1244, %v1249
  %v1254 = vrsqrt.pop %v1232
  %v1255 = vmul.f32 %v1254, %v1232
  %v1256 = vmul.f32 %v1255, %v1254
  %v1257 = vmul.f32 0.5, %v1256
  %v1258 = vsub.f32 1.5, %v1257
  %v1259 = vmul.f32 %v1254, %v1258
  %vm1260 = vweird.f32 %v1232
  %vm1261 = vweird.f32 %v1254
  %vm1262 = vmor %vm1260, %vm1261
  %v1263 = vsel %vm1262, %v1254, %v1259
  %v1264 = vrsqrt.pop %v1233
  %v1265 = vmul.f32 %v1264, %v1233
  %v1266 = vmul.f32 %v1265, %v1264
  %v1267 = vmul.f32 0.5, %v1266
  %v1268 = vsub.f32 1.5, %v1267
  %v1269 = vmul.f32 %v1264, %v1268
  %vm1270 = vweird.f32 %v1233
  %vm1271 = vweird.f32 %v1264
  %vm1272 = vmor %vm1270, %vm1271
  %v1273 = vsel %vm1272, %v1264, %v1269
  %v1274 = vmul.f32 %v1206, %v1243
  %v1275 = vmul.f32 %v1207, %v1253
  %v1276 = vmul.f32 %v1208, %v1263
  %v1277 = vmul.f32 %v1209, %v1273
  %v1278 = vperm.slane %v291, 0
  %v1279 = vmul.f32 %v1274, %v1278
  %v1280 = vmul.f32 %v1275, %v1278
  %v1281 = vmul.f32 %v1276, %v1278
  %v1282 = vmul.f32 %v1277, %v1278
  %v1283 = vperm.slane %v292, 0
  %v1284 = vadd.f32 %v1279, %v1283
  %v1285 = vadd.f32 %v1280, %v1283
  %v1286 = vadd.f32 %v1281, %v1283
  %v1287 = vadd.f32 %v1282, %v1283
  %v1288 = vld [vmem:[%s3 + $0x60] sm:$0xff]
  %v1289 = vld [vmem:[%s3 + $0x68] sm:$0xff]
  %v1290 = vld [vmem:[%s3 + $0x70] sm:$0xff]
  %v1291 = vld [vmem:[%s3 + $0x78] sm:$0xff]
  %v1292 = vpack.c.bf16 %v1285, %v1284
  %v1293 = vpack.c.bf16 %v1287, %v1286
  %v1294 = vpack.c.bf16 %v1289, %v1288
  %v1295 = vpack.c.bf16 %v1291, %v1290
  %v1296 = vperm.slane %v293, 0
  %v1298 = vsel %vm119, %v1292, 0
  %v1301 = vsel %vm119, %v1293, 0
  %1303 = vmatpush.bf16.msra.mxu0 0
  %1304 = vmatpush.bf16.msra.mxu0 0
  %1305 = vmatpush.bf16.msra.mxu0 0
  %1306 = vmatpush.bf16.msra.mxu0 0
  %1307 = vmatpush.bf16.msra.mxu0 0
  %1308 = vmatpush.bf16.msra.mxu0 0
  %1309 = vmatpush.bf16.msra.mxu0 %v1295
  %1310 = vmatpush.bf16.msra.mxu0 %v1294
  %1311 = vmatmul.bf16.gmra.mxu0 %v1298
  %v1312 = vpop.f32.mrf.mxu0
  %v1313 = vadd.f32 %v1296, %v1312
  %v1314 = vpop.f32.mrf.mxu0
  %v1315 = vadd.f32 %v1296, %v1314
  %1316 = vmatmul.bf16.gmra.mxu0 %v1301
  %v1317 = vpop.f32.mrf.mxu0
  %v1318 = vadd.f32 %v1296, %v1317
  %v1319 = vpop.f32.mrf.mxu0
  %v1320 = vadd.f32 %v1296, %v1319
  %1321 = vdwg.mxu0
  %v1322 = vmax.f32 %v1313, 0.0
  %v1323 = vmax.f32 %v1315, 0.0
  %v1324 = vmax.f32 %v1318, 0.0
  %v1325 = vmax.f32 %v1320, 0.0
  %v1326 = vld [vmem:[%s4] sm:$0xff]
  %v1327 = vld [vmem:[%s4 + $0x8] sm:$0xff]
  %v1328 = vld [vmem:[%s4 + $0x10] sm:$0xff]
  %v1329 = vld [vmem:[%s4 + $0x18] sm:$0xff]
  %v1330 = vld [vmem:[%s4 + $0x20] sm:$0xff]
  %v1331 = vld [vmem:[%s4 + $0x28] sm:$0xff]
  %v1332 = vld [vmem:[%s4 + $0x30] sm:$0xff]
  %v1333 = vld [vmem:[%s4 + $0x38] sm:$0xff]
  %v1334 = vld [vmem:[%s4 + $0x40] sm:$0xff]
  %v1335 = vld [vmem:[%s4 + $0x48] sm:$0xff]
  %v1336 = vld [vmem:[%s4 + $0x50] sm:$0xff]
  %v1337 = vld [vmem:[%s4 + $0x58] sm:$0xff]
  %v1338 = vld [vmem:[%s4 + $0x60] sm:$0xff]
  %v1339 = vld [vmem:[%s4 + $0x68] sm:$0xff]
  %v1340 = vld [vmem:[%s4 + $0x70] sm:$0xff]
  %v1341 = vld [vmem:[%s4 + $0x78] sm:$0xff]
  %v1342 = vpack.c.bf16 %v1323, %v1322
  %v1343 = vpack.c.bf16 %v1325, %v1324
  %v1344 = vpack.c.bf16 %v1327, %v1326
  %v1345 = vpack.c.bf16 %v1329, %v1328
  %v1346 = vpack.c.bf16 %v1331, %v1330
  %v1347 = vpack.c.bf16 %v1333, %v1332
  %v1348 = vpack.c.bf16 %v1335, %v1334
  %v1349 = vpack.c.bf16 %v1337, %v1336
  %v1350 = vpack.c.bf16 %v1339, %v1338
  %v1351 = vpack.c.bf16 %v1341, %v1340
  %v1352 = vperm.slane %v294, 0
  %1353 = vmatpush.bf16.msra.mxu0 %v1351
  %1354 = vmatpush.bf16.msra.mxu0 %v1350
  %1355 = vmatpush.bf16.msra.mxu0 %v1349
  %1356 = vmatpush.bf16.msra.mxu0 %v1348
  %1357 = vmatpush.bf16.msra.mxu0 %v1347
  %1358 = vmatpush.bf16.msra.mxu0 %v1346
  %1359 = vmatpush.bf16.msra.mxu0 %v1345
  %1360 = vmatpush.bf16.msra.mxu0 %v1344
  %1361 = vmatmul.bf16.gmra.mxu0 %v1342
  %v1362 = vpop.f32.mrf.mxu0
  %v1363 = vadd.f32 %v1352, %v1362
  %v1364 = vpop.f32.mrf.mxu0
  %v1365 = vadd.f32 %v1352, %v1364
  %1366 = vmatmul.bf16.gmra.mxu0 %v1343
  %v1367 = vpop.f32.mrf.mxu0
  %v1368 = vadd.f32 %v1352, %v1367
  %v1369 = vpop.f32.mrf.mxu0
  %v1370 = vadd.f32 %v1352, %v1369
  %1371 = vdwg.mxu0
  %v1372 = vadd.f32 %v1284, %v1363
  %v1373 = vadd.f32 %v1285, %v1365
  %v1374 = vadd.f32 %v1286, %v1368
  %v1375 = vadd.f32 %v1287, %v1370
  %v1376 = vsel %vm119, %v1372, 0.0
  %1377 = vadd.xlane.f32.xlu0 %v1376
  %v1378 = vpop.xlane.xlu0 %1377
  %v1379 = vsel %vm119, %v1373, 0.0
  %1380 = vadd.xlane.f32.xlu0 %v1379
  %v1381 = vpop.xlane.xlu0 %1380
  %v1382 = vsel %vm119, %v1374, 0.0
  %1383 = vadd.xlane.f32.xlu0 %v1382
  %v1384 = vpop.xlane.xlu0 %1383
  %v1385 = vsel %vm119, %v1375, 0.0
  %1386 = vadd.xlane.f32.xlu0 %v1385
  %v1387 = vpop.xlane.xlu0 %1386
  %v1388 = vmul.f32 %v1378, %v138
  %v1389 = vmul.f32 %v1381, %v138
  %v1390 = vmul.f32 %v1384, %v138
  %v1391 = vmul.f32 %v1387, %v138
  %v1392 = vsub.f32 %v1372, %v1388
  %v1393 = vsub.f32 %v1373, %v1389
  %v1394 = vsub.f32 %v1374, %v1390
  %v1395 = vsub.f32 %v1375, %v1391
  %v1396 = vmul.f32 %v1392, %v1392
  %v1397 = vmul.f32 %v1393, %v1393
  %v1398 = vmul.f32 %v1394, %v1394
  %v1399 = vmul.f32 %v1395, %v1395
  %v1400 = vsel %vm119, %v1396, 0.0
  %1401 = vadd.xlane.f32.xlu0 %v1400
  %v1402 = vpop.xlane.xlu0 %1401
  %v1403 = vsel %vm119, %v1397, 0.0
  %1404 = vadd.xlane.f32.xlu0 %v1403
  %v1405 = vpop.xlane.xlu0 %1404
  %v1406 = vsel %vm119, %v1398, 0.0
  %1407 = vadd.xlane.f32.xlu0 %v1406
  %v1408 = vpop.xlane.xlu0 %1407
  %v1409 = vsel %vm119, %v1399, 0.0
  %1410 = vadd.xlane.f32.xlu0 %v1409
  %v1411 = vpop.xlane.xlu0 %1410
  %v1412 = vmul.f32 %v1402, %v138
  %v1413 = vmul.f32 %v1405, %v138
  %v1414 = vmul.f32 %v1408, %v138
  %v1415 = vmul.f32 %v1411, %v138
  %v1416 = vadd.f32 %v1412, 1e-05
  %v1417 = vadd.f32 %v1413, 1e-05
  %v1418 = vadd.f32 %v1414, 1e-05
  %v1419 = vadd.f32 %v1415, 1e-05
  %v1420 = vrsqrt.pop %v1416
  %v1421 = vmul.f32 %v1420, %v1416
  %v1422 = vmul.f32 %v1421, %v1420
  %v1423 = vmul.f32 0.5, %v1422
  %v1424 = vsub.f32 1.5, %v1423
  %v1425 = vmul.f32 %v1420, %v1424
  %vm1426 = vweird.f32 %v1416
  %vm1427 = vweird.f32 %v1420
  %vm1428 = vmor %vm1426, %vm1427
  %v1429 = vsel %vm1428, %v1420, %v1425
  %v1430 = vrsqrt.pop %v1417
  %v1431 = vmul.f32 %v1430, %v1417
  %v1432 = vmul.f32 %v1431, %v1430
  %v1433 = vmul.f32 0.5, %v1432
  %v1434 = vsub.f32 1.5, %v1433
  %v1435 = vmul.f32 %v1430, %v1434
  %vm1436 = vweird.f32 %v1417
  %vm1437 = vweird.f32 %v1430
  %vm1438 = vmor %vm1436, %vm1437
  %v1439 = vsel %vm1438, %v1430, %v1435
  %v1440 = vrsqrt.pop %v1418
  %v1441 = vmul.f32 %v1440, %v1418
  %v1442 = vmul.f32 %v1441, %v1440
  %v1443 = vmul.f32 0.5, %v1442
  %v1444 = vsub.f32 1.5, %v1443
  %v1445 = vmul.f32 %v1440, %v1444
  %vm1446 = vweird.f32 %v1418
  %vm1447 = vweird.f32 %v1440
  %vm1448 = vmor %vm1446, %vm1447
  %v1449 = vsel %vm1448, %v1440, %v1445
  %v1450 = vrsqrt.pop %v1419
  %v1451 = vmul.f32 %v1450, %v1419
  %v1452 = vmul.f32 %v1451, %v1450
  %v1453 = vmul.f32 0.5, %v1452
  %v1454 = vsub.f32 1.5, %v1453
  %v1455 = vmul.f32 %v1450, %v1454
  %vm1456 = vweird.f32 %v1419
  %vm1457 = vweird.f32 %v1450
  %vm1458 = vmor %vm1456, %vm1457
  %v1459 = vsel %vm1458, %v1450, %v1455
  %v1460 = vmul.f32 %v1392, %v1429
  %v1461 = vmul.f32 %v1393, %v1439
  %v1462 = vmul.f32 %v1394, %v1449
  %v1463 = vmul.f32 %v1395, %v1459
  %v1464 = vperm.slane %v295, 0
  %v1465 = vmul.f32 %v1460, %v1464
  %v1466 = vmul.f32 %v1461, %v1464
  %v1467 = vmul.f32 %v1462, %v1464
  %v1468 = vmul.f32 %v1463, %v1464
  %v1469 = vperm.slane %v296, 0
  %v1470 = vadd.f32 %v1465, %v1469
  %v1471 = vadd.f32 %v1466, %v1469
  %v1472 = vadd.f32 %v1467, %v1469
  %v1473 = vadd.f32 %v1468, %v1469
  %v1474 = vld [vmem:[%s2 + $0xb] sm:$0x1]
  %v1475 = vld [vmem:[%s2 + $0xc] sm:$0x1]
  %v1476 = vld [vmem:[%s2 + $0xd] sm:$0x1]
  %v1477 = vld [vmem:[%s2 + $0xe] sm:$0x1]
  %v1478 = vld [vmem:[%s2 + $0xf] sm:$0x1]
  %v1479 = vld [vmem:[%s2 + $0x10] sm:$0x1]
  %v1480 = vld [vmem:[%s2 + $0x11] sm:$0x1]
  %v1481 = vld [vmem:[%s2 + $0x12] sm:$0x1]
  %v1482 = vld [vmem:[%s3 + $0x80] sm:$0xff]
  %v1483 = vld [vmem:[%s3 + $0x88] sm:$0xff]
  %v1484 = vld [vmem:[%s3 + $0x90] sm:$0xff]
  %v1485 = vld [vmem:[%s3 + $0x98] sm:$0xff]
  %v1486 = vpack.c.bf16 %v1471, %v1470
  %v1487 = vpack.c.bf16 %v1473, %v1472
  %v1488 = vpack.c.bf16 %v1483, %v1482
  %v1489 = vpack.c.bf16 %v1485, %v1484
  %v1490 = vperm.slane %v1474, 0
  %v1492 = vsel %vm119, %v1486, 0
  %v1495 = vsel %vm119, %v1487, 0
  %1497 = vmatpush.bf16.msra.mxu0 0
  %1498 = vmatpush.bf16.msra.mxu0 0
  %1499 = vmatpush.bf16.msra.mxu0 0
  %1500 = vmatpush.bf16.msra.mxu0 0
  %1501 = vmatpush.bf16.msra.mxu0 0
  %1502 = vmatpush.bf16.msra.mxu0 0
  %1503 = vmatpush.bf16.msra.mxu0 %v1489
  %1504 = vmatpush.bf16.msra.mxu0 %v1488
  %1505 = vmatmul.bf16.gmra.mxu0 %v1492
  %v1506 = vpop.f32.mrf.mxu0
  %v1507 = vadd.f32 %v1490, %v1506
  %v1508 = vpop.f32.mrf.mxu0
  %v1509 = vadd.f32 %v1490, %v1508
  %1510 = vmatmul.bf16.gmra.mxu0 %v1495
  %v1511 = vpop.f32.mrf.mxu0
  %v1512 = vadd.f32 %v1490, %v1511
  %v1513 = vpop.f32.mrf.mxu0
  %v1514 = vadd.f32 %v1490, %v1513
  %1515 = vdwg.mxu0
  %v1516 = vpack.c.bf16 %v1507, %v1507
  %v1517 = vpack.c.bf16 %v1509, %v1509
  %v1518 = vpack.c.bf16 %v1512, %v1512
  %v1519 = vpack.c.bf16 %v1514, %v1514
  %v1520 = vld [vmem:[%s3 + $0xa0] sm:$0xff]
  %v1521 = vld [vmem:[%s3 + $0xa8] sm:$0xff]
  %v1522 = vld [vmem:[%s3 + $0xb0] sm:$0xff]
  %v1523 = vld [vmem:[%s3 + $0xb8] sm:$0xff]
  %v1524 = vpack.c.bf16 %v1520, %v1520
  %v1525 = vpack.c.bf16 %v1521, %v1521
  %v1526 = vpack.c.bf16 %v1522, %v1522
  %v1527 = vpack.c.bf16 %v1523, %v1523
  %v1532 = vunpack.c.l.b16 %v1516
  %v1533 = vunpack.c.l.b16 %v1517
  %v1534 = vunpack.c.l.b16 %v1518
  %v1535 = vunpack.c.l.b16 %v1519
  %v1536 = vpack.c.b16 %v1533, %v1532
  %v1537 = vpack.c.b16 %v1535, %v1534
  %1538 = vrot.lane.b32.xlu0 %v1536, 96
  %v1539 = vpop.permute.xlu0 %1538
  %1540 = vrot.lane.b32.xlu0 %v1537, 96
  %v1541 = vpop.permute.xlu0 %1540
  %v1543 = vsel %vm255, %v1536, 0
  %v1546 = vsel %vm255, %v1537, 0
  %v1549 = vsel %vm255, %v1539, 0
  %v1552 = vsel %vm255, %v1541, 0
  %1554 = vmatpush.bf16.xpose.msra.mxu0 0
  %1555 = vmatpush.bf16.xpose.msra.mxu0 0
  %1556 = vmatpush.bf16.xpose.msra.mxu0 0
  %1557 = vmatpush.bf16.xpose.msra.mxu0 0
  %1558 = vmatpush.bf16.xpose.msra.mxu0 0
  %1559 = vmatpush.bf16.xpose.msra.mxu0 0
  %1560 = vmatpush.bf16.xpose.msra.mxu0 %v1552
  %1561 = vmatpush.bf16.xpose.msra.mxu0 %v1549
  %1562 = vmatmul.bf16.gmra.mxu0 %v1543
  %v1563 = vpop.f32.mrf.mxu0
  %v1564 = vadd.f32 0.0, %v1563
  %v1565 = vpop.f32.mrf.mxu0
  %v1566 = vadd.f32 0.0, %v1565
  %1567 = vmatmul.bf16.gmra.mxu0 %v1546
  %v1568 = vpop.f32.mrf.mxu0
  %v1569 = vadd.f32 0.0, %v1568
  %v1570 = vpop.f32.mrf.mxu0
  %v1571 = vadd.f32 0.0, %v1570
  %1572 = vdwg.mxu0
  %v1573 = vmul.f32 %v1564, 0.35355338
  %v1574 = vmul.f32 %v1566, 0.35355338
  %v1575 = vmul.f32 %v1569, 0.35355338
  %v1576 = vmul.f32 %v1571, 0.35355338
  %v1577 = vadd.f32 %v1573, %v285
  %v1578 = vadd.f32 %v1574, %v286
  %v1579 = vadd.f32 %v1575, %v287
  %v1580 = vadd.f32 %v1576, %v288
  %v1581 = vsel %vm119, %v1577, -inf
  %1582 = vmax.xlane.f32.xlu0 %v1581
  %v1583 = vpop.xlane.xlu0 %1582
  %v1584 = vsel %vm119, %v1578, -inf
  %1585 = vmax.xlane.f32.xlu0 %v1584
  %v1586 = vpop.xlane.xlu0 %1585
  %v1587 = vsel %vm119, %v1579, -inf
  %1588 = vmax.xlane.f32.xlu0 %v1587
  %v1589 = vpop.xlane.xlu0 %1588
  %v1590 = vsel %vm119, %v1580, -inf
  %1591 = vmax.xlane.f32.xlu0 %v1590
  %v1592 = vpop.xlane.xlu0 %1591
  %v1593 = vsub.f32 %v1577, %v1583
  %v1594 = vsub.f32 %v1578, %v1586
  %v1595 = vsub.f32 %v1579, %v1589
  %v1596 = vsub.f32 %v1580, %v1592
  %v1597 = vmul.f32 %v1593, 1.442695
  %v1598 = vpow.pop %v1597
  %v1599 = vmul.f32 %v1594, 1.442695
  %v1600 = vpow.pop %v1599
  %v1601 = vmul.f32 %v1595, 1.442695
  %v1602 = vpow.pop %v1601
  %v1603 = vmul.f32 %v1596, 1.442695
  %v1604 = vpow.pop %v1603
  %v1605 = vsel %vm119, %v1598, 0.0
  %1606 = vadd.xlane.f32.xlu0 %v1605
  %v1607 = vpop.xlane.xlu0 %1606
  %v1608 = vsel %vm119, %v1600, 0.0
  %1609 = vadd.xlane.f32.xlu0 %v1608
  %v1610 = vpop.xlane.xlu0 %1609
  %v1611 = vsel %vm119, %v1602, 0.0
  %1612 = vadd.xlane.f32.xlu0 %v1611
  %v1613 = vpop.xlane.xlu0 %1612
  %v1614 = vsel %vm119, %v1604, 0.0
  %1615 = vadd.xlane.f32.xlu0 %v1614
  %v1616 = vpop.xlane.xlu0 %1615
  %v1617 = vrcp.pop %v1607
  %v1618 = vmul.f32 %v1607, %v1617
  %v1619 = vsub.f32 1.0, %v1618
  %v1620 = vmul.f32 %v1617, %v1619
  %v1621 = vadd.f32 %v1617, %v1620
  %vm1622 = vweird.f32 %v1607
  %vm1623 = vweird.f32 %v1617
  %vm1624 = vmor %vm1622, %vm1623
  %v1625 = vsel %vm1624, %v1617, %v1621
  %v1626 = vand.u32 2147483647, %v1607
  %vm1627 = vcmp.eq.f32.partialorder %v1626, 8.507059e+37
  %v1628 = vand.u32 %v1607, 2147483648
  %v1629 = vor.u32 1.1754944e-38, %v1628
  %v1630 = vsel %vm1627, %v1629, %v1625
  %v1631 = vrcp.pop %v1610
  %v1632 = vmul.f32 %v1610, %v1631
  %v1633 = vsub.f32 1.0, %v1632
  %v1634 = vmul.f32 %v1631, %v1633
  %v1635 = vadd.f32 %v1631, %v1634
  %vm1636 = vweird.f32 %v1610
  %vm1637 = vweird.f32 %v1631
  %vm1638 = vmor %vm1636, %vm1637
  %v1639 = vsel %vm1638, %v1631, %v1635
  %v1640 = vand.u32 2147483647, %v1610
  %vm1641 = vcmp.eq.f32.partialorder %v1640, 8.507059e+37
  %v1642 = vand.u32 %v1610, 2147483648
  %v1643 = vor.u32 1.1754944e-38, %v1642
  %v1644 = vsel %vm1641, %v1643, %v1639
  %v1645 = vrcp.pop %v1613
  %v1646 = vmul.f32 %v1613, %v1645
  %v1647 = vsub.f32 1.0, %v1646
  %v1648 = vmul.f32 %v1645, %v1647
  %v1649 = vadd.f32 %v1645, %v1648
  %vm1650 = vweird.f32 %v1613
  %vm1651 = vweird.f32 %v1645
  %vm1652 = vmor %vm1650, %vm1651
  %v1653 = vsel %vm1652, %v1645, %v1649
  %v1654 = vand.u32 2147483647, %v1613
  %vm1655 = vcmp.eq.f32.partialorder %v1654, 8.507059e+37
  %v1656 = vand.u32 %v1613, 2147483648
  %v1657 = vor.u32 1.1754944e-38, %v1656
  %v1658 = vsel %vm1655, %v1657, %v1653
  %v1659 = vrcp.pop %v1616
  %v1660 = vmul.f32 %v1616, %v1659
  %v1661 = vsub.f32 1.0, %v1660
  %v1662 = vmul.f32 %v1659, %v1661
  %v1663 = vadd.f32 %v1659, %v1662
  %vm1664 = vweird.f32 %v1616
  %vm1665 = vweird.f32 %v1659
  %vm1666 = vmor %vm1664, %vm1665
  %v1667 = vsel %vm1666, %v1659, %v1663
  %v1668 = vand.u32 2147483647, %v1616
  %vm1669 = vcmp.eq.f32.partialorder %v1668, 8.507059e+37
  %v1670 = vand.u32 %v1616, 2147483648
  %v1671 = vor.u32 1.1754944e-38, %v1670
  %v1672 = vsel %vm1669, %v1671, %v1667
  %v1673 = vmul.f32 %v1598, %v1630
  %v1674 = vmul.f32 %v1600, %v1644
  %v1675 = vmul.f32 %v1602, %v1658
  %v1676 = vmul.f32 %v1604, %v1672
  %v1677 = vpack.c.bf16 %v1674, %v1673
  %v1678 = vpack.c.bf16 %v1676, %v1675
  %1679 = vrot.lane.b32.xlu0 %v1536, 64
  %v1680 = vpop.permute.xlu0 %1679
  %1681 = vrot.lane.b32.xlu0 %v1537, 64
  %v1682 = vpop.permute.xlu0 %1681
  %v1686 = vsel %vm119, %v1677, 0
  %v1689 = vsel %vm119, %v1678, 0
  %1691 = vmatpush.bf16.msra.mxu0 0
  %1692 = vmatpush.bf16.msra.mxu0 0
  %1693 = vmatpush.bf16.msra.mxu0 0
  %1694 = vmatpush.bf16.msra.mxu0 0
  %1695 = vmatpush.bf16.msra.mxu0 0
  %1696 = vmatpush.bf16.msra.mxu0 0
  %1697 = vmatpush.bf16.msra.mxu0 %v1682
  %1698 = vmatpush.bf16.msra.mxu0 %v1680
  %1699 = vmatmul.bf16.gmra.mxu0 %v1686
  %v1700 = vpop.f32.mrf.mxu0
  %v1701 = vadd.f32 0.0, %v1700
  %v1702 = vpop.f32.mrf.mxu0
  %v1703 = vadd.f32 0.0, %v1702
  %1704 = vmatmul.bf16.gmra.mxu0 %v1689
  %v1705 = vpop.f32.mrf.mxu0
  %v1706 = vadd.f32 0.0, %v1705
  %v1707 = vpop.f32.mrf.mxu0
  %v1708 = vadd.f32 0.0, %v1707
  %1709 = vdwg.mxu0
  %v1710 = vpack.c.bf16 %v1703, %v1701
  %v1711 = vpack.c.bf16 %v1708, %v1706
  %1712 = vrot.lane.b32.xlu0 %v1536, 120
  %v1713 = vpop.permute.xlu0 %1712
  %1714 = vrot.lane.b32.xlu0 %v1537, 120
  %v1715 = vpop.permute.xlu0 %1714
  %1716 = vrot.lane.b32.xlu0 %v1536, 88
  %v1717 = vpop.permute.xlu0 %1716
  %1718 = vrot.lane.b32.xlu0 %v1537, 88
  %v1719 = vpop.permute.xlu0 %1718
  %v1721 = vsel %vm255, %v1713, 0
  %v1724 = vsel %vm255, %v1715, 0
  %v1727 = vsel %vm255, %v1717, 0
  %v1730 = vsel %vm255, %v1719, 0
  %1732 = vmatpush.bf16.xpose.msra.mxu0 0
  %1733 = vmatpush.bf16.xpose.msra.mxu0 0
  %1734 = vmatpush.bf16.xpose.msra.mxu0 0
  %1735 = vmatpush.bf16.xpose.msra.mxu0 0
  %1736 = vmatpush.bf16.xpose.msra.mxu0 0
  %1737 = vmatpush.bf16.xpose.msra.mxu0 0
  %1738 = vmatpush.bf16.xpose.msra.mxu0 %v1730
  %1739 = vmatpush.bf16.xpose.msra.mxu0 %v1727
  %1740 = vmatmul.bf16.gmra.mxu0 %v1721
  %v1741 = vpop.f32.mrf.mxu0
  %v1742 = vadd.f32 0.0, %v1741
  %v1743 = vpop.f32.mrf.mxu0
  %v1744 = vadd.f32 0.0, %v1743
  %1745 = vmatmul.bf16.gmra.mxu0 %v1724
  %v1746 = vpop.f32.mrf.mxu0
  %v1747 = vadd.f32 0.0, %v1746
  %v1748 = vpop.f32.mrf.mxu0
  %v1749 = vadd.f32 0.0, %v1748
  %1750 = vdwg.mxu0
  %v1751 = vmul.f32 %v1742, 0.35355338
  %v1752 = vmul.f32 %v1744, 0.35355338
  %v1753 = vmul.f32 %v1747, 0.35355338
  %v1754 = vmul.f32 %v1749, 0.35355338
  %v1755 = vadd.f32 %v1751, %v285
  %v1756 = vadd.f32 %v1752, %v286
  %v1757 = vadd.f32 %v1753, %v287
  %v1758 = vadd.f32 %v1754, %v288
  %v1759 = vsel %vm119, %v1755, -inf
  %1760 = vmax.xlane.f32.xlu0 %v1759
  %v1761 = vpop.xlane.xlu0 %1760
  %v1762 = vsel %vm119, %v1756, -inf
  %1763 = vmax.xlane.f32.xlu0 %v1762
  %v1764 = vpop.xlane.xlu0 %1763
  %v1765 = vsel %vm119, %v1757, -inf
  %1766 = vmax.xlane.f32.xlu0 %v1765
  %v1767 = vpop.xlane.xlu0 %1766
  %v1768 = vsel %vm119, %v1758, -inf
  %1769 = vmax.xlane.f32.xlu0 %v1768
  %v1770 = vpop.xlane.xlu0 %1769
  %v1771 = vsub.f32 %v1755, %v1761
  %v1772 = vsub.f32 %v1756, %v1764
  %v1773 = vsub.f32 %v1757, %v1767
  %v1774 = vsub.f32 %v1758, %v1770
  %v1775 = vmul.f32 %v1771, 1.442695
  %v1776 = vpow.pop %v1775
  %v1777 = vmul.f32 %v1772, 1.442695
  %v1778 = vpow.pop %v1777
  %v1779 = vmul.f32 %v1773, 1.442695
  %v1780 = vpow.pop %v1779
  %v1781 = vmul.f32 %v1774, 1.442695
  %v1782 = vpow.pop %v1781
  %v1783 = vsel %vm119, %v1776, 0.0
  %1784 = vadd.xlane.f32.xlu0 %v1783
  %v1785 = vpop.xlane.xlu0 %1784
  %v1786 = vsel %vm119, %v1778, 0.0
  %1787 = vadd.xlane.f32.xlu0 %v1786
  %v1788 = vpop.xlane.xlu0 %1787
  %v1789 = vsel %vm119, %v1780, 0.0
  %1790 = vadd.xlane.f32.xlu0 %v1789
  %v1791 = vpop.xlane.xlu0 %1790
  %v1792 = vsel %vm119, %v1782, 0.0
  %1793 = vadd.xlane.f32.xlu0 %v1792
  %v1794 = vpop.xlane.xlu0 %1793
  %v1795 = vrcp.pop %v1785
  %v1796 = vmul.f32 %v1785, %v1795
  %v1797 = vsub.f32 1.0, %v1796
  %v1798 = vmul.f32 %v1795, %v1797
  %v1799 = vadd.f32 %v1795, %v1798
  %vm1800 = vweird.f32 %v1785
  %vm1801 = vweird.f32 %v1795
  %vm1802 = vmor %vm1800, %vm1801
  %v1803 = vsel %vm1802, %v1795, %v1799
  %v1804 = vand.u32 2147483647, %v1785
  %vm1805 = vcmp.eq.f32.partialorder %v1804, 8.507059e+37
  %v1806 = vand.u32 %v1785, 2147483648
  %v1807 = vor.u32 1.1754944e-38, %v1806
  %v1808 = vsel %vm1805, %v1807, %v1803
  %v1809 = vrcp.pop %v1788
  %v1810 = vmul.f32 %v1788, %v1809
  %v1811 = vsub.f32 1.0, %v1810
  %v1812 = vmul.f32 %v1809, %v1811
  %v1813 = vadd.f32 %v1809, %v1812
  %vm1814 = vweird.f32 %v1788
  %vm1815 = vweird.f32 %v1809
  %vm1816 = vmor %vm1814, %vm1815
  %v1817 = vsel %vm1816, %v1809, %v1813
  %v1818 = vand.u32 2147483647, %v1788
  %vm1819 = vcmp.eq.f32.partialorder %v1818, 8.507059e+37
  %v1820 = vand.u32 %v1788, 2147483648
  %v1821 = vor.u32 1.1754944e-38, %v1820
  %v1822 = vsel %vm1819, %v1821, %v1817
  %v1823 = vrcp.pop %v1791
  %v1824 = vmul.f32 %v1791, %v1823
  %v1825 = vsub.f32 1.0, %v1824
  %v1826 = vmul.f32 %v1823, %v1825
  %v1827 = vadd.f32 %v1823, %v1826
  %vm1828 = vweird.f32 %v1791
  %vm1829 = vweird.f32 %v1823
  %vm1830 = vmor %vm1828, %vm1829
  %v1831 = vsel %vm1830, %v1823, %v1827
  %v1832 = vand.u32 2147483647, %v1791
  %vm1833 = vcmp.eq.f32.partialorder %v1832, 8.507059e+37
  %v1834 = vand.u32 %v1791, 2147483648
  %v1835 = vor.u32 1.1754944e-38, %v1834
  %v1836 = vsel %vm1833, %v1835, %v1831
  %v1837 = vrcp.pop %v1794
  %v1838 = vmul.f32 %v1794, %v1837
  %v1839 = vsub.f32 1.0, %v1838
  %v1840 = vmul.f32 %v1837, %v1839
  %v1841 = vadd.f32 %v1837, %v1840
  %vm1842 = vweird.f32 %v1794
  %vm1843 = vweird.f32 %v1837
  %vm1844 = vmor %vm1842, %vm1843
  %v1845 = vsel %vm1844, %v1837, %v1841
  %v1846 = vand.u32 2147483647, %v1794
  %vm1847 = vcmp.eq.f32.partialorder %v1846, 8.507059e+37
  %v1848 = vand.u32 %v1794, 2147483648
  %v1849 = vor.u32 1.1754944e-38, %v1848
  %v1850 = vsel %vm1847, %v1849, %v1845
  %v1851 = vmul.f32 %v1776, %v1808
  %v1852 = vmul.f32 %v1778, %v1822
  %v1853 = vmul.f32 %v1780, %v1836
  %v1854 = vmul.f32 %v1782, %v1850
  %v1855 = vpack.c.bf16 %v1852, %v1851
  %v1856 = vpack.c.bf16 %v1854, %v1853
  %1857 = vrot.lane.b32.xlu0 %v1536, 56
  %v1858 = vpop.permute.xlu0 %1857
  %1859 = vrot.lane.b32.xlu0 %v1537, 56
  %v1860 = vpop.permute.xlu0 %1859
  %v1864 = vsel %vm119, %v1855, 0
  %v1867 = vsel %vm119, %v1856, 0
  %1869 = vmatpush.bf16.msra.mxu0 0
  %1870 = vmatpush.bf16.msra.mxu0 0
  %1871 = vmatpush.bf16.msra.mxu0 0
  %1872 = vmatpush.bf16.msra.mxu0 0
  %1873 = vmatpush.bf16.msra.mxu0 0
  %1874 = vmatpush.bf16.msra.mxu0 0
  %1875 = vmatpush.bf16.msra.mxu0 %v1860
  %1876 = vmatpush.bf16.msra.mxu0 %v1858
  %1877 = vmatmul.bf16.gmra.mxu0 %v1864
  %v1878 = vpop.f32.mrf.mxu0
  %v1879 = vadd.f32 0.0, %v1878
  %v1880 = vpop.f32.mrf.mxu0
  %v1881 = vadd.f32 0.0, %v1880
  %1882 = vmatmul.bf16.gmra.mxu0 %v1867
  %v1883 = vpop.f32.mrf.mxu0
  %v1884 = vadd.f32 0.0, %v1883
  %v1885 = vpop.f32.mrf.mxu0
  %v1886 = vadd.f32 0.0, %v1885
  %1887 = vdwg.mxu0
  %v1888 = vpack.c.bf16 %v1881, %v1879
  %v1889 = vpack.c.bf16 %v1886, %v1884
  %v1891 = vsel %vm255, %v1888, 0
  %v1894 = vsel %vm255, %v1889, 0
  %v1897 = vsel %vm94, %v1525, 0
  %1899 = vmatpush.bf16.msra.mxu0 0
  %1900 = vmatpush.bf16.msra.mxu0 0
  %1901 = vmatpush.bf16.msra.mxu0 0
  %1902 = vmatpush.bf16.msra.mxu0 0
  %1903 = vmatpush.bf16.msra.mxu0 0
  %1904 = vmatpush.bf16.msra.mxu0 0
  %1905 = vmatpush.bf16.msra.mxu0 0
  %1906 = vmatpush.bf16.msra.mxu0 %v1897
  %1907 = vmatmul.bf16.gmra.mxu0 %v1891
  %v1908 = vpop.f32.mrf.mxu0
  %v1909 = vadd.f32 0.0, %v1908
  %v1910 = vpop.f32.mrf.mxu0
  %v1911 = vadd.f32 0.0, %v1910
  %1912 = vmatmul.bf16.gmra.mxu0 %v1894
  %v1913 = vpop.f32.mrf.mxu0
  %v1914 = vadd.f32 0.0, %v1913
  %v1915 = vpop.f32.mrf.mxu0
  %v1916 = vadd.f32 0.0, %v1915
  %1917 = vdwg.mxu0
  %v1919 = vsel %vm255, %v1710, 0
  %v1922 = vsel %vm255, %v1711, 0
  %v1925 = vsel %vm94, %v1524, 0
  %1927 = vmatpush.bf16.msra.mxu0 0
  %1928 = vmatpush.bf16.msra.mxu0 0
  %1929 = vmatpush.bf16.msra.mxu0 0
  %1930 = vmatpush.bf16.msra.mxu0 0
  %1931 = vmatpush.bf16.msra.mxu0 0
  %1932 = vmatpush.bf16.msra.mxu0 0
  %1933 = vmatpush.bf16.msra.mxu0 0
  %1934 = vmatpush.bf16.msra.mxu0 %v1925
  %1935 = vmatmul.bf16.gmra.mxu0 %v1919
  %v1936 = vpop.f32.mrf.mxu0
  %v1937 = vadd.f32 %v1909, %v1936
  %v1938 = vpop.f32.mrf.mxu0
  %v1939 = vadd.f32 %v1911, %v1938
  %1940 = vmatmul.bf16.gmra.mxu0 %v1922
  %v1941 = vpop.f32.mrf.mxu0
  %v1942 = vadd.f32 %v1914, %v1941
  %v1943 = vpop.f32.mrf.mxu0
  %v1944 = vadd.f32 %v1916, %v1943
  %1945 = vdwg.mxu0
  %1946 = vrot.lane.b32.xlu0 %v1536, 112
  %v1947 = vpop.permute.xlu0 %1946
  %1948 = vrot.lane.b32.xlu0 %v1537, 112
  %v1949 = vpop.permute.xlu0 %1948
  %1950 = vrot.lane.b32.xlu0 %v1536, 80
  %v1951 = vpop.permute.xlu0 %1950
  %1952 = vrot.lane.b32.xlu0 %v1537, 80
  %v1953 = vpop.permute.xlu0 %1952
  %v1955 = vsel %vm255, %v1947, 0
  %v1958 = vsel %vm255, %v1949, 0
  %v1961 = vsel %vm255, %v1951, 0
  %v1964 = vsel %vm255, %v1953, 0
  %1966 = vmatpush.bf16.xpose.msra.mxu0 0
  %1967 = vmatpush.bf16.xpose.msra.mxu0 0
  %1968 = vmatpush.bf16.xpose.msra.mxu0 0
  %1969 = vmatpush.bf16.xpose.msra.mxu0 0
  %1970 = vmatpush.bf16.xpose.msra.mxu0 0
  %1971 = vmatpush.bf16.xpose.msra.mxu0 0
  %1972 = vmatpush.bf16.xpose.msra.mxu0 %v1964
  %1973 = vmatpush.bf16.xpose.msra.mxu0 %v1961
  %1974 = vmatmul.bf16.gmra.mxu0 %v1955
  %v1975 = vpop.f32.mrf.mxu0
  %v1976 = vadd.f32 0.0, %v1975
  %v1977 = vpop.f32.mrf.mxu0
  %v1978 = vadd.f32 0.0, %v1977
  %1979 = vmatmul.bf16.gmra.mxu0 %v1958
  %v1980 = vpop.f32.mrf.mxu0
  %v1981 = vadd.f32 0.0, %v1980
  %v1982 = vpop.f32.mrf.mxu0
  %v1983 = vadd.f32 0.0, %v1982
  %1984 = vdwg.mxu0
  %v1985 = vmul.f32 %v1976, 0.35355338
  %v1986 = vmul.f32 %v1978, 0.35355338
  %v1987 = vmul.f32 %v1981, 0.35355338
  %v1988 = vmul.f32 %v1983, 0.35355338
  %v1989 = vadd.f32 %v1985, %v285
  %v1990 = vadd.f32 %v1986, %v286
  %v1991 = vadd.f32 %v1987, %v287
  %v1992 = vadd.f32 %v1988, %v288
  %v1993 = vsel %vm119, %v1989, -inf
  %1994 = vmax.xlane.f32.xlu0 %v1993
  %v1995 = vpop.xlane.xlu0 %1994
  %v1996 = vsel %vm119, %v1990, -inf
  %1997 = vmax.xlane.f32.xlu0 %v1996
  %v1998 = vpop.xlane.xlu0 %1997
  %v1999 = vsel %vm119, %v1991, -inf
  %2000 = vmax.xlane.f32.xlu0 %v1999
  %v2001 = vpop.xlane.xlu0 %2000
  %v2002 = vsel %vm119, %v1992, -inf
  %2003 = vmax.xlane.f32.xlu0 %v2002
  %v2004 = vpop.xlane.xlu0 %2003
  %v2005 = vsub.f32 %v1989, %v1995
  %v2006 = vsub.f32 %v1990, %v1998
  %v2007 = vsub.f32 %v1991, %v2001
  %v2008 = vsub.f32 %v1992, %v2004
  %v2009 = vmul.f32 %v2005, 1.442695
  %v2010 = vpow.pop %v2009
  %v2011 = vmul.f32 %v2006, 1.442695
  %v2012 = vpow.pop %v2011
  %v2013 = vmul.f32 %v2007, 1.442695
  %v2014 = vpow.pop %v2013
  %v2015 = vmul.f32 %v2008, 1.442695
  %v2016 = vpow.pop %v2015
  %v2017 = vsel %vm119, %v2010, 0.0
  %2018 = vadd.xlane.f32.xlu0 %v2017
  %v2019 = vpop.xlane.xlu0 %2018
  %v2020 = vsel %vm119, %v2012, 0.0
  %2021 = vadd.xlane.f32.xlu0 %v2020
  %v2022 = vpop.xlane.xlu0 %2021
  %v2023 = vsel %vm119, %v2014, 0.0
  %2024 = vadd.xlane.f32.xlu0 %v2023
  %v2025 = vpop.xlane.xlu0 %2024
  %v2026 = vsel %vm119, %v2016, 0.0
  %2027 = vadd.xlane.f32.xlu0 %v2026
  %v2028 = vpop.xlane.xlu0 %2027
  %v2029 = vrcp.pop %v2019
  %v2030 = vmul.f32 %v2019, %v2029
  %v2031 = vsub.f32 1.0, %v2030
  %v2032 = vmul.f32 %v2029, %v2031
  %v2033 = vadd.f32 %v2029, %v2032
  %vm2034 = vweird.f32 %v2019
  %vm2035 = vweird.f32 %v2029
  %vm2036 = vmor %vm2034, %vm2035
  %v2037 = vsel %vm2036, %v2029, %v2033
  %v2038 = vand.u32 2147483647, %v2019
  %vm2039 = vcmp.eq.f32.partialorder %v2038, 8.507059e+37
  %v2040 = vand.u32 %v2019, 2147483648
  %v2041 = vor.u32 1.1754944e-38, %v2040
  %v2042 = vsel %vm2039, %v2041, %v2037
  %v2043 = vrcp.pop %v2022
  %v2044 = vmul.f32 %v2022, %v2043
  %v2045 = vsub.f32 1.0, %v2044
  %v2046 = vmul.f32 %v2043, %v2045
  %v2047 = vadd.f32 %v2043, %v2046
  %vm2048 = vweird.f32 %v2022
  %vm2049 = vweird.f32 %v2043
  %vm2050 = vmor %vm2048, %vm2049
  %v2051 = vsel %vm2050, %v2043, %v2047
  %v2052 = vand.u32 2147483647, %v2022
  %vm2053 = vcmp.eq.f32.partialorder %v2052, 8.507059e+37
  %v2054 = vand.u32 %v2022, 2147483648
  %v2055 = vor.u32 1.1754944e-38, %v2054
  %v2056 = vsel %vm2053, %v2055, %v2051
  %v2057 = vrcp.pop %v2025
  %v2058 = vmul.f32 %v2025, %v2057
  %v2059 = vsub.f32 1.0, %v2058
  %v2060 = vmul.f32 %v2057, %v2059
  %v2061 = vadd.f32 %v2057, %v2060
  %vm2062 = vweird.f32 %v2025
  %vm2063 = vweird.f32 %v2057
  %vm2064 = vmor %vm2062, %vm2063
  %v2065 = vsel %vm2064, %v2057, %v2061
  %v2066 = vand.u32 2147483647, %v2025
  %vm2067 = vcmp.eq.f32.partialorder %v2066, 8.507059e+37
  %v2068 = vand.u32 %v2025, 2147483648
  %v2069 = vor.u32 1.1754944e-38, %v2068
  %v2070 = vsel %vm2067, %v2069, %v2065
  %v2071 = vrcp.pop %v2028
  %v2072 = vmul.f32 %v2028, %v2071
  %v2073 = vsub.f32 1.0, %v2072
  %v2074 = vmul.f32 %v2071, %v2073
  %v2075 = vadd.f32 %v2071, %v2074
  %vm2076 = vweird.f32 %v2028
  %vm2077 = vweird.f32 %v2071
  %vm2078 = vmor %vm2076, %vm2077
  %v2079 = vsel %vm2078, %v2071, %v2075
  %v2080 = vand.u32 2147483647, %v2028
  %vm2081 = vcmp.eq.f32.partialorder %v2080, 8.507059e+37
  %v2082 = vand.u32 %v2028, 2147483648
  %v2083 = vor.u32 1.1754944e-38, %v2082
  %v2084 = vsel %vm2081, %v2083, %v2079
  %v2085 = vmul.f32 %v2010, %v2042
  %v2086 = vmul.f32 %v2012, %v2056
  %v2087 = vmul.f32 %v2014, %v2070
  %v2088 = vmul.f32 %v2016, %v2084
  %v2089 = vpack.c.bf16 %v2086, %v2085
  %v2090 = vpack.c.bf16 %v2088, %v2087
  %2091 = vrot.lane.b32.xlu0 %v1536, 48
  %v2092 = vpop.permute.xlu0 %2091
  %2093 = vrot.lane.b32.xlu0 %v1537, 48
  %v2094 = vpop.permute.xlu0 %2093
  %v2098 = vsel %vm119, %v2089, 0
  %v2101 = vsel %vm119, %v2090, 0
  %2103 = vmatpush.bf16.msra.mxu0 0
  %2104 = vmatpush.bf16.msra.mxu0 0
  %2105 = vmatpush.bf16.msra.mxu0 0
  %2106 = vmatpush.bf16.msra.mxu0 0
  %2107 = vmatpush.bf16.msra.mxu0 0
  %2108 = vmatpush.bf16.msra.mxu0 0
  %2109 = vmatpush.bf16.msra.mxu0 %v2094
  %2110 = vmatpush.bf16.msra.mxu0 %v2092
  %2111 = vmatmul.bf16.gmra.mxu0 %v2098
  %v2112 = vpop.f32.mrf.mxu0
  %v2113 = vadd.f32 0.0, %v2112
  %v2114 = vpop.f32.mrf.mxu0
  %v2115 = vadd.f32 0.0, %v2114
  %2116 = vmatmul.bf16.gmra.mxu0 %v2101
  %v2117 = vpop.f32.mrf.mxu0
  %v2118 = vadd.f32 0.0, %v2117
  %v2119 = vpop.f32.mrf.mxu0
  %v2120 = vadd.f32 0.0, %v2119
  %2121 = vdwg.mxu0
  %v2122 = vpack.c.bf16 %v2115, %v2113
  %v2123 = vpack.c.bf16 %v2120, %v2118
  %v2125 = vsel %vm255, %v2122, 0
  %v2128 = vsel %vm255, %v2123, 0
  %v2131 = vsel %vm94, %v1526, 0
  %2133 = vmatpush.bf16.msra.mxu0 0
  %2134 = vmatpush.bf16.msra.mxu0 0
  %2135 = vmatpush.bf16.msra.mxu0 0
  %2136 = vmatpush.bf16.msra.mxu0 0
  %2137 = vmatpush.bf16.msra.mxu0 0
  %2138 = vmatpush.bf16.msra.mxu0 0
  %2139 = vmatpush.bf16.msra.mxu0 0
  %2140 = vmatpush.bf16.msra.mxu0 %v2131
  %2141 = vmatmul.bf16.gmra.mxu0 %v2125
  %v2142 = vpop.f32.mrf.mxu0
  %v2143 = vadd.f32 0.0, %v2142
  %v2144 = vpop.f32.mrf.mxu0
  %v2145 = vadd.f32 0.0, %v2144
  %2146 = vmatmul.bf16.gmra.mxu0 %v2128
  %v2147 = vpop.f32.mrf.mxu0
  %v2148 = vadd.f32 0.0, %v2147
  %v2149 = vpop.f32.mrf.mxu0
  %v2150 = vadd.f32 0.0, %v2149
  %2151 = vdwg.mxu0
  %v2152 = vadd.f32 %v1937, %v2143
  %v2153 = vadd.f32 %v1939, %v2145
  %v2154 = vadd.f32 %v1942, %v2148
  %v2155 = vadd.f32 %v1944, %v2150
  %2156 = vrot.lane.b32.xlu0 %v1536, 104
  %v2157 = vpop.permute.xlu0 %2156
  %2158 = vrot.lane.b32.xlu0 %v1537, 104
  %v2159 = vpop.permute.xlu0 %2158
  %2160 = vrot.lane.b32.xlu0 %v1536, 72
  %v2161 = vpop.permute.xlu0 %2160
  %2162 = vrot.lane.b32.xlu0 %v1537, 72
  %v2163 = vpop.permute.xlu0 %2162
  %v2165 = vsel %vm255, %v2157, 0
  %v2168 = vsel %vm255, %v2159, 0
  %v2171 = vsel %vm255, %v2161, 0
  %v2174 = vsel %vm255, %v2163, 0
  %2176 = vmatpush.bf16.xpose.msra.mxu0 0
  %2177 = vmatpush.bf16.xpose.msra.mxu0 0
  %2178 = vmatpush.bf16.xpose.msra.mxu0 0
  %2179 = vmatpush.bf16.xpose.msra.mxu0 0
  %2180 = vmatpush.bf16.xpose.msra.mxu0 0
  %2181 = vmatpush.bf16.xpose.msra.mxu0 0
  %2182 = vmatpush.bf16.xpose.msra.mxu0 %v2174
  %2183 = vmatpush.bf16.xpose.msra.mxu0 %v2171
  %2184 = vmatmul.bf16.gmra.mxu0 %v2165
  %v2185 = vpop.f32.mrf.mxu0
  %v2186 = vadd.f32 0.0, %v2185
  %v2187 = vpop.f32.mrf.mxu0
  %v2188 = vadd.f32 0.0, %v2187
  %2189 = vmatmul.bf16.gmra.mxu0 %v2168
  %v2190 = vpop.f32.mrf.mxu0
  %v2191 = vadd.f32 0.0, %v2190
  %v2192 = vpop.f32.mrf.mxu0
  %v2193 = vadd.f32 0.0, %v2192
  %2194 = vdwg.mxu0
  %v2195 = vmul.f32 %v2186, 0.35355338
  %v2196 = vmul.f32 %v2188, 0.35355338
  %v2197 = vmul.f32 %v2191, 0.35355338
  %v2198 = vmul.f32 %v2193, 0.35355338
  %v2199 = vadd.f32 %v2195, %v285
  %v2200 = vadd.f32 %v2196, %v286
  %v2201 = vadd.f32 %v2197, %v287
  %v2202 = vadd.f32 %v2198, %v288
  %v2203 = vsel %vm119, %v2199, -inf
  %2204 = vmax.xlane.f32.xlu0 %v2203
  %v2205 = vpop.xlane.xlu0 %2204
  %v2206 = vsel %vm119, %v2200, -inf
  %2207 = vmax.xlane.f32.xlu0 %v2206
  %v2208 = vpop.xlane.xlu0 %2207
  %v2209 = vsel %vm119, %v2201, -inf
  %2210 = vmax.xlane.f32.xlu0 %v2209
  %v2211 = vpop.xlane.xlu0 %2210
  %v2212 = vsel %vm119, %v2202, -inf
  %2213 = vmax.xlane.f32.xlu0 %v2212
  %v2214 = vpop.xlane.xlu0 %2213
  %v2215 = vsub.f32 %v2199, %v2205
  %v2216 = vsub.f32 %v2200, %v2208
  %v2217 = vsub.f32 %v2201, %v2211
  %v2218 = vsub.f32 %v2202, %v2214
  %v2219 = vmul.f32 %v2215, 1.442695
  %v2220 = vpow.pop %v2219
  %v2221 = vmul.f32 %v2216, 1.442695
  %v2222 = vpow.pop %v2221
  %v2223 = vmul.f32 %v2217, 1.442695
  %v2224 = vpow.pop %v2223
  %v2225 = vmul.f32 %v2218, 1.442695
  %v2226 = vpow.pop %v2225
  %v2227 = vsel %vm119, %v2220, 0.0
  %2228 = vadd.xlane.f32.xlu0 %v2227
  %v2229 = vpop.xlane.xlu0 %2228
  %v2230 = vsel %vm119, %v2222, 0.0
  %2231 = vadd.xlane.f32.xlu0 %v2230
  %v2232 = vpop.xlane.xlu0 %2231
  %v2233 = vsel %vm119, %v2224, 0.0
  %2234 = vadd.xlane.f32.xlu0 %v2233
  %v2235 = vpop.xlane.xlu0 %2234
  %v2236 = vsel %vm119, %v2226, 0.0
  %2237 = vadd.xlane.f32.xlu0 %v2236
  %v2238 = vpop.xlane.xlu0 %2237
  %v2239 = vrcp.pop %v2229
  %v2240 = vmul.f32 %v2229, %v2239
  %v2241 = vsub.f32 1.0, %v2240
  %v2242 = vmul.f32 %v2239, %v2241
  %v2243 = vadd.f32 %v2239, %v2242
  %vm2244 = vweird.f32 %v2229
  %vm2245 = vweird.f32 %v2239
  %vm2246 = vmor %vm2244, %vm2245
  %v2247 = vsel %vm2246, %v2239, %v2243
  %v2248 = vand.u32 2147483647, %v2229
  %vm2249 = vcmp.eq.f32.partialorder %v2248, 8.507059e+37
  %v2250 = vand.u32 %v2229, 2147483648
  %v2251 = vor.u32 1.1754944e-38, %v2250
  %v2252 = vsel %vm2249, %v2251, %v2247
  %v2253 = vrcp.pop %v2232
  %v2254 = vmul.f32 %v2232, %v2253
  %v2255 = vsub.f32 1.0, %v2254
  %v2256 = vmul.f32 %v2253, %v2255
  %v2257 = vadd.f32 %v2253, %v2256
  %vm2258 = vweird.f32 %v2232
  %vm2259 = vweird.f32 %v2253
  %vm2260 = vmor %vm2258, %vm2259
  %v2261 = vsel %vm2260, %v2253, %v2257
  %v2262 = vand.u32 2147483647, %v2232
  %vm2263 = vcmp.eq.f32.partialorder %v2262, 8.507059e+37
  %v2264 = vand.u32 %v2232, 2147483648
  %v2265 = vor.u32 1.1754944e-38, %v2264
  %v2266 = vsel %vm2263, %v2265, %v2261
  %v2267 = vrcp.pop %v2235
  %v2268 = vmul.f32 %v2235, %v2267
  %v2269 = vsub.f32 1.0, %v2268
  %v2270 = vmul.f32 %v2267, %v2269
  %v2271 = vadd.f32 %v2267, %v2270
  %vm2272 = vweird.f32 %v2235
  %vm2273 = vweird.f32 %v2267
  %vm2274 = vmor %vm2272, %vm2273
  %v2275 = vsel %vm2274, %v2267, %v2271
  %v2276 = vand.u32 2147483647, %v2235
  %vm2277 = vcmp.eq.f32.partialorder %v2276, 8.507059e+37
  %v2278 = vand.u32 %v2235, 2147483648
  %v2279 = vor.u32 1.1754944e-38, %v2278
  %v2280 = vsel %vm2277, %v2279, %v2275
  %v2281 = vrcp.pop %v2238
  %v2282 = vmul.f32 %v2238, %v2281
  %v2283 = vsub.f32 1.0, %v2282
  %v2284 = vmul.f32 %v2281, %v2283
  %v2285 = vadd.f32 %v2281, %v2284
  %vm2286 = vweird.f32 %v2238
  %vm2287 = vweird.f32 %v2281
  %vm2288 = vmor %vm2286, %vm2287
  %v2289 = vsel %vm2288, %v2281, %v2285
  %v2290 = vand.u32 2147483647, %v2238
  %vm2291 = vcmp.eq.f32.partialorder %v2290, 8.507059e+37
  %v2292 = vand.u32 %v2238, 2147483648
  %v2293 = vor.u32 1.1754944e-38, %v2292
  %v2294 = vsel %vm2291, %v2293, %v2289
  %v2295 = vmul.f32 %v2220, %v2252
  %v2296 = vmul.f32 %v2222, %v2266
  %v2297 = vmul.f32 %v2224, %v2280
  %v2298 = vmul.f32 %v2226, %v2294
  %v2299 = vpack.c.bf16 %v2296, %v2295
  %v2300 = vpack.c.bf16 %v2298, %v2297
  %2301 = vrot.lane.b32.xlu0 %v1536, 40
  %v2302 = vpop.permute.xlu0 %2301
  %2303 = vrot.lane.b32.xlu0 %v1537, 40
  %v2304 = vpop.permute.xlu0 %2303
  %v2308 = vsel %vm119, %v2299, 0
  %v2311 = vsel %vm119, %v2300, 0
  %2313 = vmatpush.bf16.msra.mxu0 0
  %2314 = vmatpush.bf16.msra.mxu0 0
  %2315 = vmatpush.bf16.msra.mxu0 0
  %2316 = vmatpush.bf16.msra.mxu0 0
  %2317 = vmatpush.bf16.msra.mxu0 0
  %2318 = vmatpush.bf16.msra.mxu0 0
  %2319 = vmatpush.bf16.msra.mxu0 %v2304
  %2320 = vmatpush.bf16.msra.mxu0 %v2302
  %2321 = vmatmul.bf16.gmra.mxu0 %v2308
  %v2322 = vpop.f32.mrf.mxu0
  %v2323 = vadd.f32 0.0, %v2322
  %v2324 = vpop.f32.mrf.mxu0
  %v2325 = vadd.f32 0.0, %v2324
  %2326 = vmatmul.bf16.gmra.mxu0 %v2311
  %v2327 = vpop.f32.mrf.mxu0
  %v2328 = vadd.f32 0.0, %v2327
  %v2329 = vpop.f32.mrf.mxu0
  %v2330 = vadd.f32 0.0, %v2329
  %2331 = vdwg.mxu0
  %v2332 = vpack.c.bf16 %v2325, %v2323
  %v2333 = vpack.c.bf16 %v2330, %v2328
  %v2335 = vsel %vm255, %v2332, 0
  %v2338 = vsel %vm255, %v2333, 0
  %v2341 = vsel %vm94, %v1527, 0
  %2343 = vmatpush.bf16.msra.mxu0 0
  %2344 = vmatpush.bf16.msra.mxu0 0
  %2345 = vmatpush.bf16.msra.mxu0 0
  %2346 = vmatpush.bf16.msra.mxu0 0
  %2347 = vmatpush.bf16.msra.mxu0 0
  %2348 = vmatpush.bf16.msra.mxu0 0
  %2349 = vmatpush.bf16.msra.mxu0 0
  %2350 = vmatpush.bf16.msra.mxu0 %v2341
  %2351 = vmatmul.bf16.gmra.mxu0 %v2335
  %v2352 = vpop.f32.mrf.mxu0
  %v2353 = vadd.f32 0.0, %v2352
  %v2354 = vpop.f32.mrf.mxu0
  %v2355 = vadd.f32 0.0, %v2354
  %2356 = vmatmul.bf16.gmra.mxu0 %v2338
  %v2357 = vpop.f32.mrf.mxu0
  %v2358 = vadd.f32 0.0, %v2357
  %v2359 = vpop.f32.mrf.mxu0
  %v2360 = vadd.f32 0.0, %v2359
  %2361 = vdwg.mxu0
  %v2362 = vadd.f32 %v2152, %v2353
  %v2363 = vadd.f32 %v2153, %v2355
  %v2364 = vadd.f32 %v2154, %v2358
  %v2365 = vadd.f32 %v2155, %v2360
  %v2366 = vadd.f32 %v1470, %v2362
  %v2367 = vadd.f32 %v1471, %v2363
  %v2368 = vadd.f32 %v1472, %v2364
  %v2369 = vadd.f32 %v1473, %v2365
  %v2370 = vperm.slane %v1475, 0
  %v2371 = vadd.f32 %v2366, %v2370
  %v2372 = vadd.f32 %v2367, %v2370
  %v2373 = vadd.f32 %v2368, %v2370
  %v2374 = vadd.f32 %v2369, %v2370
  %v2375 = vsel %vm119, %v2371, 0.0
  %2376 = vadd.xlane.f32.xlu0 %v2375
  %v2377 = vpop.xlane.xlu0 %2376
  %v2378 = vsel %vm119, %v2372, 0.0
  %2379 = vadd.xlane.f32.xlu0 %v2378
  %v2380 = vpop.xlane.xlu0 %2379
  %v2381 = vsel %vm119, %v2373, 0.0
  %2382 = vadd.xlane.f32.xlu0 %v2381
  %v2383 = vpop.xlane.xlu0 %2382
  %v2384 = vsel %vm119, %v2374, 0.0
  %2385 = vadd.xlane.f32.xlu0 %v2384
  %v2386 = vpop.xlane.xlu0 %2385
  %v2387 = vmul.f32 %v2377, %v138
  %v2388 = vmul.f32 %v2380, %v138
  %v2389 = vmul.f32 %v2383, %v138
  %v2390 = vmul.f32 %v2386, %v138
  %v2391 = vsub.f32 %v2371, %v2387
  %v2392 = vsub.f32 %v2372, %v2388
  %v2393 = vsub.f32 %v2373, %v2389
  %v2394 = vsub.f32 %v2374, %v2390
  %v2395 = vmul.f32 %v2391, %v2391
  %v2396 = vmul.f32 %v2392, %v2392
  %v2397 = vmul.f32 %v2393, %v2393
  %v2398 = vmul.f32 %v2394, %v2394
  %v2399 = vsel %vm119, %v2395, 0.0
  %2400 = vadd.xlane.f32.xlu0 %v2399
  %v2401 = vpop.xlane.xlu0 %2400
  %v2402 = vsel %vm119, %v2396, 0.0
  %2403 = vadd.xlane.f32.xlu0 %v2402
  %v2404 = vpop.xlane.xlu0 %2403
  %v2405 = vsel %vm119, %v2397, 0.0
  %2406 = vadd.xlane.f32.xlu0 %v2405
  %v2407 = vpop.xlane.xlu0 %2406
  %v2408 = vsel %vm119, %v2398, 0.0
  %2409 = vadd.xlane.f32.xlu0 %v2408
  %v2410 = vpop.xlane.xlu0 %2409
  %v2411 = vmul.f32 %v2401, %v138
  %v2412 = vmul.f32 %v2404, %v138
  %v2413 = vmul.f32 %v2407, %v138
  %v2414 = vmul.f32 %v2410, %v138
  %v2415 = vadd.f32 %v2411, 1e-05
  %v2416 = vadd.f32 %v2412, 1e-05
  %v2417 = vadd.f32 %v2413, 1e-05
  %v2418 = vadd.f32 %v2414, 1e-05
  %v2419 = vrsqrt.pop %v2415
  %v2420 = vmul.f32 %v2419, %v2415
  %v2421 = vmul.f32 %v2420, %v2419
  %v2422 = vmul.f32 0.5, %v2421
  %v2423 = vsub.f32 1.5, %v2422
  %v2424 = vmul.f32 %v2419, %v2423
  %vm2425 = vweird.f32 %v2415
  %vm2426 = vweird.f32 %v2419
  %vm2427 = vmor %vm2425, %vm2426
  %v2428 = vsel %vm2427, %v2419, %v2424
  %v2429 = vrsqrt.pop %v2416
  %v2430 = vmul.f32 %v2429, %v2416
  %v2431 = vmul.f32 %v2430, %v2429
  %v2432 = vmul.f32 0.5, %v2431
  %v2433 = vsub.f32 1.5, %v2432
  %v2434 = vmul.f32 %v2429, %v2433
  %vm2435 = vweird.f32 %v2416
  %vm2436 = vweird.f32 %v2429
  %vm2437 = vmor %vm2435, %vm2436
  %v2438 = vsel %vm2437, %v2429, %v2434
  %v2439 = vrsqrt.pop %v2417
  %v2440 = vmul.f32 %v2439, %v2417
  %v2441 = vmul.f32 %v2440, %v2439
  %v2442 = vmul.f32 0.5, %v2441
  %v2443 = vsub.f32 1.5, %v2442
  %v2444 = vmul.f32 %v2439, %v2443
  %vm2445 = vweird.f32 %v2417
  %vm2446 = vweird.f32 %v2439
  %vm2447 = vmor %vm2445, %vm2446
  %v2448 = vsel %vm2447, %v2439, %v2444
  %v2449 = vrsqrt.pop %v2418
  %v2450 = vmul.f32 %v2449, %v2418
  %v2451 = vmul.f32 %v2450, %v2449
  %v2452 = vmul.f32 0.5, %v2451
  %v2453 = vsub.f32 1.5, %v2452
  %v2454 = vmul.f32 %v2449, %v2453
  %vm2455 = vweird.f32 %v2418
  %vm2456 = vweird.f32 %v2449
  %vm2457 = vmor %vm2455, %vm2456
  %v2458 = vsel %vm2457, %v2449, %v2454
  %v2459 = vmul.f32 %v2391, %v2428
  %v2460 = vmul.f32 %v2392, %v2438
  %v2461 = vmul.f32 %v2393, %v2448
  %v2462 = vmul.f32 %v2394, %v2458
  %v2463 = vperm.slane %v1476, 0
  %v2464 = vmul.f32 %v2459, %v2463
  %v2465 = vmul.f32 %v2460, %v2463
  %v2466 = vmul.f32 %v2461, %v2463
  %v2467 = vmul.f32 %v2462, %v2463
  %v2468 = vperm.slane %v1477, 0
  %v2469 = vadd.f32 %v2464, %v2468
  %v2470 = vadd.f32 %v2465, %v2468
  %v2471 = vadd.f32 %v2466, %v2468
  %v2472 = vadd.f32 %v2467, %v2468
  %v2473 = vld [vmem:[%s3 + $0xc0] sm:$0xff]
  %v2474 = vld [vmem:[%s3 + $0xc8] sm:$0xff]
  %v2475 = vld [vmem:[%s3 + $0xd0] sm:$0xff]
  %v2476 = vld [vmem:[%s3 + $0xd8] sm:$0xff]
  %v2477 = vpack.c.bf16 %v2470, %v2469
  %v2478 = vpack.c.bf16 %v2472, %v2471
  %v2479 = vpack.c.bf16 %v2474, %v2473
  %v2480 = vpack.c.bf16 %v2476, %v2475
  %v2481 = vperm.slane %v1478, 0
  %v2483 = vsel %vm119, %v2477, 0
  %v2486 = vsel %vm119, %v2478, 0
  %2488 = vmatpush.bf16.msra.mxu0 0
  %2489 = vmatpush.bf16.msra.mxu0 0
  %2490 = vmatpush.bf16.msra.mxu0 0
  %2491 = vmatpush.bf16.msra.mxu0 0
  %2492 = vmatpush.bf16.msra.mxu0 0
  %2493 = vmatpush.bf16.msra.mxu0 0
  %2494 = vmatpush.bf16.msra.mxu0 %v2480
  %2495 = vmatpush.bf16.msra.mxu0 %v2479
  %2496 = vmatmul.bf16.gmra.mxu0 %v2483
  %v2497 = vpop.f32.mrf.mxu0
  %v2498 = vadd.f32 %v2481, %v2497
  %v2499 = vpop.f32.mrf.mxu0
  %v2500 = vadd.f32 %v2481, %v2499
  %2501 = vmatmul.bf16.gmra.mxu0 %v2486
  %v2502 = vpop.f32.mrf.mxu0
  %v2503 = vadd.f32 %v2481, %v2502
  %v2504 = vpop.f32.mrf.mxu0
  %v2505 = vadd.f32 %v2481, %v2504
  %2506 = vdwg.mxu0
  %v2507 = vmax.f32 %v2498, 0.0
  %v2508 = vmax.f32 %v2500, 0.0
  %v2509 = vmax.f32 %v2503, 0.0
  %v2510 = vmax.f32 %v2505, 0.0
  %v2511 = vld [vmem:[%s4 + $0x80] sm:$0xff]
  %v2512 = vld [vmem:[%s4 + $0x88] sm:$0xff]
  %v2513 = vld [vmem:[%s4 + $0x90] sm:$0xff]
  %v2514 = vld [vmem:[%s4 + $0x98] sm:$0xff]
  %v2515 = vld [vmem:[%s4 + $0xa0] sm:$0xff]
  %v2516 = vld [vmem:[%s4 + $0xa8] sm:$0xff]
  %v2517 = vld [vmem:[%s4 + $0xb0] sm:$0xff]
  %v2518 = vld [vmem:[%s4 + $0xb8] sm:$0xff]
  %v2519 = vld [vmem:[%s4 + $0xc0] sm:$0xff]
  %v2520 = vld [vmem:[%s4 + $0xc8] sm:$0xff]
  %v2521 = vld [vmem:[%s4 + $0xd0] sm:$0xff]
  %v2522 = vld [vmem:[%s4 + $0xd8] sm:$0xff]
  %v2523 = vld [vmem:[%s4 + $0xe0] sm:$0xff]
  %v2524 = vld [vmem:[%s4 + $0xe8] sm:$0xff]
  %v2525 = vld [vmem:[%s4 + $0xf0] sm:$0xff]
  %v2526 = vld [vmem:[%s4 + $0xf8] sm:$0xff]
  %v2527 = vpack.c.bf16 %v2508, %v2507
  %v2528 = vpack.c.bf16 %v2510, %v2509
  %v2529 = vpack.c.bf16 %v2512, %v2511
  %v2530 = vpack.c.bf16 %v2514, %v2513
  %v2531 = vpack.c.bf16 %v2516, %v2515
  %v2532 = vpack.c.bf16 %v2518, %v2517
  %v2533 = vpack.c.bf16 %v2520, %v2519
  %v2534 = vpack.c.bf16 %v2522, %v2521
  %v2535 = vpack.c.bf16 %v2524, %v2523
  %v2536 = vpack.c.bf16 %v2526, %v2525
  %v2537 = vperm.slane %v1479, 0
  %2538 = vmatpush.bf16.msra.mxu0 %v2536
  %2539 = vmatpush.bf16.msra.mxu0 %v2535
  %2540 = vmatpush.bf16.msra.mxu0 %v2534
  %2541 = vmatpush.bf16.msra.mxu0 %v2533
  %2542 = vmatpush.bf16.msra.mxu0 %v2532
  %2543 = vmatpush.bf16.msra.mxu0 %v2531
  %2544 = vmatpush.bf16.msra.mxu0 %v2530
  %2545 = vmatpush.bf16.msra.mxu0 %v2529
  %2546 = vmatmul.bf16.gmra.mxu0 %v2527
  %v2547 = vpop.f32.mrf.mxu0
  %v2548 = vadd.f32 %v2537, %v2547
  %v2549 = vpop.f32.mrf.mxu0
  %v2550 = vadd.f32 %v2537, %v2549
  %2551 = vmatmul.bf16.gmra.mxu0 %v2528
  %v2552 = vpop.f32.mrf.mxu0
  %v2553 = vadd.f32 %v2537, %v2552
  %v2554 = vpop.f32.mrf.mxu0
  %v2555 = vadd.f32 %v2537, %v2554
  %2556 = vdwg.mxu0
  %v2557 = vadd.f32 %v2469, %v2548
  %v2558 = vadd.f32 %v2470, %v2550
  %v2559 = vadd.f32 %v2471, %v2553
  %v2560 = vadd.f32 %v2472, %v2555
  %v2561 = vsel %vm119, %v2557, 0.0
  %2562 = vadd.xlane.f32.xlu0 %v2561
  %v2563 = vpop.xlane.xlu0 %2562
  %v2564 = vsel %vm119, %v2558, 0.0
  %2565 = vadd.xlane.f32.xlu0 %v2564
  %v2566 = vpop.xlane.xlu0 %2565
  %v2567 = vsel %vm119, %v2559, 0.0
  %2568 = vadd.xlane.f32.xlu0 %v2567
  %v2569 = vpop.xlane.xlu0 %2568
  %v2570 = vsel %vm119, %v2560, 0.0
  %2571 = vadd.xlane.f32.xlu0 %v2570
  %v2572 = vpop.xlane.xlu0 %2571
  %v2573 = vmul.f32 %v2563, %v138
  %v2574 = vmul.f32 %v2566, %v138
  %v2575 = vmul.f32 %v2569, %v138
  %v2576 = vmul.f32 %v2572, %v138
  %v2577 = vsub.f32 %v2557, %v2573
  %v2578 = vsub.f32 %v2558, %v2574
  %v2579 = vsub.f32 %v2559, %v2575
  %v2580 = vsub.f32 %v2560, %v2576
  %v2581 = vmul.f32 %v2577, %v2577
  %v2582 = vmul.f32 %v2578, %v2578
  %v2583 = vmul.f32 %v2579, %v2579
  %v2584 = vmul.f32 %v2580, %v2580
  %v2585 = vsel %vm119, %v2581, 0.0
  %2586 = vadd.xlane.f32.xlu0 %v2585
  %v2587 = vpop.xlane.xlu0 %2586
  %v2588 = vsel %vm119, %v2582, 0.0
  %2589 = vadd.xlane.f32.xlu0 %v2588
  %v2590 = vpop.xlane.xlu0 %2589
  %v2591 = vsel %vm119, %v2583, 0.0
  %2592 = vadd.xlane.f32.xlu0 %v2591
  %v2593 = vpop.xlane.xlu0 %2592
  %v2594 = vsel %vm119, %v2584, 0.0
  %2595 = vadd.xlane.f32.xlu0 %v2594
  %v2596 = vpop.xlane.xlu0 %2595
  %v2597 = vmul.f32 %v2587, %v138
  %v2598 = vmul.f32 %v2590, %v138
  %v2599 = vmul.f32 %v2593, %v138
  %v2600 = vmul.f32 %v2596, %v138
  %v2601 = vadd.f32 %v2597, 1e-05
  %v2602 = vadd.f32 %v2598, 1e-05
  %v2603 = vadd.f32 %v2599, 1e-05
  %v2604 = vadd.f32 %v2600, 1e-05
  %v2605 = vrsqrt.pop %v2601
  %v2606 = vmul.f32 %v2605, %v2601
  %v2607 = vmul.f32 %v2606, %v2605
  %v2608 = vmul.f32 0.5, %v2607
  %v2609 = vsub.f32 1.5, %v2608
  %v2610 = vmul.f32 %v2605, %v2609
  %vm2611 = vweird.f32 %v2601
  %vm2612 = vweird.f32 %v2605
  %vm2613 = vmor %vm2611, %vm2612
  %v2614 = vsel %vm2613, %v2605, %v2610
  %v2615 = vrsqrt.pop %v2602
  %v2616 = vmul.f32 %v2615, %v2602
  %v2617 = vmul.f32 %v2616, %v2615
  %v2618 = vmul.f32 0.5, %v2617
  %v2619 = vsub.f32 1.5, %v2618
  %v2620 = vmul.f32 %v2615, %v2619
  %vm2621 = vweird.f32 %v2602
  %vm2622 = vweird.f32 %v2615
  %vm2623 = vmor %vm2621, %vm2622
  %v2624 = vsel %vm2623, %v2615, %v2620
  %v2625 = vrsqrt.pop %v2603
  %v2626 = vmul.f32 %v2625, %v2603
  %v2627 = vmul.f32 %v2626, %v2625
  %v2628 = vmul.f32 0.5, %v2627
  %v2629 = vsub.f32 1.5, %v2628
  %v2630 = vmul.f32 %v2625, %v2629
  %vm2631 = vweird.f32 %v2603
  %vm2632 = vweird.f32 %v2625
  %vm2633 = vmor %vm2631, %vm2632
  %v2634 = vsel %vm2633, %v2625, %v2630
  %v2635 = vrsqrt.pop %v2604
  %v2636 = vmul.f32 %v2635, %v2604
  %v2637 = vmul.f32 %v2636, %v2635
  %v2638 = vmul.f32 0.5, %v2637
  %v2639 = vsub.f32 1.5, %v2638
  %v2640 = vmul.f32 %v2635, %v2639
  %vm2641 = vweird.f32 %v2604
  %vm2642 = vweird.f32 %v2635
  %vm2643 = vmor %vm2641, %vm2642
  %v2644 = vsel %vm2643, %v2635, %v2640
  %v2645 = vmul.f32 %v2577, %v2614
  %v2646 = vmul.f32 %v2578, %v2624
  %v2647 = vmul.f32 %v2579, %v2634
  %v2648 = vmul.f32 %v2580, %v2644
  %v2649 = vperm.slane %v1480, 0
  %v2650 = vmul.f32 %v2645, %v2649
  %v2651 = vmul.f32 %v2646, %v2649
  %v2652 = vmul.f32 %v2647, %v2649
  %v2653 = vmul.f32 %v2648, %v2649
  %v2654 = vperm.slane %v1481, 0
  %v2655 = vadd.f32 %v2650, %v2654
  %v2656 = vadd.f32 %v2651, %v2654
  %v2657 = vadd.f32 %v2652, %v2654
  %v2658 = vadd.f32 %v2653, %v2654
  %v2659 = vld [vmem:[%s3] sm:$0xff]
  %v2660 = vld [vmem:[%s3 + $0x8] sm:$0xff]
  %v2661 = vld [vmem:[%s3 + $0x10] sm:$0xff]
  %v2662 = vld [vmem:[%s3 + $0x18] sm:$0xff]
  %v2663 = vpack.c.bf16 %v2656, %v2655
  %v2664 = vpack.c.bf16 %v2658, %v2657
  %v2665 = vpack.c.bf16 %v2660, %v2659
  %v2666 = vpack.c.bf16 %v2662, %v2661
  %v2667 = vld [vmem:[%s2 + $0x2] sm:$0x1]
  %v2668 = vperm.slane %v2667, 0
  %v2670 = vsel %vm119, %v2663, 0
  %v2673 = vsel %vm119, %v2664, 0
  %2675 = vmatpush.bf16.msra.mxu0 0
  %2676 = vmatpush.bf16.msra.mxu0 0
  %2677 = vmatpush.bf16.msra.mxu0 0
  %2678 = vmatpush.bf16.msra.mxu0 0
  %2679 = vmatpush.bf16.msra.mxu0 0
  %2680 = vmatpush.bf16.msra.mxu0 0
  %2681 = vmatpush.bf16.msra.mxu0 %v2666
  %2682 = vmatpush.bf16.msra.mxu0 %v2665
  %2683 = vmatmul.bf16.gmra.mxu0 %v2670
  %v2684 = vpop.f32.mrf.mxu0
  %v2685 = vadd.f32 %v2668, %v2684
  %v2686 = vpop.f32.mrf.mxu0
  %v2687 = vadd.f32 %v2668, %v2686
  %2688 = vmatmul.bf16.gmra.mxu0 %v2673
  %v2689 = vpop.f32.mrf.mxu0
  %v2690 = vadd.f32 %v2668, %v2689
  %v2691 = vpop.f32.mrf.mxu0
  %v2692 = vadd.f32 %v2668, %v2691
  %2693 = vdwg.mxu0
  %2694 = vst [vmem:[%s5] sm:$0xff] %v2685
  %2695 = vst [vmem:[%s5 + $0x8] sm:$0xff] %v2687
  %2696 = vst [vmem:[%s5 + $0x10] sm:$0xff] %v2690
  %2697 = vst [vmem:[%s5 + $0x18] sm:$0xff] %v2692
  // Predicated region
  $region22: #{sasrec_forward.1} parent=0 // pred_check
    _
  $region23: #{sasrec_forward.1} parent=0 // pred_check_branch
    %2699 = sbr.rel (0) target = $region25
  $region24: #{sasrec_forward.1} parent=0 // pred_region
    _
  $region25: #{sasrec_forward.1} parent=0 // pred_fallthru
    _
  // Predicated region
  $region26: #{sasrec_forward.1} parent=0 // pred_check
    _
  $region27: #{sasrec_forward.1} parent=0 // pred_check_branch
    %2701 = sbr.rel (0) target = $region29
  $region28: #{sasrec_forward.1} parent=0 // pred_region
    _
  $region29: #{sasrec_forward.1} parent=0 // pred_fallthru
    _

</llo_original>
